<compile_context>
chip_gen: v7x
topology: tpu7x:2x2x1
jax: 0.10.0
libtpu: 0.0.40
codegen_flags: <defaults>
</compile_context>

<pallas_src>
import functools
import math

import jax
import jax.numpy as jnp
from jax.experimental import pallas as pl
from jax.experimental.pallas import tpu as pltpu


# -----------------------------------------------------------------------------
# Fused estimator + Euler-step kernel (one Euler step per grid iteration)
# -----------------------------------------------------------------------------
def _layer_norm(x, g, b, eps=1e-5):
    m = jnp.mean(x, axis=-1, keepdims=True)
    v = jnp.mean((x - m) ** 2, axis=-1, keepdims=True)
    return (x - m) * jax.lax.rsqrt(v + eps) * g + b


def _bf16(x):
    return x.astype(jnp.bfloat16)


def estimator_euler_kernel(dts_ref, z_ref, base_ref, mask_ref, bias_ref,
                           w_in_ref,
                           ln1_g_ref, ln1_b_ref, w_qkv_ref, b_qkv_ref,
                           w_o_ref, b_o_ref, ln2_g_ref, ln2_b_ref,
                           w_ff1_ref, b_ff1_ref, w_ff2_ref, b_ff2_ref,
                           w_out_ref, b_out_ref,
                           out_ref, *, n_layers, n_heads, batch, seq):
    s = pl.program_id(0)

    # Step 0: load noise into the resident ODE state (the output VMEM block).
    @pl.when(s == 0)
    def _():
        out_ref[...] = z_ref[...]

    x = out_ref[...]            # (B*T, Cp) f32   ODE state, resident across steps
    base = base_ref[0]          # (B*T, H)  f32   mu-projection + b_in + cond(t_s)
    mask = mask_ref[...]        # (B*T, 1)  f32
    bias = bias_ref[...]        # (G, 1, T) f32   additive key mask, G = n_heads*B

    B, T = batch, seq
    H = base.shape[-1]
    dh = H // n_heads
    scale = 1.0 / math.sqrt(dh)

    # Input projection of the state + precomputed (mu, time, speaker) terms.
    h = jnp.dot(_bf16(x), w_in_ref[...],
                preferred_element_type=jnp.float32) + base        # (B*T, H)

    for l in range(n_layers):
        # ---------------- self attention (pre-LN) ----------------
        hn = _layer_norm(h, ln1_g_ref[l], ln1_b_ref[l])
        qkv = jnp.dot(_bf16(hn), w_qkv_ref[l],
                      preferred_element_type=jnp.float32) + b_qkv_ref[l]
        qkv3 = qkv.reshape(B, T, 3 * H)
        q = qkv3[..., 0 * H:1 * H]
        k = qkv3[..., 1 * H:2 * H]
        v = qkv3[..., 2 * H:3 * H]
        # Stack heads on the leading axis -> one batched dot_general each.
        qg = jnp.concatenate([q[..., i * dh:(i + 1) * dh] for i in range(n_heads)], axis=0)
        kg = jnp.concatenate([k[..., i * dh:(i + 1) * dh] for i in range(n_heads)], axis=0)
        vg = jnp.concatenate([v[..., i * dh:(i + 1) * dh] for i in range(n_heads)], axis=0)
        sc = jnp.einsum('gqd,gkd->gqk', _bf16(qg), _bf16(kg),
                        preferred_element_type=jnp.float32) * scale + bias
        sc = sc - jnp.max(sc, axis=-1, keepdims=True)
        p = jnp.exp(sc)
        p = p * pl.reciprocal(jnp.sum(p, axis=-1, keepdims=True), approx=True)
        og = jnp.einsum('gqk,gkd->gqd', _bf16(p), _bf16(vg),
                        preferred_element_type=jnp.float32)        # (G, T, dh)
        o = jnp.concatenate([og[i * B:(i + 1) * B] for i in range(n_heads)], axis=-1)
        o = o.reshape(B * T, H)
        h = h + jnp.dot(_bf16(o), w_o_ref[l],
                        preferred_element_type=jnp.float32) + b_o_ref[l]

        # ---------------- feed forward (pre-LN) ----------------
        hn = _layer_norm(h, ln2_g_ref[l], ln2_b_ref[l])
        f = jnp.dot(_bf16(hn), w_ff1_ref[l],
                    preferred_element_type=jnp.float32) + b_ff1_ref[l]
        f = jax.nn.gelu(f, approximate=True)
        h = h + jnp.dot(_bf16(f), w_ff2_ref[l],
                        preferred_element_type=jnp.float32) + b_ff2_ref[l]

    dphi = (jnp.dot(_bf16(h), w_out_ref[...],
                    preferred_element_type=jnp.float32) + b_out_ref[...]) * mask
    dt = dts_ref[s]                       # SMEM scalar for this Euler step
    out_ref[...] = x + dt * dphi          # state update; HBM writeback only at end


# -----------------------------------------------------------------------------
# Wrapper: conditioning / schedule precompute + single fused pallas_call
# -----------------------------------------------------------------------------
def cfm_decoder_forward(params, mu, mask, c, noise_key, *, n_timesteps,
                        n_layers, n_heads, temperature=1.0):
    """Equivalent of CFMDecoder.forward.

    mu:   (B, n_feats, T)    mask: (B, 1, T)    c: (B, gin_channels)
    returns generated mel: (B, n_feats, T)
    """
    B, C, T = mu.shape
    H = params['w_in'].shape[1]
    S = n_timesteps
    G = n_heads * B
    Cp = 128                                   # lane-dense padded channel dim

    # ---- noise (randn_like(mu) * temperature) ----
    z = jax.random.normal(noise_key, mu.shape, dtype=jnp.float32) * temperature

    # ---- Euler schedule, exactly as solve_euler ----
    t_span = jnp.linspace(0.0, 1.0, n_timesteps + 1)
    t = t_span[0]
    dt = t_span[1] - t_span[0]
    t_list, dt_list = [], []
    for step in range(1, n_timesteps + 1):
        t_list.append(t)
        dt_list.append(dt)
        t = t + dt
        if step < n_timesteps:
            dt = t_span[step + 1] - t
    t_vals = jnp.stack(t_list).astype(jnp.float32)      # (S,)
    dts = jnp.stack(dt_list).astype(jnp.float32)        # (S,)

    # ---- time + speaker conditioning for ALL steps (hoisted out of the loop) ----
    half = H // 2
    freqs = jnp.exp(-math.log(10000.0) * jnp.arange(half, dtype=jnp.float32) / half)
    args = t_vals[:, None] * 1000.0 * freqs[None, :]              # (S, half)
    temb = jnp.concatenate([jnp.sin(args), jnp.cos(args)], axis=-1)
    temb = jax.nn.silu(temb @ params['w_t1'] + params['b_t1'])
    temb = temb @ params['w_t2'] + params['b_t2']                 # (S, H)
    spk = c.astype(jnp.float32) @ params['w_g'] + params['b_g']   # (B, H)
    cond = temb[:, None, :] + spk[None, :, :]                     # (S, B, H)

    # ---- step-invariant mu input projection folded with cond + b_in ----
    mu_btc = jnp.transpose(mu, (0, 2, 1)).astype(jnp.float32)     # (B, T, C)
    mu_h = jnp.einsum('btc,ch->bth', mu_btc, params['w_in'][C:]) + params['b_in']
    base = (mu_h[None] + cond[:, :, None, :]).reshape(S, B * T, H).astype(jnp.float32)

    # ---- masks ----
    mask_bt1 = jnp.transpose(mask, (0, 2, 1)).reshape(B * T, 1).astype(jnp.float32)
    attn_bias = jnp.where(mask > 0, 0.0, -1e9).astype(jnp.float32)          # (B, 1, T)
    bias_g = jnp.broadcast_to(attn_bias[None], (n_heads, B, 1, T)).reshape(G, 1, T)

    # ---- state / noise, channel-padded to 128 lanes ----
    z_flat = jnp.transpose(z, (0, 2, 1)).reshape(B * T, C)
    z_pad = jnp.zeros((B * T, Cp), jnp.float32).at[:, :C].set(z_flat)

    # ---- weights: channel-padded + bf16 for the MXU (biases / LN stay f32) ----
    w_in_x = jnp.zeros((Cp, H), jnp.float32).at[:C].set(params['w_in'][:C])
    w_out = jnp.zeros((H, Cp), jnp.float32).at[:, :C].set(params['w_out'])
    b_out = jnp.zeros((1, Cp), jnp.float32).at[:, :C].set(params['b_out'])

    inputs = [
        dts, z_pad, base, mask_bt1, bias_g,
        w_in_x.astype(jnp.bfloat16),
        params['ln1_g'], params['ln1_b'],
        params['w_qkv'].astype(jnp.bfloat16), params['b_qkv'],
        params['w_o'].astype(jnp.bfloat16), params['b_o'],
        params['ln2_g'], params['ln2_b'],
        params['w_ff1'].astype(jnp.bfloat16), params['b_ff1'],
        params['w_ff2'].astype(jnp.bfloat16), params['b_ff2'],
        w_out.astype(jnp.bfloat16), b_out,
    ]

    def const_spec(a):   # same full block every grid step (fetched once)
        nd = a.ndim
        return pl.BlockSpec(a.shape, lambda s, _nd=nd: (0,) * _nd)

    in_specs = [
        pl.BlockSpec(memory_space=pltpu.MemorySpace.SMEM),          # dts (SMEM scalars)
        const_spec(z_pad),                                          # noise
        pl.BlockSpec((1, B * T, H), lambda s: (s, 0, 0)),           # per-step base/cond
    ] + [const_spec(a) for a in inputs[3:]]

    kernel = functools.partial(estimator_euler_kernel, n_layers=n_layers,
                               n_heads=n_heads, batch=B, seq=T)

    y_pad = pl.pallas_call(
        kernel,
        out_shape=jax.ShapeDtypeStruct((B * T, Cp), jnp.float32),
        grid=(n_timesteps,),
        in_specs=in_specs,
        out_specs=pl.BlockSpec((B * T, Cp), lambda s: (0, 0)),      # resident ODE state
        compiler_params=pltpu.CompilerParams(
            dimension_semantics=("arbitrary",)),
    )(*inputs)

    y = y_pad[:, :C].reshape(B, T, C)
    return jnp.transpose(y, (0, 2, 1))


# -----------------------------------------------------------------------------
# Parameters (DiT-style stand-in estimator, matching constructor hyperparams)
# -----------------------------------------------------------------------------
def init_params(key, out_channels, hidden, filter_channels, n_heads, n_layers, gin):
    ks = jax.random.split(key, 16)
    w = lambda k, shape: (0.02 * jax.random.normal(k, shape)).astype(jnp.float32)
    zeros = lambda shape: jnp.zeros(shape, jnp.float32)
    ones = lambda shape: jnp.ones(shape, jnp.float32)
    C, H, F, L = out_channels, hidden, filter_channels, n_layers
    return {
        'w_in': w(ks[0], (2 * C, H)),          'b_in': zeros((1, H)),
        'ln1_g': ones((L, 1, H)),              'ln1_b': zeros((L, 1, H)),
        'w_qkv': w(ks[1], (L, H, 3 * H)),      'b_qkv': zeros((L, 1, 3 * H)),
        'w_o': w(ks[2], (L, H, H)),            'b_o': zeros((L, 1, H)),
        'ln2_g': ones((L, 1, H)),              'ln2_b': zeros((L, 1, H)),
        'w_ff1': w(ks[3], (L, H, F)),          'b_ff1': zeros((L, 1, F)),
        'w_ff2': w(ks[4], (L, F, H)),          'b_ff2': zeros((L, 1, H)),
        'w_out': w(ks[5], (H, C)),             'b_out': zeros((1, C)),
        'w_t1': w(ks[6], (H, F)),              'b_t1': zeros((F,)),
        'w_t2': w(ks[7], (F, H)),              'b_t2': zeros((H,)),
        'w_g': w(ks[8], (gin, H)),             'b_g': zeros((H,)),
    }


# -----------------------------------------------------------------------------
if __name__ == "__main__":
    # Module hyperparameters (small, consistent with the constructor signature).
    hidden_channels = 32
    out_channels = 16        # n_feats (mel bins)
    filter_channels = 64
    n_heads = 2
    n_layers = 2
    kernel_size = 3          # unused at inference in this stand-in
    p_dropout = 0.1          # inference mode -> dropout is a no-op
    gin_channels = 32

    B, T = 2, 16
    n_timesteps = 4

    key = jax.random.PRNGKey(0)
    k_par, k_mu, k_c, k_noise = jax.random.split(key, 4)

    params = init_params(k_par, out_channels, hidden_channels, filter_channels,
                         n_heads, n_layers, gin_channels)
    mu = jax.random.normal(k_mu, (B, out_channels, T), dtype=jnp.float32)
    mask = jnp.ones((B, 1, T), dtype=jnp.float32)
    c = jax.random.normal(k_c, (B, gin_channels), dtype=jnp.float32)

    fwd = jax.jit(functools.partial(cfm_decoder_forward,
                                    n_timesteps=n_timesteps,
                                    n_layers=n_layers,
                                    n_heads=n_heads,
                                    temperature=1.0))
    out = fwd(params, mu, mask, c, k_noise)
    out = jax.block_until_ready(out)

    assert out.shape == (B, out_channels, T), out.shape
    assert bool(jnp.all(jnp.isfinite(out)))
    print("KERNEL_OK")
</pallas_src>

<mosaic_0001>
module attributes {stable_mosaic.version = 11 : i64} {
  func.func @estimator_euler_kernel(%arg0: i32, %arg1: memref<4xf32, #tpu.memory_space<smem>>, %arg2: memref<32x128xf32, #tpu.memory_space<vmem>>, %arg3: memref<1x32x32xf32, #tpu.memory_space<vmem>>, %arg4: memref<32x1xf32, #tpu.memory_space<vmem>>, %arg5: memref<4x1x16xf32, #tpu.memory_space<vmem>>, %arg6: memref<128x32xbf16, #tpu.memory_space<vmem>>, %arg7: memref<2x1x32xf32, #tpu.memory_space<vmem>>, %arg8: memref<2x1x32xf32, #tpu.memory_space<vmem>>, %arg9: memref<2x32x96xbf16, #tpu.memory_space<vmem>>, %arg10: memref<2x1x96xf32, #tpu.memory_space<vmem>>, %arg11: memref<2x32x32xbf16, #tpu.memory_space<vmem>>, %arg12: memref<2x1x32xf32, #tpu.memory_space<vmem>>, %arg13: memref<2x1x32xf32, #tpu.memory_space<vmem>>, %arg14: memref<2x1x32xf32, #tpu.memory_space<vmem>>, %arg15: memref<2x32x64xbf16, #tpu.memory_space<vmem>>, %arg16: memref<2x1x64xf32, #tpu.memory_space<vmem>>, %arg17: memref<2x64x32xbf16, #tpu.memory_space<vmem>>, %arg18: memref<2x1x32xf32, #tpu.memory_space<vmem>>, %arg19: memref<32x128xbf16, #tpu.memory_space<vmem>>, %arg20: memref<1x128xf32, #tpu.memory_space<vmem>>, %arg21: memref<32x128xf32, #tpu.memory_space<vmem>>) attributes {dimension_semantics = [#tpu.dimension_semantics<arbitrary>], iteration_bounds = array<i64: 4>, scalar_prefetch = 0 : i64, scratch_operands = 0 : i64, tpu.core_type = #tpu.core_type<tc>, window_params = [{transform_indices = @transform_0, window_bounds = array<i64: 4>}, {pipeline_mode = #tpu.pipeline_mode<synchronous>, transform_indices = @transform_1, window_bounds = array<i64: 32, 128>}, {transform_indices = @transform_2, window_bounds = array<i64: 1, 32, 32>}, {pipeline_mode = #tpu.pipeline_mode<synchronous>, transform_indices = @transform_3, window_bounds = array<i64: 32, 1>}, {pipeline_mode = #tpu.pipeline_mode<synchronous>, transform_indices = @transform_4, window_bounds = array<i64: 4, 1, 16>}, {pipeline_mode = #tpu.pipeline_mode<synchronous>, transform_indices = @transform_5, window_bounds = array<i64: 128, 32>}, {pipeline_mode = #tpu.pipeline_mode<synchronous>, transform_indices = @transform_6, window_bounds = array<i64: 2, 1, 32>}, {pipeline_mode = #tpu.pipeline_mode<synchronous>, transform_indices = @transform_7, window_bounds = array<i64: 2, 1, 32>}, {pipeline_mode = #tpu.pipeline_mode<synchronous>, transform_indices = @transform_8, window_bounds = array<i64: 2, 32, 96>}, {pipeline_mode = #tpu.pipeline_mode<synchronous>, transform_indices = @transform_9, window_bounds = array<i64: 2, 1, 96>}, {pipeline_mode = #tpu.pipeline_mode<synchronous>, transform_indices = @transform_10, window_bounds = array<i64: 2, 32, 32>}, {pipeline_mode = #tpu.pipeline_mode<synchronous>, transform_indices = @transform_11, window_bounds = array<i64: 2, 1, 32>}, {pipeline_mode = #tpu.pipeline_mode<synchronous>, transform_indices = @transform_12, window_bounds = array<i64: 2, 1, 32>}, {pipeline_mode = #tpu.pipeline_mode<synchronous>, transform_indices = @transform_13, window_bounds = array<i64: 2, 1, 32>}, {pipeline_mode = #tpu.pipeline_mode<synchronous>, transform_indices = @transform_14, window_bounds = array<i64: 2, 32, 64>}, {pipeline_mode = #tpu.pipeline_mode<synchronous>, transform_indices = @transform_15, window_bounds = array<i64: 2, 1, 64>}, {pipeline_mode = #tpu.pipeline_mode<synchronous>, transform_indices = @transform_16, window_bounds = array<i64: 2, 64, 32>}, {pipeline_mode = #tpu.pipeline_mode<synchronous>, transform_indices = @transform_17, window_bounds = array<i64: 2, 1, 32>}, {pipeline_mode = #tpu.pipeline_mode<synchronous>, transform_indices = @transform_18, window_bounds = array<i64: 32, 128>}, {pipeline_mode = #tpu.pipeline_mode<synchronous>, transform_indices = @transform_19, window_bounds = array<i64: 1, 128>}, {pipeline_mode = #tpu.pipeline_mode<synchronous>, transform_indices = @transform_20, window_bounds = array<i64: 32, 128>}]} {
    %c0_i32 = arith.constant 0 : i32
    %0 = arith.cmpi eq, %arg0, %c0_i32 : i32
    %1 = arith.extui %0 : i1 to i32
    %c0_i32_0 = arith.constant 0 : i32
    %2 = arith.cmpi ne, %1, %c0_i32_0 : i32
    scf.if %2 {
      %c0_136 = arith.constant 0 : index
      %c0_137 = arith.constant 0 : index
      %298 = vector.load %arg2[%c0_136, %c0_137] : memref<32x128xf32, #tpu.memory_space<vmem>>, vector<32x128xf32>
      %c0_138 = arith.constant 0 : index
      %c0_139 = arith.constant 0 : index
      %299 = vector.load %arg21[%c0_138, %c0_139] : memref<32x128xf32, #tpu.memory_space<vmem>>, vector<32x128xf32>
      tpu.vector_store %arg21[%c0_138, %c0_139], %298 {strides = array<i32>} : memref<32x128xf32, #tpu.memory_space<vmem>>, vector<32x128xf32>,
    } else {
    }
    %c0 = arith.constant 0 : index
    %c0_1 = arith.constant 0 : index
    %3 = vector.load %arg21[%c0, %c0_1] : memref<32x128xf32, #tpu.memory_space<vmem>>, vector<32x128xf32>
    %c0_2 = arith.constant 0 : index
    %c0_3 = arith.constant 0 : index
    %c0_4 = arith.constant 0 : index
    %4 = vector.load %arg3[%c0_2, %c0_3, %c0_4] : memref<1x32x32xf32, #tpu.memory_space<vmem>>, vector<1x32x32xf32>
    %5 = vector.shape_cast %4 : vector<1x32x32xf32> to vector<32x32xf32>
    %c0_5 = arith.constant 0 : index
    %c0_6 = arith.constant 0 : index
    %6 = vector.load %arg4[%c0_5, %c0_6] : memref<32x1xf32, #tpu.memory_space<vmem>>, vector<32x1xf32>
    %c0_7 = arith.constant 0 : index
    %c0_8 = arith.constant 0 : index
    %c0_9 = arith.constant 0 : index
    %7 = vector.load %arg5[%c0_7, %c0_8, %c0_9] : memref<4x1x16xf32, #tpu.memory_space<vmem>>, vector<4x1x16xf32>
    %8 = arith.truncf %3 : vector<32x128xf32> to vector<32x128xbf16>
    %c0_10 = arith.constant 0 : index
    %c0_11 = arith.constant 0 : index
    %9 = vector.load %arg6[%c0_10, %c0_11] : memref<128x32xbf16, #tpu.memory_space<vmem>>, vector<128x32xbf16>
    %cst = arith.constant dense<0.000000e+00> : vector<32x32xf32>
    %10 = tpu.matmul %8, %9, %cst {dimension_numbers = #tpu.dot_dimension_numbers<[1], [0], [0], [1], [0, 0, 1, 1], [], []>} : vector<32x128xbf16>, vector<128x32xbf16>, vector<32x32xf32> -> vector<32x32xf32>
    %11 = arith.addf %10, %5 : vector<32x32xf32>
    %c0_12 = arith.constant 0 : index
    %c0_13 = arith.constant 0 : index
    %c0_14 = arith.constant 0 : index
    %12 = vector.load %arg7[%c0_12, %c0_13, %c0_14] : memref<2x1x32xf32, #tpu.memory_space<vmem>>, vector<1x1x32xf32>
    %13 = vector.shape_cast %12 : vector<1x1x32xf32> to vector<1x32xf32>
    %c0_15 = arith.constant 0 : index
    %c0_16 = arith.constant 0 : index
    %c0_17 = arith.constant 0 : index
    %14 = vector.load %arg8[%c0_15, %c0_16, %c0_17] : memref<2x1x32xf32, #tpu.memory_space<vmem>>, vector<1x1x32xf32>
    %15 = vector.shape_cast %14 : vector<1x1x32xf32> to vector<1x32xf32>
    %cst_18 = arith.constant dense<0.000000e+00> : vector<32xf32>
    %16 = vector.multi_reduction <add>, %11, %cst_18 [1] : vector<32x32xf32> to vector<32xf32>
    %17 = vector.shape_cast %16 : vector<32xf32> to vector<32x1xf32>
    %cst_19 = arith.constant 3.200000e+01 : f32
    %18 = vector.broadcast %cst_19 : f32 to vector<32x1xf32>
    %19 = arith.divf %17, %18 : vector<32x1xf32>
    %20 = vector.broadcast %19 : vector<32x1xf32> to vector<32x32xf32>
    %21 = arith.subf %11, %20 : vector<32x32xf32>
    %22 = arith.mulf %21, %21 : vector<32x32xf32>
    %cst_20 = arith.constant dense<0.000000e+00> : vector<32xf32>
    %23 = vector.multi_reduction <add>, %22, %cst_20 [1] : vector<32x32xf32> to vector<32xf32>
    %24 = vector.shape_cast %23 : vector<32xf32> to vector<32x1xf32>
    %cst_21 = arith.constant 3.200000e+01 : f32
    %25 = vector.broadcast %cst_21 : f32 to vector<32x1xf32>
    %26 = arith.divf %24, %25 : vector<32x1xf32>
    %27 = vector.broadcast %19 : vector<32x1xf32> to vector<32x32xf32>
    %28 = arith.subf %11, %27 : vector<32x32xf32>
    %cst_22 = arith.constant 9.99999974E-6 : f32
    %29 = vector.broadcast %cst_22 : f32 to vector<32x1xf32>
    %30 = arith.addf %26, %29 : vector<32x1xf32>
    %31 = math.rsqrt %30 : vector<32x1xf32>
    %32 = vector.broadcast %31 : vector<32x1xf32> to vector<32x32xf32>
    %33 = arith.mulf %28, %32 : vector<32x32xf32>
    %34 = vector.broadcast %13 : vector<1x32xf32> to vector<32x32xf32>
    %35 = arith.mulf %33, %34 : vector<32x32xf32>
    %36 = vector.broadcast %15 : vector<1x32xf32> to vector<32x32xf32>
    %37 = arith.addf %35, %36 : vector<32x32xf32>
    %38 = arith.truncf %37 : vector<32x32xf32> to vector<32x32xbf16>
    %c0_23 = arith.constant 0 : index
    %c0_24 = arith.constant 0 : index
    %c0_25 = arith.constant 0 : index
    %39 = vector.load %arg9[%c0_23, %c0_24, %c0_25] : memref<2x32x96xbf16, #tpu.memory_space<vmem>>, vector<1x32x96xbf16>
    %40 = vector.shape_cast %39 : vector<1x32x96xbf16> to vector<32x96xbf16>
    %cst_26 = arith.constant dense<0.000000e+00> : vector<32x96xf32>
    %41 = tpu.matmul %38, %40, %cst_26 {dimension_numbers = #tpu.dot_dimension_numbers<[1], [0], [0], [1], [0, 0, 1, 1], [], []>} : vector<32x32xbf16>, vector<32x96xbf16>, vector<32x96xf32> -> vector<32x96xf32>
    %c0_27 = arith.constant 0 : index
    %c0_28 = arith.constant 0 : index
    %c0_29 = arith.constant 0 : index
    %42 = vector.load %arg10[%c0_27, %c0_28, %c0_29] : memref<2x1x96xf32, #tpu.memory_space<vmem>>, vector<1x1x96xf32>
    %43 = vector.shape_cast %42 : vector<1x1x96xf32> to vector<1x96xf32>
    %44 = vector.broadcast %43 : vector<1x96xf32> to vector<32x96xf32>
    %45 = arith.addf %41, %44 : vector<32x96xf32>
    %46 = vector.shape_cast %45 : vector<32x96xf32> to vector<2x16x96xf32>
    %47 = vector.extract_strided_slice %46 {offsets = [0, 0, 0], sizes = [2, 16, 32], strides = [1, 1, 1]} : vector<2x16x96xf32> to vector<2x16x32xf32>
    %48 = vector.extract_strided_slice %46 {offsets = [0, 0, 32], sizes = [2, 16, 32], strides = [1, 1, 1]} : vector<2x16x96xf32> to vector<2x16x32xf32>
    %49 = vector.extract_strided_slice %46 {offsets = [0, 0, 64], sizes = [2, 16, 32], strides = [1, 1, 1]} : vector<2x16x96xf32> to vector<2x16x32xf32>
    %50 = vector.extract_strided_slice %47 {offsets = [0, 0, 0], sizes = [2, 16, 16], strides = [1, 1, 1]} : vector<2x16x32xf32> to vector<2x16x16xf32>
    %51 = vector.extract_strided_slice %47 {offsets = [0, 0, 16], sizes = [2, 16, 16], strides = [1, 1, 1]} : vector<2x16x32xf32> to vector<2x16x16xf32>
    %52 = tpu.concatenate %50, %51 in 0 : vector<2x16x16xf32>, vector<2x16x16xf32> -> vector<4x16x16xf32>
    %53 = vector.extract_strided_slice %48 {offsets = [0, 0, 0], sizes = [2, 16, 16], strides = [1, 1, 1]} : vector<2x16x32xf32> to vector<2x16x16xf32>
    %54 = vector.extract_strided_slice %48 {offsets = [0, 0, 16], sizes = [2, 16, 16], strides = [1, 1, 1]} : vector<2x16x32xf32> to vector<2x16x16xf32>
    %55 = tpu.concatenate %53, %54 in 0 : vector<2x16x16xf32>, vector<2x16x16xf32> -> vector<4x16x16xf32>
    %56 = vector.extract_strided_slice %49 {offsets = [0, 0, 0], sizes = [2, 16, 16], strides = [1, 1, 1]} : vector<2x16x32xf32> to vector<2x16x16xf32>
    %57 = vector.extract_strided_slice %49 {offsets = [0, 0, 16], sizes = [2, 16, 16], strides = [1, 1, 1]} : vector<2x16x32xf32> to vector<2x16x16xf32>
    %58 = tpu.concatenate %56, %57 in 0 : vector<2x16x16xf32>, vector<2x16x16xf32> -> vector<4x16x16xf32>
    %59 = arith.truncf %52 : vector<4x16x16xf32> to vector<4x16x16xbf16>
    %60 = arith.truncf %55 : vector<4x16x16xf32> to vector<4x16x16xbf16>
    "tpu.trace_start"() <{level = 10 : i32, message = "gqd,gkd->gqk"}> : () -> ()
    %cst_30 = arith.constant dense<0.000000e+00> : vector<4x16x16xf32>
    %61 = tpu.matmul %59, %60, %cst_30 {dimension_numbers = #tpu.dot_dimension_numbers<[2], [2], [1], [1], [0, 0, 0, 1, 1, 1], [0], [0]>} : vector<4x16x16xbf16>, vector<4x16x16xbf16>, vector<4x16x16xf32> -> vector<4x16x16xf32>
    "tpu.trace_stop"() : () -> ()
    %cst_31 = arith.constant 2.500000e-01 : f32
    %62 = vector.broadcast %cst_31 : f32 to vector<4x16x16xf32>
    %63 = arith.mulf %61, %62 : vector<4x16x16xf32>
    %64 = vector.broadcast %7 : vector<4x1x16xf32> to vector<4x16x16xf32>
    %65 = arith.addf %63, %64 : vector<4x16x16xf32>
    %cst_32 = arith.constant dense<0xFF800000> : vector<4x16xf32>
    %66 = vector.multi_reduction <maximumf>, %65, %cst_32 [2] : vector<4x16x16xf32> to vector<4x16xf32>
    %67 = vector.shape_cast %66 : vector<4x16xf32> to vector<4x16x1xf32>
    %68 = vector.broadcast %67 : vector<4x16x1xf32> to vector<4x16x16xf32>
    %69 = arith.subf %65, %68 : vector<4x16x16xf32>
    %70 = math.exp %69 : vector<4x16x16xf32>
    %cst_33 = arith.constant dense<0.000000e+00> : vector<4x16xf32>
    %71 = vector.multi_reduction <add>, %70, %cst_33 [2] : vector<4x16x16xf32> to vector<4x16xf32>
    %72 = vector.shape_cast %71 : vector<4x16xf32> to vector<4x16x1xf32>
    %73 = tpu.reciprocal %72 {approx = true} : vector<4x16x1xf32> -> vector<4x16x1xf32>
    %74 = vector.broadcast %73 : vector<4x16x1xf32> to vector<4x16x16xf32>
    %75 = arith.mulf %70, %74 : vector<4x16x16xf32>
    %76 = arith.truncf %75 : vector<4x16x16xf32> to vector<4x16x16xbf16>
    %77 = arith.truncf %58 : vector<4x16x16xf32> to vector<4x16x16xbf16>
    "tpu.trace_start"() <{level = 10 : i32, message = "gqk,gkd->gqd"}> : () -> ()
    %cst_34 = arith.constant dense<0.000000e+00> : vector<4x16x16xf32>
    %78 = tpu.matmul %76, %77, %cst_34 {dimension_numbers = #tpu.dot_dimension_numbers<[2], [1], [1], [2], [0, 0, 0, 1, 1, 2], [0], [0]>} : vector<4x16x16xbf16>, vector<4x16x16xbf16>, vector<4x16x16xf32> -> vector<4x16x16xf32>
    "tpu.trace_stop"() : () -> ()
    %79 = vector.extract_strided_slice %78 {offsets = [0, 0, 0], sizes = [2, 16, 16], strides = [1, 1, 1]} : vector<4x16x16xf32> to vector<2x16x16xf32>
    %80 = vector.extract_strided_slice %78 {offsets = [2, 0, 0], sizes = [2, 16, 16], strides = [1, 1, 1]} : vector<4x16x16xf32> to vector<2x16x16xf32>
    %81 = tpu.concatenate %79, %80 in 2 : vector<2x16x16xf32>, vector<2x16x16xf32> -> vector<2x16x32xf32>
    %82 = vector.shape_cast %81 : vector<2x16x32xf32> to vector<32x32xf32>
    %83 = arith.truncf %82 : vector<32x32xf32> to vector<32x32xbf16>
    %c0_35 = arith.constant 0 : index
    %c0_36 = arith.constant 0 : index
    %c0_37 = arith.constant 0 : index
    %84 = vector.load %arg11[%c0_35, %c0_36, %c0_37] : memref<2x32x32xbf16, #tpu.memory_space<vmem>>, vector<1x32x32xbf16>
    %85 = vector.shape_cast %84 : vector<1x32x32xbf16> to vector<32x32xbf16>
    %cst_38 = arith.constant dense<0.000000e+00> : vector<32x32xf32>
    %86 = tpu.matmul %83, %85, %cst_38 {dimension_numbers = #tpu.dot_dimension_numbers<[1], [0], [0], [1], [0, 0, 1, 1], [], []>} : vector<32x32xbf16>, vector<32x32xbf16>, vector<32x32xf32> -> vector<32x32xf32>
    %87 = arith.addf %11, %86 : vector<32x32xf32>
    %c0_39 = arith.constant 0 : index
    %c0_40 = arith.constant 0 : index
    %c0_41 = arith.constant 0 : index
    %88 = vector.load %arg12[%c0_39, %c0_40, %c0_41] : memref<2x1x32xf32, #tpu.memory_space<vmem>>, vector<1x1x32xf32>
    %89 = vector.shape_cast %88 : vector<1x1x32xf32> to vector<1x32xf32>
    %90 = vector.broadcast %89 : vector<1x32xf32> to vector<32x32xf32>
    %91 = arith.addf %87, %90 : vector<32x32xf32>
    %c0_42 = arith.constant 0 : index
    %c0_43 = arith.constant 0 : index
    %c0_44 = arith.constant 0 : index
    %92 = vector.load %arg13[%c0_42, %c0_43, %c0_44] : memref<2x1x32xf32, #tpu.memory_space<vmem>>, vector<1x1x32xf32>
    %93 = vector.shape_cast %92 : vector<1x1x32xf32> to vector<1x32xf32>
    %c0_45 = arith.constant 0 : index
    %c0_46 = arith.constant 0 : index
    %c0_47 = arith.constant 0 : index
    %94 = vector.load %arg14[%c0_45, %c0_46, %c0_47] : memref<2x1x32xf32, #tpu.memory_space<vmem>>, vector<1x1x32xf32>
    %95 = vector.shape_cast %94 : vector<1x1x32xf32> to vector<1x32xf32>
    %cst_48 = arith.constant dense<0.000000e+00> : vector<32xf32>
    %96 = vector.multi_reduction <add>, %91, %cst_48 [1] : vector<32x32xf32> to vector<32xf32>
    %97 = vector.shape_cast %96 : vector<32xf32> to vector<32x1xf32>
    %cst_49 = arith.constant 3.200000e+01 : f32
    %98 = vector.broadcast %cst_49 : f32 to vector<32x1xf32>
    %99 = arith.divf %97, %98 : vector<32x1xf32>
    %100 = vector.broadcast %99 : vector<32x1xf32> to vector<32x32xf32>
    %101 = arith.subf %91, %100 : vector<32x32xf32>
    %102 = arith.mulf %101, %101 : vector<32x32xf32>
    %cst_50 = arith.constant dense<0.000000e+00> : vector<32xf32>
    %103 = vector.multi_reduction <add>, %102, %cst_50 [1] : vector<32x32xf32> to vector<32xf32>
    %104 = vector.shape_cast %103 : vector<32xf32> to vector<32x1xf32>
    %cst_51 = arith.constant 3.200000e+01 : f32
    %105 = vector.broadcast %cst_51 : f32 to vector<32x1xf32>
    %106 = arith.divf %104, %105 : vector<32x1xf32>
    %107 = vector.broadcast %99 : vector<32x1xf32> to vector<32x32xf32>
    %108 = arith.subf %91, %107 : vector<32x32xf32>
    %cst_52 = arith.constant 9.99999974E-6 : f32
    %109 = vector.broadcast %cst_52 : f32 to vector<32x1xf32>
    %110 = arith.addf %106, %109 : vector<32x1xf32>
    %111 = math.rsqrt %110 : vector<32x1xf32>
    %112 = vector.broadcast %111 : vector<32x1xf32> to vector<32x32xf32>
    %113 = arith.mulf %108, %112 : vector<32x32xf32>
    %114 = vector.broadcast %93 : vector<1x32xf32> to vector<32x32xf32>
    %115 = arith.mulf %113, %114 : vector<32x32xf32>
    %116 = vector.broadcast %95 : vector<1x32xf32> to vector<32x32xf32>
    %117 = arith.addf %115, %116 : vector<32x32xf32>
    %118 = arith.truncf %117 : vector<32x32xf32> to vector<32x32xbf16>
    %c0_53 = arith.constant 0 : index
    %c0_54 = arith.constant 0 : index
    %c0_55 = arith.constant 0 : index
    %119 = vector.load %arg15[%c0_53, %c0_54, %c0_55] : memref<2x32x64xbf16, #tpu.memory_space<vmem>>, vector<1x32x64xbf16>
    %120 = vector.shape_cast %119 : vector<1x32x64xbf16> to vector<32x64xbf16>
    %cst_56 = arith.constant dense<0.000000e+00> : vector<32x64xf32>
    %121 = tpu.matmul %118, %120, %cst_56 {dimension_numbers = #tpu.dot_dimension_numbers<[1], [0], [0], [1], [0, 0, 1, 1], [], []>} : vector<32x32xbf16>, vector<32x64xbf16>, vector<32x64xf32> -> vector<32x64xf32>
    %c0_57 = arith.constant 0 : index
    %c0_58 = arith.constant 0 : index
    %c0_59 = arith.constant 0 : index
    %122 = vector.load %arg16[%c0_57, %c0_58, %c0_59] : memref<2x1x64xf32, #tpu.memory_space<vmem>>, vector<1x1x64xf32>
    %123 = vector.shape_cast %122 : vector<1x1x64xf32> to vector<1x64xf32>
    %124 = vector.broadcast %123 : vector<1x64xf32> to vector<32x64xf32>
    %125 = arith.addf %121, %124 : vector<32x64xf32>
    %126 = arith.mulf %125, %125 : vector<32x64xf32>
    %127 = arith.mulf %125, %126 : vector<32x64xf32>
    %cst_60 = arith.constant 4.471500e-02 : f32
    %128 = vector.broadcast %cst_60 : f32 to vector<32x64xf32>
    %129 = arith.mulf %128, %127 : vector<32x64xf32>
    %130 = arith.addf %125, %129 : vector<32x64xf32>
    %cst_61 = arith.constant 0.797884583 : f32
    %131 = vector.broadcast %cst_61 : f32 to vector<32x64xf32>
    %132 = arith.mulf %131, %130 : vector<32x64xf32>
    %133 = math.tanh %132 : vector<32x64xf32>
    %cst_62 = arith.constant 1.000000e+00 : f32
    %134 = vector.broadcast %cst_62 : f32 to vector<32x64xf32>
    %135 = arith.addf %134, %133 : vector<32x64xf32>
    %cst_63 = arith.constant 5.000000e-01 : f32
    %136 = vector.broadcast %cst_63 : f32 to vector<32x64xf32>
    %137 = arith.mulf %136, %135 : vector<32x64xf32>
    %138 = arith.mulf %125, %137 : vector<32x64xf32>
    %139 = arith.truncf %138 : vector<32x64xf32> to vector<32x64xbf16>
    %c0_64 = arith.constant 0 : index
    %c0_65 = arith.constant 0 : index
    %c0_66 = arith.constant 0 : index
    %140 = vector.load %arg17[%c0_64, %c0_65, %c0_66] : memref<2x64x32xbf16, #tpu.memory_space<vmem>>, vector<1x64x32xbf16>
    %141 = vector.shape_cast %140 : vector<1x64x32xbf16> to vector<64x32xbf16>
    %cst_67 = arith.constant dense<0.000000e+00> : vector<32x32xf32>
    %142 = tpu.matmul %139, %141, %cst_67 {dimension_numbers = #tpu.dot_dimension_numbers<[1], [0], [0], [1], [0, 0, 1, 1], [], []>} : vector<32x64xbf16>, vector<64x32xbf16>, vector<32x32xf32> -> vector<32x32xf32>
    %143 = arith.addf %91, %142 : vector<32x32xf32>
    %c0_68 = arith.constant 0 : index
    %c0_69 = arith.constant 0 : index
    %c0_70 = arith.constant 0 : index
    %144 = vector.load %arg18[%c0_68, %c0_69, %c0_70] : memref<2x1x32xf32, #tpu.memory_space<vmem>>, vector<1x1x32xf32>
    %145 = vector.shape_cast %144 : vector<1x1x32xf32> to vector<1x32xf32>
    %146 = vector.broadcast %145 : vector<1x32xf32> to vector<32x32xf32>
    %147 = arith.addf %143, %146 : vector<32x32xf32>
    %c1 = arith.constant 1 : index
    %c0_71 = arith.constant 0 : index
    %c0_72 = arith.constant 0 : index
    %148 = vector.load %arg7[%c1, %c0_71, %c0_72] : memref<2x1x32xf32, #tpu.memory_space<vmem>>, vector<1x1x32xf32>
    %149 = vector.shape_cast %148 : vector<1x1x32xf32> to vector<1x32xf32>
    %c1_73 = arith.constant 1 : index
    %c0_74 = arith.constant 0 : index
    %c0_75 = arith.constant 0 : index
    %150 = vector.load %arg8[%c1_73, %c0_74, %c0_75] : memref<2x1x32xf32, #tpu.memory_space<vmem>>, vector<1x1x32xf32>
    %151 = vector.shape_cast %150 : vector<1x1x32xf32> to vector<1x32xf32>
    %cst_76 = arith.constant dense<0.000000e+00> : vector<32xf32>
    %152 = vector.multi_reduction <add>, %147, %cst_76 [1] : vector<32x32xf32> to vector<32xf32>
    %153 = vector.shape_cast %152 : vector<32xf32> to vector<32x1xf32>
    %cst_77 = arith.constant 3.200000e+01 : f32
    %154 = vector.broadcast %cst_77 : f32 to vector<32x1xf32>
    %155 = arith.divf %153, %154 : vector<32x1xf32>
    %156 = vector.broadcast %155 : vector<32x1xf32> to vector<32x32xf32>
    %157 = arith.subf %147, %156 : vector<32x32xf32>
    %158 = arith.mulf %157, %157 : vector<32x32xf32>
    %cst_78 = arith.constant dense<0.000000e+00> : vector<32xf32>
    %159 = vector.multi_reduction <add>, %158, %cst_78 [1] : vector<32x32xf32> to vector<32xf32>
    %160 = vector.shape_cast %159 : vector<32xf32> to vector<32x1xf32>
    %cst_79 = arith.constant 3.200000e+01 : f32
    %161 = vector.broadcast %cst_79 : f32 to vector<32x1xf32>
    %162 = arith.divf %160, %161 : vector<32x1xf32>
    %163 = vector.broadcast %155 : vector<32x1xf32> to vector<32x32xf32>
    %164 = arith.subf %147, %163 : vector<32x32xf32>
    %cst_80 = arith.constant 9.99999974E-6 : f32
    %165 = vector.broadcast %cst_80 : f32 to vector<32x1xf32>
    %166 = arith.addf %162, %165 : vector<32x1xf32>
    %167 = math.rsqrt %166 : vector<32x1xf32>
    %168 = vector.broadcast %167 : vector<32x1xf32> to vector<32x32xf32>
    %169 = arith.mulf %164, %168 : vector<32x32xf32>
    %170 = vector.broadcast %149 : vector<1x32xf32> to vector<32x32xf32>
    %171 = arith.mulf %169, %170 : vector<32x32xf32>
    %172 = vector.broadcast %151 : vector<1x32xf32> to vector<32x32xf32>
    %173 = arith.addf %171, %172 : vector<32x32xf32>
    %174 = arith.truncf %173 : vector<32x32xf32> to vector<32x32xbf16>
    %c1_81 = arith.constant 1 : index
    %c0_82 = arith.constant 0 : index
    %c0_83 = arith.constant 0 : index
    %175 = vector.load %arg9[%c1_81, %c0_82, %c0_83] : memref<2x32x96xbf16, #tpu.memory_space<vmem>>, vector<1x32x96xbf16>
    %176 = vector.shape_cast %175 : vector<1x32x96xbf16> to vector<32x96xbf16>
    %cst_84 = arith.constant dense<0.000000e+00> : vector<32x96xf32>
    %177 = tpu.matmul %174, %176, %cst_84 {dimension_numbers = #tpu.dot_dimension_numbers<[1], [0], [0], [1], [0, 0, 1, 1], [], []>} : vector<32x32xbf16>, vector<32x96xbf16>, vector<32x96xf32> -> vector<32x96xf32>
    %c1_85 = arith.constant 1 : index
    %c0_86 = arith.constant 0 : index
    %c0_87 = arith.constant 0 : index
    %178 = vector.load %arg10[%c1_85, %c0_86, %c0_87] : memref<2x1x96xf32, #tpu.memory_space<vmem>>, vector<1x1x96xf32>
    %179 = vector.shape_cast %178 : vector<1x1x96xf32> to vector<1x96xf32>
    %180 = vector.broadcast %179 : vector<1x96xf32> to vector<32x96xf32>
    %181 = arith.addf %177, %180 : vector<32x96xf32>
    %182 = vector.shape_cast %181 : vector<32x96xf32> to vector<2x16x96xf32>
    %183 = vector.extract_strided_slice %182 {offsets = [0, 0, 0], sizes = [2, 16, 32], strides = [1, 1, 1]} : vector<2x16x96xf32> to vector<2x16x32xf32>
    %184 = vector.extract_strided_slice %182 {offsets = [0, 0, 32], sizes = [2, 16, 32], strides = [1, 1, 1]} : vector<2x16x96xf32> to vector<2x16x32xf32>
    %185 = vector.extract_strided_slice %182 {offsets = [0, 0, 64], sizes = [2, 16, 32], strides = [1, 1, 1]} : vector<2x16x96xf32> to vector<2x16x32xf32>
    %186 = vector.extract_strided_slice %183 {offsets = [0, 0, 0], sizes = [2, 16, 16], strides = [1, 1, 1]} : vector<2x16x32xf32> to vector<2x16x16xf32>
    %187 = vector.extract_strided_slice %183 {offsets = [0, 0, 16], sizes = [2, 16, 16], strides = [1, 1, 1]} : vector<2x16x32xf32> to vector<2x16x16xf32>
    %188 = tpu.concatenate %186, %187 in 0 : vector<2x16x16xf32>, vector<2x16x16xf32> -> vector<4x16x16xf32>
    %189 = vector.extract_strided_slice %184 {offsets = [0, 0, 0], sizes = [2, 16, 16], strides = [1, 1, 1]} : vector<2x16x32xf32> to vector<2x16x16xf32>
    %190 = vector.extract_strided_slice %184 {offsets = [0, 0, 16], sizes = [2, 16, 16], strides = [1, 1, 1]} : vector<2x16x32xf32> to vector<2x16x16xf32>
    %191 = tpu.concatenate %189, %190 in 0 : vector<2x16x16xf32>, vector<2x16x16xf32> -> vector<4x16x16xf32>
    %192 = vector.extract_strided_slice %185 {offsets = [0, 0, 0], sizes = [2, 16, 16], strides = [1, 1, 1]} : vector<2x16x32xf32> to vector<2x16x16xf32>
    %193 = vector.extract_strided_slice %185 {offsets = [0, 0, 16], sizes = [2, 16, 16], strides = [1, 1, 1]} : vector<2x16x32xf32> to vector<2x16x16xf32>
    %194 = tpu.concatenate %192, %193 in 0 : vector<2x16x16xf32>, vector<2x16x16xf32> -> vector<4x16x16xf32>
    %195 = arith.truncf %188 : vector<4x16x16xf32> to vector<4x16x16xbf16>
    %196 = arith.truncf %191 : vector<4x16x16xf32> to vector<4x16x16xbf16>
    "tpu.trace_start"() <{level = 10 : i32, message = "gqd,gkd->gqk"}> : () -> ()
    %cst_88 = arith.constant dense<0.000000e+00> : vector<4x16x16xf32>
    %197 = tpu.matmul %195, %196, %cst_88 {dimension_numbers = #tpu.dot_dimension_numbers<[2], [2], [1], [1], [0, 0, 0, 1, 1, 1], [0], [0]>} : vector<4x16x16xbf16>, vector<4x16x16xbf16>, vector<4x16x16xf32> -> vector<4x16x16xf32>
    "tpu.trace_stop"() : () -> ()
    %cst_89 = arith.constant 2.500000e-01 : f32
    %198 = vector.broadcast %cst_89 : f32 to vector<4x16x16xf32>
    %199 = arith.mulf %197, %198 : vector<4x16x16xf32>
    %200 = vector.broadcast %7 : vector<4x1x16xf32> to vector<4x16x16xf32>
    %201 = arith.addf %199, %200 : vector<4x16x16xf32>
    %cst_90 = arith.constant dense<0xFF800000> : vector<4x16xf32>
    %202 = vector.multi_reduction <maximumf>, %201, %cst_90 [2] : vector<4x16x16xf32> to vector<4x16xf32>
    %203 = vector.shape_cast %202 : vector<4x16xf32> to vector<4x16x1xf32>
    %204 = vector.broadcast %203 : vector<4x16x1xf32> to vector<4x16x16xf32>
    %205 = arith.subf %201, %204 : vector<4x16x16xf32>
    %206 = math.exp %205 : vector<4x16x16xf32>
    %cst_91 = arith.constant dense<0.000000e+00> : vector<4x16xf32>
    %207 = vector.multi_reduction <add>, %206, %cst_91 [2] : vector<4x16x16xf32> to vector<4x16xf32>
    %208 = vector.shape_cast %207 : vector<4x16xf32> to vector<4x16x1xf32>
    %209 = tpu.reciprocal %208 {approx = true} : vector<4x16x1xf32> -> vector<4x16x1xf32>
    %210 = vector.broadcast %209 : vector<4x16x1xf32> to vector<4x16x16xf32>
    %211 = arith.mulf %206, %210 : vector<4x16x16xf32>
    %212 = arith.truncf %211 : vector<4x16x16xf32> to vector<4x16x16xbf16>
    %213 = arith.truncf %194 : vector<4x16x16xf32> to vector<4x16x16xbf16>
    "tpu.trace_start"() <{level = 10 : i32, message = "gqk,gkd->gqd"}> : () -> ()
    %cst_92 = arith.constant dense<0.000000e+00> : vector<4x16x16xf32>
    %214 = tpu.matmul %212, %213, %cst_92 {dimension_numbers = #tpu.dot_dimension_numbers<[2], [1], [1], [2], [0, 0, 0, 1, 1, 2], [0], [0]>} : vector<4x16x16xbf16>, vector<4x16x16xbf16>, vector<4x16x16xf32> -> vector<4x16x16xf32>
    "tpu.trace_stop"() : () -> ()
    %215 = vector.extract_strided_slice %214 {offsets = [0, 0, 0], sizes = [2, 16, 16], strides = [1, 1, 1]} : vector<4x16x16xf32> to vector<2x16x16xf32>
    %216 = vector.extract_strided_slice %214 {offsets = [2, 0, 0], sizes = [2, 16, 16], strides = [1, 1, 1]} : vector<4x16x16xf32> to vector<2x16x16xf32>
    %217 = tpu.concatenate %215, %216 in 2 : vector<2x16x16xf32>, vector<2x16x16xf32> -> vector<2x16x32xf32>
    %218 = vector.shape_cast %217 : vector<2x16x32xf32> to vector<32x32xf32>
    %219 = arith.truncf %218 : vector<32x32xf32> to vector<32x32xbf16>
    %c1_93 = arith.constant 1 : index
    %c0_94 = arith.constant 0 : index
    %c0_95 = arith.constant 0 : index
    %220 = vector.load %arg11[%c1_93, %c0_94, %c0_95] : memref<2x32x32xbf16, #tpu.memory_space<vmem>>, vector<1x32x32xbf16>
    %221 = vector.shape_cast %220 : vector<1x32x32xbf16> to vector<32x32xbf16>
    %cst_96 = arith.constant dense<0.000000e+00> : vector<32x32xf32>
    %222 = tpu.matmul %219, %221, %cst_96 {dimension_numbers = #tpu.dot_dimension_numbers<[1], [0], [0], [1], [0, 0, 1, 1], [], []>} : vector<32x32xbf16>, vector<32x32xbf16>, vector<32x32xf32> -> vector<32x32xf32>
    %223 = arith.addf %147, %222 : vector<32x32xf32>
    %c1_97 = arith.constant 1 : index
    %c0_98 = arith.constant 0 : index
    %c0_99 = arith.constant 0 : index
    %224 = vector.load %arg12[%c1_97, %c0_98, %c0_99] : memref<2x1x32xf32, #tpu.memory_space<vmem>>, vector<1x1x32xf32>
    %225 = vector.shape_cast %224 : vector<1x1x32xf32> to vector<1x32xf32>
    %226 = vector.broadcast %225 : vector<1x32xf32> to vector<32x32xf32>
    %227 = arith.addf %223, %226 : vector<32x32xf32>
    %c1_100 = arith.constant 1 : index
    %c0_101 = arith.constant 0 : index
    %c0_102 = arith.constant 0 : index
    %228 = vector.load %arg13[%c1_100, %c0_101, %c0_102] : memref<2x1x32xf32, #tpu.memory_space<vmem>>, vector<1x1x32xf32>
    %229 = vector.shape_cast %228 : vector<1x1x32xf32> to vector<1x32xf32>
    %c1_103 = arith.constant 1 : index
    %c0_104 = arith.constant 0 : index
    %c0_105 = arith.constant 0 : index
    %230 = vector.load %arg14[%c1_103, %c0_104, %c0_105] : memref<2x1x32xf32, #tpu.memory_space<vmem>>, vector<1x1x32xf32>
    %231 = vector.shape_cast %230 : vector<1x1x32xf32> to vector<1x32xf32>
    %cst_106 = arith.constant dense<0.000000e+00> : vector<32xf32>
    %232 = vector.multi_reduction <add>, %227, %cst_106 [1] : vector<32x32xf32> to vector<32xf32>
    %233 = vector.shape_cast %232 : vector<32xf32> to vector<32x1xf32>
    %cst_107 = arith.constant 3.200000e+01 : f32
    %234 = vector.broadcast %cst_107 : f32 to vector<32x1xf32>
    %235 = arith.divf %233, %234 : vector<32x1xf32>
    %236 = vector.broadcast %235 : vector<32x1xf32> to vector<32x32xf32>
    %237 = arith.subf %227, %236 : vector<32x32xf32>
    %238 = arith.mulf %237, %237 : vector<32x32xf32>
    %cst_108 = arith.constant dense<0.000000e+00> : vector<32xf32>
    %239 = vector.multi_reduction <add>, %238, %cst_108 [1] : vector<32x32xf32> to vector<32xf32>
    %240 = vector.shape_cast %239 : vector<32xf32> to vector<32x1xf32>
    %cst_109 = arith.constant 3.200000e+01 : f32
    %241 = vector.broadcast %cst_109 : f32 to vector<32x1xf32>
    %242 = arith.divf %240, %241 : vector<32x1xf32>
    %243 = vector.broadcast %235 : vector<32x1xf32> to vector<32x32xf32>
    %244 = arith.subf %227, %243 : vector<32x32xf32>
    %cst_110 = arith.constant 9.99999974E-6 : f32
    %245 = vector.broadcast %cst_110 : f32 to vector<32x1xf32>
    %246 = arith.addf %242, %245 : vector<32x1xf32>
    %247 = math.rsqrt %246 : vector<32x1xf32>
    %248 = vector.broadcast %247 : vector<32x1xf32> to vector<32x32xf32>
    %249 = arith.mulf %244, %248 : vector<32x32xf32>
    %250 = vector.broadcast %229 : vector<1x32xf32> to vector<32x32xf32>
    %251 = arith.mulf %249, %250 : vector<32x32xf32>
    %252 = vector.broadcast %231 : vector<1x32xf32> to vector<32x32xf32>
    %253 = arith.addf %251, %252 : vector<32x32xf32>
    %254 = arith.truncf %253 : vector<32x32xf32> to vector<32x32xbf16>
    %c1_111 = arith.constant 1 : index
    %c0_112 = arith.constant 0 : index
    %c0_113 = arith.constant 0 : index
    %255 = vector.load %arg15[%c1_111, %c0_112, %c0_113] : memref<2x32x64xbf16, #tpu.memory_space<vmem>>, vector<1x32x64xbf16>
    %256 = vector.shape_cast %255 : vector<1x32x64xbf16> to vector<32x64xbf16>
    %cst_114 = arith.constant dense<0.000000e+00> : vector<32x64xf32>
    %257 = tpu.matmul %254, %256, %cst_114 {dimension_numbers = #tpu.dot_dimension_numbers<[1], [0], [0], [1], [0, 0, 1, 1], [], []>} : vector<32x32xbf16>, vector<32x64xbf16>, vector<32x64xf32> -> vector<32x64xf32>
    %c1_115 = arith.constant 1 : index
    %c0_116 = arith.constant 0 : index
    %c0_117 = arith.constant 0 : index
    %258 = vector.load %arg16[%c1_115, %c0_116, %c0_117] : memref<2x1x64xf32, #tpu.memory_space<vmem>>, vector<1x1x64xf32>
    %259 = vector.shape_cast %258 : vector<1x1x64xf32> to vector<1x64xf32>
    %260 = vector.broadcast %259 : vector<1x64xf32> to vector<32x64xf32>
    %261 = arith.addf %257, %260 : vector<32x64xf32>
    %262 = arith.mulf %261, %261 : vector<32x64xf32>
    %263 = arith.mulf %261, %262 : vector<32x64xf32>
    %cst_118 = arith.constant 4.471500e-02 : f32
    %264 = vector.broadcast %cst_118 : f32 to vector<32x64xf32>
    %265 = arith.mulf %264, %263 : vector<32x64xf32>
    %266 = arith.addf %261, %265 : vector<32x64xf32>
    %cst_119 = arith.constant 0.797884583 : f32
    %267 = vector.broadcast %cst_119 : f32 to vector<32x64xf32>
    %268 = arith.mulf %267, %266 : vector<32x64xf32>
    %269 = math.tanh %268 : vector<32x64xf32>
    %cst_120 = arith.constant 1.000000e+00 : f32
    %270 = vector.broadcast %cst_120 : f32 to vector<32x64xf32>
    %271 = arith.addf %270, %269 : vector<32x64xf32>
    %cst_121 = arith.constant 5.000000e-01 : f32
    %272 = vector.broadcast %cst_121 : f32 to vector<32x64xf32>
    %273 = arith.mulf %272, %271 : vector<32x64xf32>
    %274 = arith.mulf %261, %273 : vector<32x64xf32>
    %275 = arith.truncf %274 : vector<32x64xf32> to vector<32x64xbf16>
    %c1_122 = arith.constant 1 : index
    %c0_123 = arith.constant 0 : index
    %c0_124 = arith.constant 0 : index
    %276 = vector.load %arg17[%c1_122, %c0_123, %c0_124] : memref<2x64x32xbf16, #tpu.memory_space<vmem>>, vector<1x64x32xbf16>
    %277 = vector.shape_cast %276 : vector<1x64x32xbf16> to vector<64x32xbf16>
    %cst_125 = arith.constant dense<0.000000e+00> : vector<32x32xf32>
    %278 = tpu.matmul %275, %277, %cst_125 {dimension_numbers = #tpu.dot_dimension_numbers<[1], [0], [0], [1], [0, 0, 1, 1], [], []>} : vector<32x64xbf16>, vector<64x32xbf16>, vector<32x32xf32> -> vector<32x32xf32>
    %279 = arith.addf %227, %278 : vector<32x32xf32>
    %c1_126 = arith.constant 1 : index
    %c0_127 = arith.constant 0 : index
    %c0_128 = arith.constant 0 : index
    %280 = vector.load %arg18[%c1_126, %c0_127, %c0_128] : memref<2x1x32xf32, #tpu.memory_space<vmem>>, vector<1x1x32xf32>
    %281 = vector.shape_cast %280 : vector<1x1x32xf32> to vector<1x32xf32>
    %282 = vector.broadcast %281 : vector<1x32xf32> to vector<32x32xf32>
    %283 = arith.addf %279, %282 : vector<32x32xf32>
    %284 = arith.truncf %283 : vector<32x32xf32> to vector<32x32xbf16>
    %c0_129 = arith.constant 0 : index
    %c0_130 = arith.constant 0 : index
    %285 = vector.load %arg19[%c0_129, %c0_130] : memref<32x128xbf16, #tpu.memory_space<vmem>>, vector<32x128xbf16>
    %cst_131 = arith.constant dense<0.000000e+00> : vector<32x128xf32>
    %286 = tpu.matmul %284, %285, %cst_131 {dimension_numbers = #tpu.dot_dimension_numbers<[1], [0], [0], [1], [0, 0, 1, 1], [], []>} : vector<32x32xbf16>, vector<32x128xbf16>, vector<32x128xf32> -> vector<32x128xf32>
    %c0_132 = arith.constant 0 : index
    %c0_133 = arith.constant 0 : index
    %287 = vector.load %arg20[%c0_132, %c0_133] : memref<1x128xf32, #tpu.memory_space<vmem>>, vector<1x128xf32>
    %288 = vector.broadcast %287 : vector<1x128xf32> to vector<32x128xf32>
    %289 = arith.addf %286, %288 : vector<32x128xf32>
    %290 = vector.broadcast %6 : vector<32x1xf32> to vector<32x128xf32>
    %291 = arith.mulf %289, %290 : vector<32x128xf32>
    %292 = arith.index_cast %arg0 : i32 to index
    %293 = memref.load %arg1[%292] : memref<4xf32, #tpu.memory_space<smem>>
    %294 = vector.broadcast %293 : f32 to vector<32x128xf32>
    %295 = arith.mulf %294, %291 : vector<32x128xf32>
    %296 = arith.addf %3, %295 : vector<32x128xf32>
    %c0_134 = arith.constant 0 : index
    %c0_135 = arith.constant 0 : index
    %297 = vector.load %arg21[%c0_134, %c0_135] : memref<32x128xf32, #tpu.memory_space<vmem>>, vector<32x128xf32>
    tpu.vector_store %arg21[%c0_134, %c0_135], %296 {strides = array<i32>} : memref<32x128xf32, #tpu.memory_space<vmem>>, vector<32x128xf32>,
    return
  }
  func.func @transform_0(%arg0: i32) -> i32 {
    %c0_i32 = arith.constant 0 : i32
    %c0_i32_0 = arith.constant 0 : i32
    return %c0_i32 : i32
  }
  func.func @transform_1(%arg0: i32) -> (i32, i32) {
    %c0_i32 = arith.constant 0 : i32
    %c0_i32_0 = arith.constant 0 : i32
    %c0_i32_1 = arith.constant 0 : i32
    return %c0_i32, %c0_i32_0 : i32, i32
  }
  func.func @transform_2(%arg0: i32) -> (i32, i32, i32) {
    %c0_i32 = arith.constant 0 : i32
    %c0_i32_0 = arith.constant 0 : i32
    %c0_i32_1 = arith.constant 0 : i32
    return %arg0, %c0_i32, %c0_i32_0 : i32, i32, i32
  }
  func.func @transform_3(%arg0: i32) -> (i32, i32) {
    %c0_i32 = arith.constant 0 : i32
    %c0_i32_0 = arith.constant 0 : i32
    %c0_i32_1 = arith.constant 0 : i32
    return %c0_i32, %c0_i32_0 : i32, i32
  }
  func.func @transform_4(%arg0: i32) -> (i32, i32, i32) {
    %c0_i32 = arith.constant 0 : i32
    %c0_i32_0 = arith.constant 0 : i32
    %c0_i32_1 = arith.constant 0 : i32
    %c0_i32_2 = arith.constant 0 : i32
    return %c0_i32, %c0_i32_0, %c0_i32_1 : i32, i32, i32
  }
  func.func @transform_5(%arg0: i32) -> (i32, i32) {
    %c0_i32 = arith.constant 0 : i32
    %c0_i32_0 = arith.constant 0 : i32
    %c0_i32_1 = arith.constant 0 : i32
    return %c0_i32, %c0_i32_0 : i32, i32
  }
  func.func @transform_6(%arg0: i32) -> (i32, i32, i32) {
    %c0_i32 = arith.constant 0 : i32
    %c0_i32_0 = arith.constant 0 : i32
    %c0_i32_1 = arith.constant 0 : i32
    %c0_i32_2 = arith.constant 0 : i32
    return %c0_i32, %c0_i32_0, %c0_i32_1 : i32, i32, i32
  }
  func.func @transform_7(%arg0: i32) -> (i32, i32, i32) {
    %c0_i32 = arith.constant 0 : i32
    %c0_i32_0 = arith.constant 0 : i32
    %c0_i32_1 = arith.constant 0 : i32
    %c0_i32_2 = arith.constant 0 : i32
    return %c0_i32, %c0_i32_0, %c0_i32_1 : i32, i32, i32
  }
  func.func @transform_8(%arg0: i32) -> (i32, i32, i32) {
    %c0_i32 = arith.constant 0 : i32
    %c0_i32_0 = arith.constant 0 : i32
    %c0_i32_1 = arith.constant 0 : i32
    %c0_i32_2 = arith.constant 0 : i32
    return %c0_i32, %c0_i32_0, %c0_i32_1 : i32, i32, i32
  }
  func.func @transform_9(%arg0: i32) -> (i32, i32, i32) {
    %c0_i32 = arith.constant 0 : i32
    %c0_i32_0 = arith.constant 0 : i32
    %c0_i32_1 = arith.constant 0 : i32
    %c0_i32_2 = arith.constant 0 : i32
    return %c0_i32, %c0_i32_0, %c0_i32_1 : i32, i32, i32
  }
  func.func @transform_10(%arg0: i32) -> (i32, i32, i32) {
    %c0_i32 = arith.constant 0 : i32
    %c0_i32_0 = arith.constant 0 : i32
    %c0_i32_1 = arith.constant 0 : i32
    %c0_i32_2 = arith.constant 0 : i32
    return %c0_i32, %c0_i32_0, %c0_i32_1 : i32, i32, i32
  }
  func.func @transform_11(%arg0: i32) -> (i32, i32, i32) {
    %c0_i32 = arith.constant 0 : i32
    %c0_i32_0 = arith.constant 0 : i32
    %c0_i32_1 = arith.constant 0 : i32
    %c0_i32_2 = arith.constant 0 : i32
    return %c0_i32, %c0_i32_0, %c0_i32_1 : i32, i32, i32
  }
  func.func @transform_12(%arg0: i32) -> (i32, i32, i32) {
    %c0_i32 = arith.constant 0 : i32
    %c0_i32_0 = arith.constant 0 : i32
    %c0_i32_1 = arith.constant 0 : i32
    %c0_i32_2 = arith.constant 0 : i32
    return %c0_i32, %c0_i32_0, %c0_i32_1 : i32, i32, i32
  }
  func.func @transform_13(%arg0: i32) -> (i32, i32, i32) {
    %c0_i32 = arith.constant 0 : i32
    %c0_i32_0 = arith.constant 0 : i32
    %c0_i32_1 = arith.constant 0 : i32
    %c0_i32_2 = arith.constant 0 : i32
    return %c0_i32, %c0_i32_0, %c0_i32_1 : i32, i32, i32
  }
  func.func @transform_14(%arg0: i32) -> (i32, i32, i32) {
    %c0_i32 = arith.constant 0 : i32
    %c0_i32_0 = arith.constant 0 : i32
    %c0_i32_1 = arith.constant 0 : i32
    %c0_i32_2 = arith.constant 0 : i32
    return %c0_i32, %c0_i32_0, %c0_i32_1 : i32, i32, i32
  }
  func.func @transform_15(%arg0: i32) -> (i32, i32, i32) {
    %c0_i32 = arith.constant 0 : i32
    %c0_i32_0 = arith.constant 0 : i32
    %c0_i32_1 = arith.constant 0 : i32
    %c0_i32_2 = arith.constant 0 : i32
    return %c0_i32, %c0_i32_0, %c0_i32_1 : i32, i32, i32
  }
  func.func @transform_16(%arg0: i32) -> (i32, i32, i32) {
    %c0_i32 = arith.constant 0 : i32
    %c0_i32_0 = arith.constant 0 : i32
    %c0_i32_1 = arith.constant 0 : i32
    %c0_i32_2 = arith.constant 0 : i32
    return %c0_i32, %c0_i32_0, %c0_i32_1 : i32, i32, i32
  }
  func.func @transform_17(%arg0: i32) -> (i32, i32, i32) {
    %c0_i32 = arith.constant 0 : i32
    %c0_i32_0 = arith.constant 0 : i32
    %c0_i32_1 = arith.constant 0 : i32
    %c0_i32_2 = arith.constant 0 : i32
    return %c0_i32, %c0_i32_0, %c0_i32_1 : i32, i32, i32
  }
  func.func @transform_18(%arg0: i32) -> (i32, i32) {
    %c0_i32 = arith.constant 0 : i32
    %c0_i32_0 = arith.constant 0 : i32
    %c0_i32_1 = arith.constant 0 : i32
    return %c0_i32, %c0_i32_0 : i32, i32
  }
  func.func @transform_19(%arg0: i32) -> (i32, i32) {
    %c0_i32 = arith.constant 0 : i32
    %c0_i32_0 = arith.constant 0 : i32
    %c0_i32_1 = arith.constant 0 : i32
    return %c0_i32, %c0_i32_0 : i32, i32
  }
  func.func @transform_20(%arg0: i32) -> (i32, i32) {
    %c0_i32 = arith.constant 0 : i32
    %c0_i32_0 = arith.constant 0 : i32
    %c0_i32_1 = arith.constant 0 : i32
    return %c0_i32, %c0_i32_0 : i32, i32
  }
}

</mosaic_0001>

<llo_original>
// kernel: cfm_decoder_forward.1
$region0: #{cfm_decoder_forward.1}
  #allocation0 [shape = 'u32[]', space=smem, size = 0x4, offset = 0x4, fixed_abs, tag = 'smem constant byte address 0x4 - core index']
  #allocation1 [shape = 'u32[144,128]{1,0:T(1,128)}', space=vmem, size = 0x12000, scoped, tag = 'internal scratch']
  %s0 = inlined_call_operand.vmem [shape: f32[4], index: 0, kind: input, shape index: {}]
  %s1 = inlined_call_operand.vmem [shape: f32[32,128], index: 1, kind: input, shape index: {}]
  %s2 = inlined_call_operand.vmem [shape: f32[4,32,32], index: 2, kind: input, shape index: {}]
  %s3 = inlined_call_operand.vmem [shape: f32[32,1], index: 3, kind: input, shape index: {}]
  %s4 = inlined_call_operand.vmem [shape: f32[4,1,16], index: 4, kind: input, shape index: {}]
  %s5 = inlined_call_operand.vmem [shape: bf16[128,32], index: 5, kind: input, shape index: {}]
  %s6 = inlined_call_operand.vmem [shape: f32[2,1,32], index: 6, kind: input, shape index: {}]
  %s7 = inlined_call_operand.vmem [shape: f32[2,1,32], index: 7, kind: input, shape index: {}]
  %s8 = inlined_call_operand.vmem [shape: bf16[2,32,96], index: 8, kind: input, shape index: {}]
  %s9 = inlined_call_operand.vmem [shape: f32[2,1,96], index: 9, kind: input, shape index: {}]
  %s10 = inlined_call_operand.vmem [shape: bf16[2,32,32], index: 10, kind: input, shape index: {}]
  %s11 = inlined_call_operand.vmem [shape: f32[2,1,32], index: 11, kind: input, shape index: {}]
  %s12 = inlined_call_operand.vmem [shape: f32[2,1,32], index: 12, kind: input, shape index: {}]
  %s13 = inlined_call_operand.vmem [shape: f32[2,1,32], index: 13, kind: input, shape index: {}]
  %s14 = inlined_call_operand.vmem [shape: bf16[2,32,64], index: 14, kind: input, shape index: {}]
  %s15 = inlined_call_operand.vmem [shape: f32[2,1,64], index: 15, kind: input, shape index: {}]
  %s16 = inlined_call_operand.vmem [shape: bf16[2,64,32], index: 16, kind: input, shape index: {}]
  %s17 = inlined_call_operand.vmem [shape: f32[2,1,32], index: 17, kind: input, shape index: {}]
  %s18 = inlined_call_operand.vmem [shape: bf16[32,128], index: 18, kind: input, shape index: {}]
  %s19 = inlined_call_operand.vmem [shape: f32[1,128], index: 19, kind: input, shape index: {}]
  %s20 = inlined_call_operand.vmem [shape: f32[32,128], index: 20, kind: output, shape index: {}]
  %s21 = sld [smem:[#allocation0]]
  $region121: #{cfm_decoder_forward.1} parent=0
    _
  %s23 = ssub.s32 1, %s21
  %s24 = scalar_select 0, %s23, %s21
  $region1: #{cfm_decoder_forward.1} parent=0
    #allocation2 [shape = 'u8[512]{0}', space=smem, size = 0x200, scoped, tag = 'input window, operand 0, single buffered']
    #allocation3 [shape = 's32[2]{0}', space=sflag, size = 0x8, scoped, tag = 'scoped memory for cfm_decoder_forward.1']
    %25 = vsyncpa [#allocation3], 0
    loop: start=0, step=1, limit=6
    $region2: #{cfm_decoder_forward.1} parent=1 // loop_pre_header
      _
    $region3: #{cfm_decoder_forward.1} parent=1 // loop_header
      %s27 = sphi 0, %s31
      %p28 = scmp.ge.s32.totalorder %s27, 6
      %s35 = sphi 0, %s35
      %s37 = sphi 0, %s35
      %s38 = sphi 0, %s37
      %s52 = sphi 0, %s38
      %s56 = sphi 0, %s56
      %s58 = sphi 0, %s56
      %s59 = sphi 0, %s58
      %s73 = sphi 0, %s59
      %s79 = sphi 0, %s81
      %s82 = sphi 0, %s79
      %s83 = sphi 0, %s82
      %s99 = sphi 0, %s83
      %s103 = sphi 0, %s103
      %s105 = sphi 0, %s103
      %s106 = sphi 0, %s105
      %s120 = sphi 0, %s106
      %s124 = sphi 0, %s124
      %s126 = sphi 0, %s124
      %s127 = sphi 0, %s126
      %s141 = sphi 0, %s127
      %s145 = sphi 0, %s145
      %s147 = sphi 0, %s145
      %s148 = sphi 0, %s147
      %s162 = sphi 0, %s148
      %s166 = sphi 0, %s166
      %s168 = sphi 0, %s166
      %s169 = sphi 0, %s168
      %s183 = sphi 0, %s169
      %s187 = sphi 0, %s187
      %s189 = sphi 0, %s187
      %s190 = sphi 0, %s189
      %s204 = sphi 0, %s190
      %s208 = sphi 0, %s208
      %s210 = sphi 0, %s208
      %s211 = sphi 0, %s210
      %s225 = sphi 0, %s211
      %s229 = sphi 0, %s229
      %s231 = sphi 0, %s229
      %s232 = sphi 0, %s231
      %s246 = sphi 0, %s232
      %s250 = sphi 0, %s250
      %s252 = sphi 0, %s250
      %s253 = sphi 0, %s252
      %s267 = sphi 0, %s253
      %s271 = sphi 0, %s271
      %s273 = sphi 0, %s271
      %s274 = sphi 0, %s273
      %s288 = sphi 0, %s274
      %s292 = sphi 0, %s292
      %s294 = sphi 0, %s292
      %s295 = sphi 0, %s294
      %s309 = sphi 0, %s295
      %s313 = sphi 0, %s313
      %s315 = sphi 0, %s313
      %s316 = sphi 0, %s315
      %s330 = sphi 0, %s316
      %s334 = sphi 0, %s334
      %s336 = sphi 0, %s334
      %s337 = sphi 0, %s336
      %s351 = sphi 0, %s337
      %s355 = sphi 0, %s355
      %s357 = sphi 0, %s355
      %s358 = sphi 0, %s357
      %s372 = sphi 0, %s358
      %s376 = sphi 0, %s376
      %s378 = sphi 0, %s376
      %s379 = sphi 0, %s378
      %s393 = sphi 0, %s379
      %s397 = sphi 0, %s397
      %s399 = sphi 0, %s397
      %s400 = sphi 0, %s399
      %s414 = sphi 0, %s400
      %s418 = sphi 0, %s418
      %s420 = sphi 0, %s418
      %s421 = sphi 0, %s420
      %s435 = sphi 0, %s421
      %s439 = sphi 0, %s439
      %s441 = sphi 0, %s439
      %s442 = sphi 0, %s441
      %s456 = sphi 0, %s442
      %s460 = sphi 0, %s460
      %s462 = sphi 0, %s460
      %s463 = sphi 0, %s462
      %s477 = sphi 0, %s463
    $region4: #{cfm_decoder_forward.1} parent=1 // loop_header_branch
      %30 = sbr.rel (%p28) target = $region8
    $region5: #{cfm_decoder_forward.1} parent=1 // loop_body
      %s32 = ssub.s32 %s27, 1
      %s33 = ssub.s32 %s27, 2
      %s34 = sadd.s32 %s27, 1
      %s36 = sadd.s32 %s35, 1
      %p39 = scmp.eq.s32.totalorder %s27, 3
      %p40 = scmp.ne.s32.totalorder %s35, %s37
      %p41 = scmp.eq.s32.totalorder %s27, 0
      %p42 = por %p40, %p41
      %p43 = scmp.ne.s32.totalorder %s35, %s37
      %p44 = scmp.eq.s32.totalorder %s32, 3
      %p45 = por %p43, %p44
      %p46 = scmp.ne.s32.totalorder %s37, %s38
      %p47 = scmp.eq.s32.totalorder %s32, 0
      %p48 = por %p46, %p47
      %p49 = scmp.ne.s32.totalorder %s37, %s38
      %p50 = scmp.eq.s32.totalorder %s33, 3
      %p51 = por %p49, %p50
      %p53 = scmp.ne.s32.totalorder %s38, %s52
      %p54 = scmp.eq.s32.totalorder %s33, 0
      %p55 = por %p53, %p54
      %s57 = sadd.s32 %s56, 1
      %p60 = scmp.eq.s32.totalorder %s27, 3
      %p61 = scmp.ne.s32.totalorder %s56, %s58
      %p62 = scmp.eq.s32.totalorder %s27, 0
      %p63 = por %p61, %p62
      %p64 = scmp.ne.s32.totalorder %s56, %s58
      %p65 = scmp.eq.s32.totalorder %s32, 3
      %p66 = por %p64, %p65
      %p67 = scmp.ne.s32.totalorder %s58, %s59
      %p68 = scmp.eq.s32.totalorder %s32, 0
      %p69 = por %p67, %p68
      %p70 = scmp.ne.s32.totalorder %s58, %s59
      %p71 = scmp.eq.s32.totalorder %s33, 3
      %p72 = por %p70, %p71
      %p74 = scmp.ne.s32.totalorder %s59, %s73
      %p75 = scmp.eq.s32.totalorder %s33, 0
      %p76 = por %p74, %p75
      %s77 = ssub.s32 %s27, %s34
      %p78 = scmp.eq.s32.totalorder %s77, 0
      %s80 = sadd.s32 %s79, 1
      %s81 = scalar_select %p78, %s79, %s80
      %p84 = pneg %p78
      %p85 = scmp.eq.s32.totalorder %s27, 3
      %p86 = por %p84, %p85
      %p87 = scmp.ne.s32.totalorder %s79, %s82
      %p88 = scmp.eq.s32.totalorder %s27, 0
      %p89 = por %p87, %p88
      %p90 = scmp.ne.s32.totalorder %s79, %s82
      %p91 = scmp.eq.s32.totalorder %s32, 3
      %p92 = por %p90, %p91
      %p93 = scmp.ne.s32.totalorder %s82, %s83
      %p94 = scmp.eq.s32.totalorder %s32, 0
      %p95 = por %p93, %p94
      %p96 = scmp.ne.s32.totalorder %s82, %s83
      %p97 = scmp.eq.s32.totalorder %s33, 3
      %p98 = por %p96, %p97
      %p100 = scmp.ne.s32.totalorder %s83, %s99
      %p101 = scmp.eq.s32.totalorder %s33, 0
      %p102 = por %p100, %p101
      %s104 = sadd.s32 %s103, 1
      %p107 = scmp.eq.s32.totalorder %s27, 3
      %p108 = scmp.ne.s32.totalorder %s103, %s105
      %p109 = scmp.eq.s32.totalorder %s27, 0
      %p110 = por %p108, %p109
      %p111 = scmp.ne.s32.totalorder %s103, %s105
      %p112 = scmp.eq.s32.totalorder %s32, 3
      %p113 = por %p111, %p112
      %p114 = scmp.ne.s32.totalorder %s105, %s106
      %p115 = scmp.eq.s32.totalorder %s32, 0
      %p116 = por %p114, %p115
      %p117 = scmp.ne.s32.totalorder %s105, %s106
      %p118 = scmp.eq.s32.totalorder %s33, 3
      %p119 = por %p117, %p118
      %p121 = scmp.ne.s32.totalorder %s106, %s120
      %p122 = scmp.eq.s32.totalorder %s33, 0
      %p123 = por %p121, %p122
      %s125 = sadd.s32 %s124, 1
      %p128 = scmp.eq.s32.totalorder %s27, 3
      %p129 = scmp.ne.s32.totalorder %s124, %s126
      %p130 = scmp.eq.s32.totalorder %s27, 0
      %p131 = por %p129, %p130
      %p132 = scmp.ne.s32.totalorder %s124, %s126
      %p133 = scmp.eq.s32.totalorder %s32, 3
      %p134 = por %p132, %p133
      %p135 = scmp.ne.s32.totalorder %s126, %s127
      %p136 = scmp.eq.s32.totalorder %s32, 0
      %p137 = por %p135, %p136
      %p138 = scmp.ne.s32.totalorder %s126, %s127
      %p139 = scmp.eq.s32.totalorder %s33, 3
      %p140 = por %p138, %p139
      %p142 = scmp.ne.s32.totalorder %s127, %s141
      %p143 = scmp.eq.s32.totalorder %s33, 0
      %p144 = por %p142, %p143
      %s146 = sadd.s32 %s145, 1
      %p149 = scmp.eq.s32.totalorder %s27, 3
      %p150 = scmp.ne.s32.totalorder %s145, %s147
      %p151 = scmp.eq.s32.totalorder %s27, 0
      %p152 = por %p150, %p151
      %p153 = scmp.ne.s32.totalorder %s145, %s147
      %p154 = scmp.eq.s32.totalorder %s32, 3
      %p155 = por %p153, %p154
      %p156 = scmp.ne.s32.totalorder %s147, %s148
      %p157 = scmp.eq.s32.totalorder %s32, 0
      %p158 = por %p156, %p157
      %p159 = scmp.ne.s32.totalorder %s147, %s148
      %p160 = scmp.eq.s32.totalorder %s33, 3
      %p161 = por %p159, %p160
      %p163 = scmp.ne.s32.totalorder %s148, %s162
      %p164 = scmp.eq.s32.totalorder %s33, 0
      %p165 = por %p163, %p164
      %s167 = sadd.s32 %s166, 1
      %p170 = scmp.eq.s32.totalorder %s27, 3
      %p171 = scmp.ne.s32.totalorder %s166, %s168
      %p172 = scmp.eq.s32.totalorder %s27, 0
      %p173 = por %p171, %p172
      %p174 = scmp.ne.s32.totalorder %s166, %s168
      %p175 = scmp.eq.s32.totalorder %s32, 3
      %p176 = por %p174, %p175
      %p177 = scmp.ne.s32.totalorder %s168, %s169
      %p178 = scmp.eq.s32.totalorder %s32, 0
      %p179 = por %p177, %p178
      %p180 = scmp.ne.s32.totalorder %s168, %s169
      %p181 = scmp.eq.s32.totalorder %s33, 3
      %p182 = por %p180, %p181
      %p184 = scmp.ne.s32.totalorder %s169, %s183
      %p185 = scmp.eq.s32.totalorder %s33, 0
      %p186 = por %p184, %p185
      %s188 = sadd.s32 %s187, 1
      %p191 = scmp.eq.s32.totalorder %s27, 3
      %p192 = scmp.ne.s32.totalorder %s187, %s189
      %p193 = scmp.eq.s32.totalorder %s27, 0
      %p194 = por %p192, %p193
      %p195 = scmp.ne.s32.totalorder %s187, %s189
      %p196 = scmp.eq.s32.totalorder %s32, 3
      %p197 = por %p195, %p196
      %p198 = scmp.ne.s32.totalorder %s189, %s190
      %p199 = scmp.eq.s32.totalorder %s32, 0
      %p200 = por %p198, %p199
      %p201 = scmp.ne.s32.totalorder %s189, %s190
      %p202 = scmp.eq.s32.totalorder %s33, 3
      %p203 = por %p201, %p202
      %p205 = scmp.ne.s32.totalorder %s190, %s204
      %p206 = scmp.eq.s32.totalorder %s33, 0
      %p207 = por %p205, %p206
      %s209 = sadd.s32 %s208, 1
      %p212 = scmp.eq.s32.totalorder %s27, 3
      %p213 = scmp.ne.s32.totalorder %s208, %s210
      %p214 = scmp.eq.s32.totalorder %s27, 0
      %p215 = por %p213, %p214
      %p216 = scmp.ne.s32.totalorder %s208, %s210
      %p217 = scmp.eq.s32.totalorder %s32, 3
      %p218 = por %p216, %p217
      %p219 = scmp.ne.s32.totalorder %s210, %s211
      %p220 = scmp.eq.s32.totalorder %s32, 0
      %p221 = por %p219, %p220
      %p222 = scmp.ne.s32.totalorder %s210, %s211
      %p223 = scmp.eq.s32.totalorder %s33, 3
      %p224 = por %p222, %p223
      %p226 = scmp.ne.s32.totalorder %s211, %s225
      %p227 = scmp.eq.s32.totalorder %s33, 0
      %p228 = por %p226, %p227
      %s230 = sadd.s32 %s229, 1
      %p233 = scmp.eq.s32.totalorder %s27, 3
      %p234 = scmp.ne.s32.totalorder %s229, %s231
      %p235 = scmp.eq.s32.totalorder %s27, 0
      %p236 = por %p234, %p235
      %p237 = scmp.ne.s32.totalorder %s229, %s231
      %p238 = scmp.eq.s32.totalorder %s32, 3
      %p239 = por %p237, %p238
      %p240 = scmp.ne.s32.totalorder %s231, %s232
      %p241 = scmp.eq.s32.totalorder %s32, 0
      %p242 = por %p240, %p241
      %p243 = scmp.ne.s32.totalorder %s231, %s232
      %p244 = scmp.eq.s32.totalorder %s33, 3
      %p245 = por %p243, %p244
      %p247 = scmp.ne.s32.totalorder %s232, %s246
      %p248 = scmp.eq.s32.totalorder %s33, 0
      %p249 = por %p247, %p248
      %s251 = sadd.s32 %s250, 1
      %p254 = scmp.eq.s32.totalorder %s27, 3
      %p255 = scmp.ne.s32.totalorder %s250, %s252
      %p256 = scmp.eq.s32.totalorder %s27, 0
      %p257 = por %p255, %p256
      %p258 = scmp.ne.s32.totalorder %s250, %s252
      %p259 = scmp.eq.s32.totalorder %s32, 3
      %p260 = por %p258, %p259
      %p261 = scmp.ne.s32.totalorder %s252, %s253
      %p262 = scmp.eq.s32.totalorder %s32, 0
      %p263 = por %p261, %p262
      %p264 = scmp.ne.s32.totalorder %s252, %s253
      %p265 = scmp.eq.s32.totalorder %s33, 3
      %p266 = por %p264, %p265
      %p268 = scmp.ne.s32.totalorder %s253, %s267
      %p269 = scmp.eq.s32.totalorder %s33, 0
      %p270 = por %p268, %p269
      %s272 = sadd.s32 %s271, 1
      %p275 = scmp.eq.s32.totalorder %s27, 3
      %p276 = scmp.ne.s32.totalorder %s271, %s273
      %p277 = scmp.eq.s32.totalorder %s27, 0
      %p278 = por %p276, %p277
      %p279 = scmp.ne.s32.totalorder %s271, %s273
      %p280 = scmp.eq.s32.totalorder %s32, 3
      %p281 = por %p279, %p280
      %p282 = scmp.ne.s32.totalorder %s273, %s274
      %p283 = scmp.eq.s32.totalorder %s32, 0
      %p284 = por %p282, %p283
      %p285 = scmp.ne.s32.totalorder %s273, %s274
      %p286 = scmp.eq.s32.totalorder %s33, 3
      %p287 = por %p285, %p286
      %p289 = scmp.ne.s32.totalorder %s274, %s288
      %p290 = scmp.eq.s32.totalorder %s33, 0
      %p291 = por %p289, %p290
      %s293 = sadd.s32 %s292, 1
      %p296 = scmp.eq.s32.totalorder %s27, 3
      %p297 = scmp.ne.s32.totalorder %s292, %s294
      %p298 = scmp.eq.s32.totalorder %s27, 0
      %p299 = por %p297, %p298
      %p300 = scmp.ne.s32.totalorder %s292, %s294
      %p301 = scmp.eq.s32.totalorder %s32, 3
      %p302 = por %p300, %p301
      %p303 = scmp.ne.s32.totalorder %s294, %s295
      %p304 = scmp.eq.s32.totalorder %s32, 0
      %p305 = por %p303, %p304
      %p306 = scmp.ne.s32.totalorder %s294, %s295
      %p307 = scmp.eq.s32.totalorder %s33, 3
      %p308 = por %p306, %p307
      %p310 = scmp.ne.s32.totalorder %s295, %s309
      %p311 = scmp.eq.s32.totalorder %s33, 0
      %p312 = por %p310, %p311
      %s314 = sadd.s32 %s313, 1
      %p317 = scmp.eq.s32.totalorder %s27, 3
      %p318 = scmp.ne.s32.totalorder %s313, %s315
      %p319 = scmp.eq.s32.totalorder %s27, 0
      %p320 = por %p318, %p319
      %p321 = scmp.ne.s32.totalorder %s313, %s315
      %p322 = scmp.eq.s32.totalorder %s32, 3
      %p323 = por %p321, %p322
      %p324 = scmp.ne.s32.totalorder %s315, %s316
      %p325 = scmp.eq.s32.totalorder %s32, 0
      %p326 = por %p324, %p325
      %p327 = scmp.ne.s32.totalorder %s315, %s316
      %p328 = scmp.eq.s32.totalorder %s33, 3
      %p329 = por %p327, %p328
      %p331 = scmp.ne.s32.totalorder %s316, %s330
      %p332 = scmp.eq.s32.totalorder %s33, 0
      %p333 = por %p331, %p332
      %s335 = sadd.s32 %s334, 1
      %p338 = scmp.eq.s32.totalorder %s27, 3
      %p339 = scmp.ne.s32.totalorder %s334, %s336
      %p340 = scmp.eq.s32.totalorder %s27, 0
      %p341 = por %p339, %p340
      %p342 = scmp.ne.s32.totalorder %s334, %s336
      %p343 = scmp.eq.s32.totalorder %s32, 3
      %p344 = por %p342, %p343
      %p345 = scmp.ne.s32.totalorder %s336, %s337
      %p346 = scmp.eq.s32.totalorder %s32, 0
      %p347 = por %p345, %p346
      %p348 = scmp.ne.s32.totalorder %s336, %s337
      %p349 = scmp.eq.s32.totalorder %s33, 3
      %p350 = por %p348, %p349
      %p352 = scmp.ne.s32.totalorder %s337, %s351
      %p353 = scmp.eq.s32.totalorder %s33, 0
      %p354 = por %p352, %p353
      %s356 = sadd.s32 %s355, 1
      %p359 = scmp.eq.s32.totalorder %s27, 3
      %p360 = scmp.ne.s32.totalorder %s355, %s357
      %p361 = scmp.eq.s32.totalorder %s27, 0
      %p362 = por %p360, %p361
      %p363 = scmp.ne.s32.totalorder %s355, %s357
      %p364 = scmp.eq.s32.totalorder %s32, 3
      %p365 = por %p363, %p364
      %p366 = scmp.ne.s32.totalorder %s357, %s358
      %p367 = scmp.eq.s32.totalorder %s32, 0
      %p368 = por %p366, %p367
      %p369 = scmp.ne.s32.totalorder %s357, %s358
      %p370 = scmp.eq.s32.totalorder %s33, 3
      %p371 = por %p369, %p370
      %p373 = scmp.ne.s32.totalorder %s358, %s372
      %p374 = scmp.eq.s32.totalorder %s33, 0
      %p375 = por %p373, %p374
      %s377 = sadd.s32 %s376, 1
      %p380 = scmp.eq.s32.totalorder %s27, 3
      %p381 = scmp.ne.s32.totalorder %s376, %s378
      %p382 = scmp.eq.s32.totalorder %s27, 0
      %p383 = por %p381, %p382
      %p384 = scmp.ne.s32.totalorder %s376, %s378
      %p385 = scmp.eq.s32.totalorder %s32, 3
      %p386 = por %p384, %p385
      %p387 = scmp.ne.s32.totalorder %s378, %s379
      %p388 = scmp.eq.s32.totalorder %s32, 0
      %p389 = por %p387, %p388
      %p390 = scmp.ne.s32.totalorder %s378, %s379
      %p391 = scmp.eq.s32.totalorder %s33, 3
      %p392 = por %p390, %p391
      %p394 = scmp.ne.s32.totalorder %s379, %s393
      %p395 = scmp.eq.s32.totalorder %s33, 0
      %p396 = por %p394, %p395
      %s398 = sadd.s32 %s397, 1
      %p401 = scmp.eq.s32.totalorder %s27, 3
      %p402 = scmp.ne.s32.totalorder %s397, %s399
      %p403 = scmp.eq.s32.totalorder %s27, 0
      %p404 = por %p402, %p403
      %p405 = scmp.ne.s32.totalorder %s397, %s399
      %p406 = scmp.eq.s32.totalorder %s32, 3
      %p407 = por %p405, %p406
      %p408 = scmp.ne.s32.totalorder %s399, %s400
      %p409 = scmp.eq.s32.totalorder %s32, 0
      %p410 = por %p408, %p409
      %p411 = scmp.ne.s32.totalorder %s399, %s400
      %p412 = scmp.eq.s32.totalorder %s33, 3
      %p413 = por %p411, %p412
      %p415 = scmp.ne.s32.totalorder %s400, %s414
      %p416 = scmp.eq.s32.totalorder %s33, 0
      %p417 = por %p415, %p416
      %s419 = sadd.s32 %s418, 1
      %p422 = scmp.eq.s32.totalorder %s27, 3
      %p423 = scmp.ne.s32.totalorder %s418, %s420
      %p424 = scmp.eq.s32.totalorder %s27, 0
      %p425 = por %p423, %p424
      %p426 = scmp.ne.s32.totalorder %s418, %s420
      %p427 = scmp.eq.s32.totalorder %s32, 3
      %p428 = por %p426, %p427
      %p429 = scmp.ne.s32.totalorder %s420, %s421
      %p430 = scmp.eq.s32.totalorder %s32, 0
      %p431 = por %p429, %p430
      %p432 = scmp.ne.s32.totalorder %s420, %s421
      %p433 = scmp.eq.s32.totalorder %s33, 3
      %p434 = por %p432, %p433
      %p436 = scmp.ne.s32.totalorder %s421, %s435
      %p437 = scmp.eq.s32.totalorder %s33, 0
      %p438 = por %p436, %p437
      %s440 = sadd.s32 %s439, 1
      %p443 = scmp.eq.s32.totalorder %s27, 3
      %p444 = scmp.ne.s32.totalorder %s439, %s441
      %p445 = scmp.eq.s32.totalorder %s27, 0
      %p446 = por %p444, %p445
      %p447 = scmp.ne.s32.totalorder %s439, %s441
      %p448 = scmp.eq.s32.totalorder %s32, 3
      %p449 = por %p447, %p448
      %p450 = scmp.ne.s32.totalorder %s441, %s442
      %p451 = scmp.eq.s32.totalorder %s32, 0
      %p452 = por %p450, %p451
      %p453 = scmp.ne.s32.totalorder %s441, %s442
      %p454 = scmp.eq.s32.totalorder %s33, 3
      %p455 = por %p453, %p454
      %p457 = scmp.ne.s32.totalorder %s442, %s456
      %p458 = scmp.eq.s32.totalorder %s33, 0
      %p459 = por %p457, %p458
      %s461 = sadd.s32 %s460, 1
      %p464 = scmp.eq.s32.totalorder %s27, 3
      %p465 = scmp.ne.s32.totalorder %s460, %s462
      %p466 = scmp.eq.s32.totalorder %s27, 0
      %p467 = por %p465, %p466
      %p468 = scmp.ne.s32.totalorder %s460, %s462
      %p469 = scmp.eq.s32.totalorder %s32, 3
      %p470 = por %p468, %p469
      %p471 = scmp.ne.s32.totalorder %s462, %s463
      %p472 = scmp.eq.s32.totalorder %s32, 0
      %p473 = por %p471, %p472
      %p474 = scmp.ne.s32.totalorder %s462, %s463
      %p475 = scmp.eq.s32.totalorder %s33, 3
      %p476 = por %p474, %p475
      %p478 = scmp.ne.s32.totalorder %s463, %s477
      %p479 = scmp.eq.s32.totalorder %s33, 0
      %p480 = por %p478, %p479
      %p481 = scmp.le.s32.totalorder 1, %s27
      %p482 = scmp.lt.s32.totalorder %s27, 5
      %p483 = pnand %p481, %p482
      %p484 = pneg %p483
      // Predicated region
      $region9: #{cfm_decoder_forward.1} parent=5 // pred_check
        _
      $region10: #{cfm_decoder_forward.1} parent=5 // pred_check_branch
        %486 = sbr.rel (%p483) target = $region12
      $region11: #{cfm_decoder_forward.1} parent=5 // pred_region
        %s487 = ssub.s32 %s27, 1
        // Predicated region
        $region13: #{cfm_decoder_forward.1} parent=11 // pred_check
          %p488 = pneg %p48
        $region14: #{cfm_decoder_forward.1} parent=11 // pred_check_branch
          %490 = sbr.rel (%p488) target = $region16
        $region15: #{cfm_decoder_forward.1} parent=11 // pred_region
          %s492 = ssub.s32 16, 16
          %493 = vsyncadd [#allocation3], %s492
          %s495 = sshll.u32 %s0, 4
          %s496 = int_to_ptr.vmem [resolvable:$true] %s495
          %498 = dma.vmem_to_smem %s496, 16, [#allocation2], [#allocation3]
        $region16: #{cfm_decoder_forward.1} parent=11 // pred_fallthru
          _
        // Predicated region
        $region17: #{cfm_decoder_forward.1} parent=11 // pred_check
          %p499 = pneg %p69
        $region18: #{cfm_decoder_forward.1} parent=11 // pred_check_branch
          %501 = sbr.rel (%p499) target = $region20
        $region19: #{cfm_decoder_forward.1} parent=11 // pred_region
          _
        $region20: #{cfm_decoder_forward.1} parent=11 // pred_fallthru
          _
        // Predicated region
        $region21: #{cfm_decoder_forward.1} parent=11 // pred_check
          %p502 = pneg %p116
        $region22: #{cfm_decoder_forward.1} parent=11 // pred_check_branch
          %504 = sbr.rel (%p502) target = $region24
        $region23: #{cfm_decoder_forward.1} parent=11 // pred_region
          _
        $region24: #{cfm_decoder_forward.1} parent=11 // pred_fallthru
          _
        // Predicated region
        $region25: #{cfm_decoder_forward.1} parent=11 // pred_check
          %p505 = pneg %p137
        $region26: #{cfm_decoder_forward.1} parent=11 // pred_check_branch
          %507 = sbr.rel (%p505) target = $region28
        $region27: #{cfm_decoder_forward.1} parent=11 // pred_region
          _
        $region28: #{cfm_decoder_forward.1} parent=11 // pred_fallthru
          _
        // Predicated region
        $region29: #{cfm_decoder_forward.1} parent=11 // pred_check
          %p508 = pneg %p158
        $region30: #{cfm_decoder_forward.1} parent=11 // pred_check_branch
          %510 = sbr.rel (%p508) target = $region32
        $region31: #{cfm_decoder_forward.1} parent=11 // pred_region
          _
        $region32: #{cfm_decoder_forward.1} parent=11 // pred_fallthru
          _
        // Predicated region
        $region33: #{cfm_decoder_forward.1} parent=11 // pred_check
          %p511 = pneg %p179
        $region34: #{cfm_decoder_forward.1} parent=11 // pred_check_branch
          %513 = sbr.rel (%p511) target = $region36
        $region35: #{cfm_decoder_forward.1} parent=11 // pred_region
          _
        $region36: #{cfm_decoder_forward.1} parent=11 // pred_fallthru
          _
        // Predicated region
        $region37: #{cfm_decoder_forward.1} parent=11 // pred_check
          %p514 = pneg %p200
        $region38: #{cfm_decoder_forward.1} parent=11 // pred_check_branch
          %516 = sbr.rel (%p514) target = $region40
        $region39: #{cfm_decoder_forward.1} parent=11 // pred_region
          _
        $region40: #{cfm_decoder_forward.1} parent=11 // pred_fallthru
          _
        // Predicated region
        $region41: #{cfm_decoder_forward.1} parent=11 // pred_check
          %p517 = pneg %p221
        $region42: #{cfm_decoder_forward.1} parent=11 // pred_check_branch
          %519 = sbr.rel (%p517) target = $region44
        $region43: #{cfm_decoder_forward.1} parent=11 // pred_region
          _
        $region44: #{cfm_decoder_forward.1} parent=11 // pred_fallthru
          _
        // Predicated region
        $region45: #{cfm_decoder_forward.1} parent=11 // pred_check
          %p520 = pneg %p242
        $region46: #{cfm_decoder_forward.1} parent=11 // pred_check_branch
          %522 = sbr.rel (%p520) target = $region48
        $region47: #{cfm_decoder_forward.1} parent=11 // pred_region
          _
        $region48: #{cfm_decoder_forward.1} parent=11 // pred_fallthru
          _
        // Predicated region
        $region49: #{cfm_decoder_forward.1} parent=11 // pred_check
          %p523 = pneg %p263
        $region50: #{cfm_decoder_forward.1} parent=11 // pred_check_branch
          %525 = sbr.rel (%p523) target = $region52
        $region51: #{cfm_decoder_forward.1} parent=11 // pred_region
          _
        $region52: #{cfm_decoder_forward.1} parent=11 // pred_fallthru
          _
        // Predicated region
        $region53: #{cfm_decoder_forward.1} parent=11 // pred_check
          %p526 = pneg %p284
        $region54: #{cfm_decoder_forward.1} parent=11 // pred_check_branch
          %528 = sbr.rel (%p526) target = $region56
        $region55: #{cfm_decoder_forward.1} parent=11 // pred_region
          _
        $region56: #{cfm_decoder_forward.1} parent=11 // pred_fallthru
          _
        // Predicated region
        $region57: #{cfm_decoder_forward.1} parent=11 // pred_check
          %p529 = pneg %p305
        $region58: #{cfm_decoder_forward.1} parent=11 // pred_check_branch
          %531 = sbr.rel (%p529) target = $region60
        $region59: #{cfm_decoder_forward.1} parent=11 // pred_region
          _
        $region60: #{cfm_decoder_forward.1} parent=11 // pred_fallthru
          _
        // Predicated region
        $region61: #{cfm_decoder_forward.1} parent=11 // pred_check
          %p532 = pneg %p326
        $region62: #{cfm_decoder_forward.1} parent=11 // pred_check_branch
          %534 = sbr.rel (%p532) target = $region64
        $region63: #{cfm_decoder_forward.1} parent=11 // pred_region
          _
        $region64: #{cfm_decoder_forward.1} parent=11 // pred_fallthru
          _
        // Predicated region
        $region65: #{cfm_decoder_forward.1} parent=11 // pred_check
          %p535 = pneg %p347
        $region66: #{cfm_decoder_forward.1} parent=11 // pred_check_branch
          %537 = sbr.rel (%p535) target = $region68
        $region67: #{cfm_decoder_forward.1} parent=11 // pred_region
          _
        $region68: #{cfm_decoder_forward.1} parent=11 // pred_fallthru
          _
        // Predicated region
        $region69: #{cfm_decoder_forward.1} parent=11 // pred_check
          %p538 = pneg %p368
        $region70: #{cfm_decoder_forward.1} parent=11 // pred_check_branch
          %540 = sbr.rel (%p538) target = $region72
        $region71: #{cfm_decoder_forward.1} parent=11 // pred_region
          _
        $region72: #{cfm_decoder_forward.1} parent=11 // pred_fallthru
          _
        // Predicated region
        $region73: #{cfm_decoder_forward.1} parent=11 // pred_check
          %p541 = pneg %p389
        $region74: #{cfm_decoder_forward.1} parent=11 // pred_check_branch
          %543 = sbr.rel (%p541) target = $region76
        $region75: #{cfm_decoder_forward.1} parent=11 // pred_region
          _
        $region76: #{cfm_decoder_forward.1} parent=11 // pred_fallthru
          _
        // Predicated region
        $region77: #{cfm_decoder_forward.1} parent=11 // pred_check
          %p544 = pneg %p410
        $region78: #{cfm_decoder_forward.1} parent=11 // pred_check_branch
          %546 = sbr.rel (%p544) target = $region80
        $region79: #{cfm_decoder_forward.1} parent=11 // pred_region
          _
        $region80: #{cfm_decoder_forward.1} parent=11 // pred_fallthru
          _
        // Predicated region
        $region81: #{cfm_decoder_forward.1} parent=11 // pred_check
          %p547 = pneg %p431
        $region82: #{cfm_decoder_forward.1} parent=11 // pred_check_branch
          %549 = sbr.rel (%p547) target = $region84
        $region83: #{cfm_decoder_forward.1} parent=11 // pred_region
          _
        $region84: #{cfm_decoder_forward.1} parent=11 // pred_fallthru
          _
        // Predicated region
        $region85: #{cfm_decoder_forward.1} parent=11 // pred_check
          %p550 = pneg %p452
        $region86: #{cfm_decoder_forward.1} parent=11 // pred_check_branch
          %552 = sbr.rel (%p550) target = $region88
        $region87: #{cfm_decoder_forward.1} parent=11 // pred_region
          _
        $region88: #{cfm_decoder_forward.1} parent=11 // pred_fallthru
          _
      $region12: #{cfm_decoder_forward.1} parent=5 // pred_fallthru
        _
      %p553 = scmp.lt.s32.totalorder %s27, 4
      // Predicated region
      $region89: #{cfm_decoder_forward.1} parent=5 // pred_check
        %p554 = pneg %p553
      $region90: #{cfm_decoder_forward.1} parent=5 // pred_check_branch
        %556 = sbr.rel (%p554) target = $region92
      $region91: #{cfm_decoder_forward.1} parent=5 // pred_region
        // Predicated region
        $region93: #{cfm_decoder_forward.1} parent=91 // pred_check
          %p557 = pneg %p89
        $region94: #{cfm_decoder_forward.1} parent=91 // pred_check_branch
          %559 = sbr.rel (%p557) target = $region96
        $region95: #{cfm_decoder_forward.1} parent=91 // pred_region
          %p560 = scmp.lt.s32.totalorder %s27, 3
          %s561 = scalar_select %p560, %s27, 3
          %s562 = smul.addr %s561, 4
          %s563 = smul.addr %s562, 8
          %s564 = scalar_lea.vmem %s2, %s563
        $region96: #{cfm_decoder_forward.1} parent=91 // pred_fallthru
          _
      $region92: #{cfm_decoder_forward.1} parent=5 // pred_fallthru
        _
      %p565 = scmp.le.s32.totalorder 1, %s27
      %p566 = scmp.lt.s32.totalorder %s27, 5
      %p567 = pnand %p565, %p566
      %p568 = pneg %p567
      // Predicated region
      $region97: #{cfm_decoder_forward.1} parent=5 // pred_check
        _
      $region98: #{cfm_decoder_forward.1} parent=5 // pred_check_branch
        %570 = sbr.rel (%p567) target = $region100
      $region99: #{cfm_decoder_forward.1} parent=5 // pred_region
        %s571 = ssub.s32 %s27, 1
        // Predicated region
        $region101: #{cfm_decoder_forward.1} parent=99 // pred_check
          %p572 = pneg %p48
        $region102: #{cfm_decoder_forward.1} parent=99 // pred_check_branch
          %574 = sbr.rel (%p572) target = $region104
        $region103: #{cfm_decoder_forward.1} parent=99 // pred_region
          %575 = dma.done [#allocation3], 16
        $region104: #{cfm_decoder_forward.1} parent=99 // pred_fallthru
          _
        %576 = sfence
        %p577 = pneg %p48
        %p578 = pneg %p45
        %p579 = pneg %p69
        %p580 = pneg %p66
        %p581 = scmp.lt.s32.totalorder %s32, 3
        %s582 = scalar_select %p581, %s32, 3
        %s583 = smul.addr %s582, 4
        %s584 = smul.addr %s583, 8
        %s585 = scalar_lea.vmem %s2, %s584
        %p586 = pneg %p95
        %p587 = pneg %p92
        %p588 = pneg %p116
        %p589 = pneg %p113
        %p590 = pneg %p137
        %p591 = pneg %p134
        %p592 = pneg %p158
        %p593 = pneg %p155
        %p594 = pneg %p179
        %p595 = pneg %p176
        %p596 = pneg %p200
        %p597 = pneg %p197
        %p598 = pneg %p221
        %p599 = pneg %p218
        %p600 = pneg %p242
        %p601 = pneg %p239
        %p602 = pneg %p263
        %p603 = pneg %p260
        %p604 = pneg %p284
        %p605 = pneg %p281
        %p606 = pneg %p305
        %p607 = pneg %p302
        %p608 = pneg %p326
        %p609 = pneg %p323
        %p610 = pneg %p347
        %p611 = pneg %p344
        %p612 = pneg %p368
        %p613 = pneg %p365
        %p614 = pneg %p389
        %p615 = pneg %p386
        %p616 = pneg %p410
        %p617 = pneg %p407
        %p618 = pneg %p431
        %p619 = pneg %p428
        %p620 = pneg %p452
        %p621 = pneg %p449
        %p622 = pneg %p473
        %p623 = pneg %p470
        %p624 = scmp.lt.s32.totalorder %s32, 3
        %s625 = scalar_select %p624, %s32, 3
        %s626 = smul.addr %s625, 4
        %s627 = smul.addr %s626, 8
        %s628 = scalar_lea.vmem %s2, %s627
        %p630 = scmp.eq.s32.totalorder %s32, 0
        // Predicated region
        $region105: #{cfm_decoder_forward.1} parent=99 // pred_check
          %p631 = pneg %p630
        $region106: #{cfm_decoder_forward.1} parent=99 // pred_check_branch
          %633 = sbr.rel (%p631) target = $region108
        $region107: #{cfm_decoder_forward.1} parent=99 // pred_region
          %v634 = vld [vmem:[%s1] sm:$0xff]
          %v635 = vld [vmem:[%s1 + $0x8] sm:$0xff]
          %v636 = vld [vmem:[%s1 + $0x10] sm:$0xff]
          %v637 = vld [vmem:[%s1 + $0x18] sm:$0xff]
          %638 = vst [vmem:[%s20] sm:$0xff] %v634
          %639 = vst [vmem:[%s20 + $0x8] sm:$0xff] %v635
          %640 = vst [vmem:[%s20 + $0x10] sm:$0xff] %v636
          %641 = vst [vmem:[%s20 + $0x18] sm:$0xff] %v637
        $region108: #{cfm_decoder_forward.1} parent=99 // pred_fallthru
          _
        %v642 = vld [vmem:[%s20] sm:$0xff]
        %v643 = vld [vmem:[%s20 + $0x8] sm:$0xff]
        %v644 = vld [vmem:[%s20 + $0x10] sm:$0xff]
        %v645 = vld [vmem:[%s20 + $0x18] sm:$0xff]
        %v646 = vld [vmem:[%s628] sm:$0xff]
        %v647 = vld [vmem:[%s628 + $0x8] sm:$0xff]
        %v648 = vld [vmem:[%s628 + $0x10] sm:$0xff]
        %v649 = vld [vmem:[%s628 + $0x18] sm:$0xff]
        %v650 = vld [vmem:[%s3] sm:$0xff]
        %v651 = vld [vmem:[%s3 + $0x8] sm:$0xff]
        %v652 = vld [vmem:[%s3 + $0x10] sm:$0xff]
        %v653 = vld [vmem:[%s3 + $0x18] sm:$0xff]
        %v654 = vld [vmem:[%s4] sm:$0x1]
        %v655 = vld [vmem:[%s4 + $0x1] sm:$0x1]
        %v656 = vld [vmem:[%s4 + $0x2] sm:$0x1]
        %v657 = vld [vmem:[%s4 + $0x3] sm:$0x1]
        %v658 = vpack.c.bf16 %v643, %v642
        %v659 = vpack.c.bf16 %v645, %v644
        %v660 = vld [vmem:[%s5] sm:$0xf]
        %v661 = vld [vmem:[%s5 + $0x4] sm:$0xf]
        %v662 = vld [vmem:[%s5 + $0x8] sm:$0xf]
        %v663 = vld [vmem:[%s5 + $0xc] sm:$0xf]
        %v664 = vld [vmem:[%s5 + $0x10] sm:$0xf]
        %v665 = vld [vmem:[%s5 + $0x14] sm:$0xf]
        %v666 = vld [vmem:[%s5 + $0x18] sm:$0xf]
        %v667 = vld [vmem:[%s5 + $0x1c] sm:$0xf]
        %v668 = vld [vmem:[%s5 + $0x20] sm:$0xf]
        %v669 = vld [vmem:[%s5 + $0x24] sm:$0xf]
        %v670 = vld [vmem:[%s5 + $0x28] sm:$0xf]
        %v671 = vld [vmem:[%s5 + $0x2c] sm:$0xf]
        %v672 = vld [vmem:[%s5 + $0x30] sm:$0xf]
        %v673 = vld [vmem:[%s5 + $0x34] sm:$0xf]
        %v674 = vld [vmem:[%s5 + $0x38] sm:$0xf]
        %v675 = vld [vmem:[%s5 + $0x3c] sm:$0xf]
        %v692 = vunpack.c.l.b16 %v660
        %v693 = vunpack.c.l.b16 %v661
        %v694 = vunpack.c.l.b16 %v662
        %v695 = vunpack.c.l.b16 %v663
        %v696 = vunpack.c.l.b16 %v664
        %v697 = vunpack.c.l.b16 %v665
        %v698 = vunpack.c.l.b16 %v666
        %v699 = vunpack.c.l.b16 %v667
        %v700 = vunpack.c.l.b16 %v668
        %v701 = vunpack.c.l.b16 %v669
        %v702 = vunpack.c.l.b16 %v670
        %v703 = vunpack.c.l.b16 %v671
        %v704 = vunpack.c.l.b16 %v672
        %v705 = vunpack.c.l.b16 %v673
        %v706 = vunpack.c.l.b16 %v674
        %v707 = vunpack.c.l.b16 %v675
        %v708 = vpack.c.b16 %v693, %v692
        %v709 = vpack.c.b16 %v695, %v694
        %v710 = vpack.c.b16 %v697, %v696
        %v711 = vpack.c.b16 %v699, %v698
        %v712 = vpack.c.b16 %v701, %v700
        %v713 = vpack.c.b16 %v703, %v702
        %v714 = vpack.c.b16 %v705, %v704
        %v715 = vpack.c.b16 %v707, %v706
        %724 = vmatprep.subr.bf16.mxu0 0
        %725 = vmatpush1.bf16.msra.mxu0 %v708
        %726 = vmatprep.subr.bf16.mxu0 0
        %727 = vmatpush1.bf16.msra.mxu0 %v709
        %728 = vmatprep.subr.bf16.mxu0 0
        %729 = vmatpush1.bf16.msra.mxu0 %v710
        %730 = vmatprep.subr.bf16.mxu0 0
        %731 = vmatpush1.bf16.msra.mxu0 %v711
        %732 = vmatprep.subr.bf16.mxu0 0
        %733 = vmatpush1.bf16.msra.mxu0 %v712
        %734 = vmatprep.subr.bf16.mxu0 0
        %735 = vmatpush1.bf16.msra.mxu0 %v713
        %736 = vmatprep.subr.bf16.mxu0 0
        %737 = vmatpush1.bf16.msra.mxu0 %v714
        %738 = vmatprep.subr.bf16.mxu0 0
        %739 = vmatpush1.bf16.msra.mxu0 %v715
        %740 = vmatprep.subr.bf16.mxu0 0
        %741 = vmatpush1.bf16.msra.mxu0 0
        %742 = vmatprep.subr.bf16.mxu0 0
        %743 = vmatpush1.bf16.msra.mxu0 0
        %744 = vmatprep.subr.bf16.mxu0 0
        %745 = vmatpush1.bf16.msra.mxu0 0
        %746 = vmatprep.subr.bf16.mxu0 0
        %747 = vmatpush1.bf16.msra.mxu0 0
        %748 = vmatprep.subr.bf16.mxu0 0
        %749 = vmatpush1.bf16.msra.mxu0 0
        %750 = vmatprep.subr.bf16.mxu0 0
        %751 = vmatpush1.bf16.msra.mxu0 0
        %752 = vmatprep.subr.bf16.mxu0 0
        %753 = vmatpush1.bf16.msra.mxu0 0
        %754 = vmatprep.subr.bf16.mxu0 0
        %755 = vmatpush1.bf16.msra.mxu0 0
        %756 = vmatprep.mubr.bf16.mxu0 0
        %757 = vmatmul.mubr.bf16.gmra.mrb[0].mxu0 %v658
        %v758 = vpop.f32.mrb[0].mxu0
        %v759 = vadd.f32 %v646, %v758
        %v760 = vpop.f32.mrb[0].mxu0
        %v761 = vpop.f32.mrb[0].mxu0
        %v762 = vadd.f32 %v647, %v761
        %v763 = vpop.f32.mrb[0].mxu0
        %764 = vmatprep.mubr.bf16.mxu0 0
        %765 = vmatmul.mubr.bf16.gmra.mrb[0].mxu0 %v659
        %v766 = vpop.f32.mrb[0].mxu0
        %v767 = vadd.f32 %v648, %v766
        %v768 = vpop.f32.mrb[0].mxu0
        %v769 = vpop.f32.mrb[0].mxu0
        %v770 = vadd.f32 %v649, %v769
        %v771 = vpop.f32.mrb[0].mxu0
        %772 = vdwg.mxu0
        %v773 = vld [vmem:[%s6] sm:$0x1]
        %v774 = vld [vmem:[%s7] sm:$0x1]
        %vm775 = vcmask 261120
        %v776 = vsel %vm775, %v759, 0.0
        %777 = vadd.xlane.f32.xlu0 %v776
        %v778 = vpop.xlane.xlu0 %777
        %v779 = vsel %vm775, %v762, 0.0
        %780 = vadd.xlane.f32.xlu0 %v779
        %v781 = vpop.xlane.xlu0 %780
        %v782 = vsel %vm775, %v767, 0.0
        %783 = vadd.xlane.f32.xlu0 %v782
        %v784 = vpop.xlane.xlu0 %783
        %v785 = vsel %vm775, %v770, 0.0
        %786 = vadd.xlane.f32.xlu0 %v785
        %v787 = vpop.xlane.xlu0 %786
        %v788 = vrcp.pop 32.0
        %v789 = vmul.f32 %v778, %v788
        %v790 = vmul.f32 %v781, %v788
        %v791 = vmul.f32 %v784, %v788
        %v792 = vmul.f32 %v787, %v788
        %v793 = vsub.f32 %v759, %v789
        %v794 = vsub.f32 %v762, %v790
        %v795 = vsub.f32 %v767, %v791
        %v796 = vsub.f32 %v770, %v792
        %v797 = vmul.f32 %v793, %v793
        %v798 = vmul.f32 %v794, %v794
        %v799 = vmul.f32 %v795, %v795
        %v800 = vmul.f32 %v796, %v796
        %v801 = vsel %vm775, %v797, 0.0
        %802 = vadd.xlane.f32.xlu0 %v801
        %v803 = vpop.xlane.xlu0 %802
        %v804 = vsel %vm775, %v798, 0.0
        %805 = vadd.xlane.f32.xlu0 %v804
        %v806 = vpop.xlane.xlu0 %805
        %v807 = vsel %vm775, %v799, 0.0
        %808 = vadd.xlane.f32.xlu0 %v807
        %v809 = vpop.xlane.xlu0 %808
        %v810 = vsel %vm775, %v800, 0.0
        %811 = vadd.xlane.f32.xlu0 %v810
        %v812 = vpop.xlane.xlu0 %811
        %v813 = vmul.f32 %v803, %v788
        %v814 = vmul.f32 %v806, %v788
        %v815 = vmul.f32 %v809, %v788
        %v816 = vmul.f32 %v812, %v788
        %v817 = vadd.f32 %v813, 1e-05
        %v818 = vadd.f32 %v814, 1e-05
        %v819 = vadd.f32 %v815, 1e-05
        %v820 = vadd.f32 %v816, 1e-05
        %v821 = vrsqrt.pop %v817
        %v822 = vrsqrt.pop %v818
        %v823 = vrsqrt.pop %v819
        %v824 = vrsqrt.pop %v820
        %v825 = vmul.f32 %v793, %v821
        %v826 = vmul.f32 %v794, %v822
        %v827 = vmul.f32 %v795, %v823
        %v828 = vmul.f32 %v796, %v824
        %v830 = vlaneseq
        %v831 = vshrl.u32 %v830, 7
        %v832 = vsub.s32 0, %v831
        %v833 = vrot.slane %v773, %v832
        %v835 = vmul.f32 %v825, %v833
        %v836 = vmul.f32 %v826, %v833
        %v837 = vmul.f32 %v827, %v833
        %v838 = vmul.f32 %v828, %v833
        %v840 = vlaneseq
        %v841 = vshrl.u32 %v840, 7
        %v842 = vsub.s32 0, %v841
        %v843 = vrot.slane %v774, %v842
        %v845 = vadd.f32 %v835, %v843
        %v846 = vadd.f32 %v836, %v843
        %v847 = vadd.f32 %v837, %v843
        %v848 = vadd.f32 %v838, %v843
        %v849 = vpack.c.bf16 %v846, %v845
        %v850 = vpack.c.bf16 %v848, %v847
        %v851 = vld [vmem:[%s8] sm:$0xf]
        %v852 = vld [vmem:[%s8 + $0x4] sm:$0xf]
        %v853 = vld [vmem:[%s8 + $0x8] sm:$0xf]
        %v854 = vld [vmem:[%s8 + $0xc] sm:$0xf]
        %v855 = vld [vmem:[%s9] sm:$0x1]
        %v857 = vlaneseq
        %v858 = vshrl.u32 %v857, 7
        %v859 = vsub.s32 0, %v858
        %v860 = vrot.slane %v855, %v859
        %v866 = vunpack.c.l.b16 %v851
        %v867 = vunpack.c.l.b16 %v852
        %v868 = vunpack.c.l.b16 %v853
        %v869 = vunpack.c.l.b16 %v854
        %v870 = vpack.c.b16 %v867, %v866
        %v871 = vpack.c.b16 %v869, %v868
        %v875 = vsel %vm775, %v849, 0
        %v878 = vsel %vm775, %v850, 0
        %880 = vmatprep.subr.bf16.mxu0 0
        %881 = vmatpush1.bf16.msra.mxu0 %v870
        %882 = vmatprep.subr.bf16.mxu0 0
        %883 = vmatpush1.bf16.msra.mxu0 %v871
        %884 = vmatprep.subr.bf16.mxu0 0
        %885 = vmatpush1.bf16.msra.mxu0 0
        %886 = vmatprep.subr.bf16.mxu0 0
        %887 = vmatpush1.bf16.msra.mxu0 0
        %888 = vmatprep.subr.bf16.mxu0 0
        %889 = vmatpush1.bf16.msra.mxu0 0
        %890 = vmatprep.subr.bf16.mxu0 0
        %891 = vmatpush1.bf16.msra.mxu0 0
        %892 = vmatprep.subr.bf16.mxu0 0
        %893 = vmatpush1.bf16.msra.mxu0 0
        %894 = vmatprep.subr.bf16.mxu0 0
        %895 = vmatpush1.bf16.msra.mxu0 0
        %896 = vmatprep.subr.bf16.mxu0 0
        %897 = vmatpush1.bf16.msra.mxu0 0
        %898 = vmatprep.subr.bf16.mxu0 0
        %899 = vmatpush1.bf16.msra.mxu0 0
        %900 = vmatprep.subr.bf16.mxu0 0
        %901 = vmatpush1.bf16.msra.mxu0 0
        %902 = vmatprep.subr.bf16.mxu0 0
        %903 = vmatpush1.bf16.msra.mxu0 0
        %904 = vmatprep.subr.bf16.mxu0 0
        %905 = vmatpush1.bf16.msra.mxu0 0
        %906 = vmatprep.subr.bf16.mxu0 0
        %907 = vmatpush1.bf16.msra.mxu0 0
        %908 = vmatprep.subr.bf16.mxu0 0
        %909 = vmatpush1.bf16.msra.mxu0 0
        %910 = vmatprep.subr.bf16.mxu0 0
        %911 = vmatpush1.bf16.msra.mxu0 0
        %912 = vmatprep.mubr.bf16.mxu0 0
        %913 = vmatmul.mubr.bf16.gmra.mrb[0].mxu0 %v875
        %v914 = vpop.f32.mrb[0].mxu0
        %v915 = vadd.f32 %v860, %v914
        %v916 = vpop.f32.mrb[0].mxu0
        %v917 = vpop.f32.mrb[0].mxu0
        %v918 = vadd.f32 %v860, %v917
        %v919 = vpop.f32.mrb[0].mxu0
        %920 = vmatprep.mubr.bf16.mxu0 0
        %921 = vmatmul.mubr.bf16.gmra.mrb[0].mxu0 %v878
        %v922 = vpop.f32.mrb[0].mxu0
        %v923 = vadd.f32 %v860, %v922
        %v924 = vpop.f32.mrb[0].mxu0
        %v925 = vpop.f32.mrb[0].mxu0
        %v926 = vadd.f32 %v860, %v925
        %v927 = vpop.f32.mrb[0].mxu0
        %928 = vdwg.mxu0
        %933 = vrot.lane.b32.xlu0 %v915, 112
        %v934 = vpop.permute.xlu0 %933
        %935 = vrot.lane.b32.xlu0 %v918, 112
        %v936 = vpop.permute.xlu0 %935
        %937 = vrot.lane.b32.xlu0 %v923, 112
        %v938 = vpop.permute.xlu0 %937
        %939 = vrot.lane.b32.xlu0 %v926, 112
        %v940 = vpop.permute.xlu0 %939
        %v945 = vpack.c.bf16 %v918, %v915
        %v946 = vpack.c.bf16 %v926, %v923
        %v947 = vpack.c.bf16 %v936, %v934
        %v948 = vpack.c.bf16 %v940, %v938
        %950 = vrot.lane.b32.xlu0 %v945, 96
        %v951 = vpop.permute.xlu0 %950
        %vm952 = vcmask 130048
        %v954 = vsel %vm952, %v945, 0
        %v957 = vsel %vm952, %v951, 0
        %959 = vmatprep.subr.bf16.mxu0 0
        %960 = vmatpush1.bf16.xpose.msra.mxu0 %v957
        %961 = vmatprep.subr.bf16.mxu0 0
        %962 = vmatpush1.bf16.xpose.msra.mxu0 0
        %963 = vmatprep.subr.bf16.mxu0 0
        %964 = vmatpush1.bf16.xpose.msra.mxu0 0
        %965 = vmatprep.subr.bf16.mxu0 0
        %966 = vmatpush1.bf16.xpose.msra.mxu0 0
        %967 = vmatprep.subr.bf16.mxu0 0
        %968 = vmatpush1.bf16.xpose.msra.mxu0 0
        %969 = vmatprep.subr.bf16.mxu0 0
        %970 = vmatpush1.bf16.xpose.msra.mxu0 0
        %971 = vmatprep.subr.bf16.mxu0 0
        %972 = vmatpush1.bf16.xpose.msra.mxu0 0
        %973 = vmatprep.subr.bf16.mxu0 0
        %974 = vmatpush1.bf16.xpose.msra.mxu0 0
        %975 = vmatprep.subr.bf16.mxu0 0
        %976 = vmatpush1.bf16.xpose.msra.mxu0 0
        %977 = vmatprep.subr.bf16.mxu0 0
        %978 = vmatpush1.bf16.xpose.msra.mxu0 0
        %979 = vmatprep.subr.bf16.mxu0 0
        %980 = vmatpush1.bf16.xpose.msra.mxu0 0
        %981 = vmatprep.subr.bf16.mxu0 0
        %982 = vmatpush1.bf16.xpose.msra.mxu0 0
        %983 = vmatprep.subr.bf16.mxu0 0
        %984 = vmatpush1.bf16.xpose.msra.mxu0 0
        %985 = vmatprep.subr.bf16.mxu0 0
        %986 = vmatpush1.bf16.xpose.msra.mxu0 0
        %987 = vmatprep.subr.bf16.mxu0 0
        %988 = vmatpush1.bf16.xpose.msra.mxu0 0
        %989 = vmatprep.subr.bf16.mxu0 0
        %990 = vmatpush1.bf16.xpose.msra.mxu0 0
        %991 = vmatprep.mubr.bf16.mxu0 0
        %992 = vmatmul.mubr.bf16.gmra.mrb[0].mxu0 %v954
        %v993 = vpop.f32.mrb[0].mxu0
        %v994 = vadd.f32 0.0, %v993
        %v995 = vpop.f32.mrb[0].mxu0
        %v996 = vpop.f32.mrb[0].mxu0
        %v997 = vadd.f32 0.0, %v996
        %v998 = vpop.f32.mrb[0].mxu0
        %999 = vdwg.mxu0
        %1001 = vrot.lane.b32.xlu0 %v946, 96
        %v1002 = vpop.permute.xlu0 %1001
        %v1004 = vsel %vm952, %v946, 0
        %v1007 = vsel %vm952, %v1002, 0
        %1009 = vmatprep.subr.bf16.mxu0 0
        %1010 = vmatpush1.bf16.xpose.msra.mxu0 %v1007
        %1011 = vmatprep.subr.bf16.mxu0 0
        %1012 = vmatpush1.bf16.xpose.msra.mxu0 0
        %1013 = vmatprep.subr.bf16.mxu0 0
        %1014 = vmatpush1.bf16.xpose.msra.mxu0 0
        %1015 = vmatprep.subr.bf16.mxu0 0
        %1016 = vmatpush1.bf16.xpose.msra.mxu0 0
        %1017 = vmatprep.subr.bf16.mxu0 0
        %1018 = vmatpush1.bf16.xpose.msra.mxu0 0
        %1019 = vmatprep.subr.bf16.mxu0 0
        %1020 = vmatpush1.bf16.xpose.msra.mxu0 0
        %1021 = vmatprep.subr.bf16.mxu0 0
        %1022 = vmatpush1.bf16.xpose.msra.mxu0 0
        %1023 = vmatprep.subr.bf16.mxu0 0
        %1024 = vmatpush1.bf16.xpose.msra.mxu0 0
        %1025 = vmatprep.subr.bf16.mxu0 0
        %1026 = vmatpush1.bf16.xpose.msra.mxu0 0
        %1027 = vmatprep.subr.bf16.mxu0 0
        %1028 = vmatpush1.bf16.xpose.msra.mxu0 0
        %1029 = vmatprep.subr.bf16.mxu0 0
        %1030 = vmatpush1.bf16.xpose.msra.mxu0 0
        %1031 = vmatprep.subr.bf16.mxu0 0
        %1032 = vmatpush1.bf16.xpose.msra.mxu0 0
        %1033 = vmatprep.subr.bf16.mxu0 0
        %1034 = vmatpush1.bf16.xpose.msra.mxu0 0
        %1035 = vmatprep.subr.bf16.mxu0 0
        %1036 = vmatpush1.bf16.xpose.msra.mxu0 0
        %1037 = vmatprep.subr.bf16.mxu0 0
        %1038 = vmatpush1.bf16.xpose.msra.mxu0 0
        %1039 = vmatprep.subr.bf16.mxu0 0
        %1040 = vmatpush1.bf16.xpose.msra.mxu0 0
        %1041 = vmatprep.mubr.bf16.mxu0 0
        %1042 = vmatmul.mubr.bf16.gmra.mrb[0].mxu0 %v1004
        %v1043 = vpop.f32.mrb[0].mxu0
        %v1044 = vadd.f32 0.0, %v1043
        %v1045 = vpop.f32.mrb[0].mxu0
        %v1046 = vpop.f32.mrb[0].mxu0
        %v1047 = vadd.f32 0.0, %v1046
        %v1048 = vpop.f32.mrb[0].mxu0
        %1049 = vdwg.mxu0
        %1051 = vrot.lane.b32.xlu0 %v947, 96
        %v1052 = vpop.permute.xlu0 %1051
        %v1054 = vsel %vm952, %v947, 0
        %v1057 = vsel %vm952, %v1052, 0
        %1059 = vmatprep.subr.bf16.mxu0 0
        %1060 = vmatpush1.bf16.xpose.msra.mxu0 %v1057
        %1061 = vmatprep.subr.bf16.mxu0 0
        %1062 = vmatpush1.bf16.xpose.msra.mxu0 0
        %1063 = vmatprep.subr.bf16.mxu0 0
        %1064 = vmatpush1.bf16.xpose.msra.mxu0 0
        %1065 = vmatprep.subr.bf16.mxu0 0
        %1066 = vmatpush1.bf16.xpose.msra.mxu0 0
        %1067 = vmatprep.subr.bf16.mxu0 0
        %1068 = vmatpush1.bf16.xpose.msra.mxu0 0
        %1069 = vmatprep.subr.bf16.mxu0 0
        %1070 = vmatpush1.bf16.xpose.msra.mxu0 0
        %1071 = vmatprep.subr.bf16.mxu0 0
        %1072 = vmatpush1.bf16.xpose.msra.mxu0 0
        %1073 = vmatprep.subr.bf16.mxu0 0
        %1074 = vmatpush1.bf16.xpose.msra.mxu0 0
        %1075 = vmatprep.subr.bf16.mxu0 0
        %1076 = vmatpush1.bf16.xpose.msra.mxu0 0
        %1077 = vmatprep.subr.bf16.mxu0 0
        %1078 = vmatpush1.bf16.xpose.msra.mxu0 0
        %1079 = vmatprep.subr.bf16.mxu0 0
        %1080 = vmatpush1.bf16.xpose.msra.mxu0 0
        %1081 = vmatprep.subr.bf16.mxu0 0
        %1082 = vmatpush1.bf16.xpose.msra.mxu0 0
        %1083 = vmatprep.subr.bf16.mxu0 0
        %1084 = vmatpush1.bf16.xpose.msra.mxu0 0
        %1085 = vmatprep.subr.bf16.mxu0 0
        %1086 = vmatpush1.bf16.xpose.msra.mxu0 0
        %1087 = vmatprep.subr.bf16.mxu0 0
        %1088 = vmatpush1.bf16.xpose.msra.mxu0 0
        %1089 = vmatprep.subr.bf16.mxu0 0
        %1090 = vmatpush1.bf16.xpose.msra.mxu0 0
        %1091 = vmatprep.mubr.bf16.mxu0 0
        %1092 = vmatmul.mubr.bf16.gmra.mrb[0].mxu0 %v1054
        %v1093 = vpop.f32.mrb[0].mxu0
        %v1094 = vadd.f32 0.0, %v1093
        %v1095 = vpop.f32.mrb[0].mxu0
        %v1096 = vpop.f32.mrb[0].mxu0
        %v1097 = vadd.f32 0.0, %v1096
        %v1098 = vpop.f32.mrb[0].mxu0
        %1099 = vdwg.mxu0
        %1101 = vrot.lane.b32.xlu0 %v948, 96
        %v1102 = vpop.permute.xlu0 %1101
        %v1104 = vsel %vm952, %v948, 0
        %v1107 = vsel %vm952, %v1102, 0
        %1109 = vmatprep.subr.bf16.mxu0 0
        %1110 = vmatpush1.bf16.xpose.msra.mxu0 %v1107
        %1111 = vmatprep.subr.bf16.mxu0 0
        %1112 = vmatpush1.bf16.xpose.msra.mxu0 0
        %1113 = vmatprep.subr.bf16.mxu0 0
        %1114 = vmatpush1.bf16.xpose.msra.mxu0 0
        %1115 = vmatprep.subr.bf16.mxu0 0
        %1116 = vmatpush1.bf16.xpose.msra.mxu0 0
        %1117 = vmatprep.subr.bf16.mxu0 0
        %1118 = vmatpush1.bf16.xpose.msra.mxu0 0
        %1119 = vmatprep.subr.bf16.mxu0 0
        %1120 = vmatpush1.bf16.xpose.msra.mxu0 0
        %1121 = vmatprep.subr.bf16.mxu0 0
        %1122 = vmatpush1.bf16.xpose.msra.mxu0 0
        %1123 = vmatprep.subr.bf16.mxu0 0
        %1124 = vmatpush1.bf16.xpose.msra.mxu0 0
        %1125 = vmatprep.subr.bf16.mxu0 0
        %1126 = vmatpush1.bf16.xpose.msra.mxu0 0
        %1127 = vmatprep.subr.bf16.mxu0 0
        %1128 = vmatpush1.bf16.xpose.msra.mxu0 0
        %1129 = vmatprep.subr.bf16.mxu0 0
        %1130 = vmatpush1.bf16.xpose.msra.mxu0 0
        %1131 = vmatprep.subr.bf16.mxu0 0
        %1132 = vmatpush1.bf16.xpose.msra.mxu0 0
        %1133 = vmatprep.subr.bf16.mxu0 0
        %1134 = vmatpush1.bf16.xpose.msra.mxu0 0
        %1135 = vmatprep.subr.bf16.mxu0 0
        %1136 = vmatpush1.bf16.xpose.msra.mxu0 0
        %1137 = vmatprep.subr.bf16.mxu0 0
        %1138 = vmatpush1.bf16.xpose.msra.mxu0 0
        %1139 = vmatprep.subr.bf16.mxu0 0
        %1140 = vmatpush1.bf16.xpose.msra.mxu0 0
        %1141 = vmatprep.mubr.bf16.mxu0 0
        %1142 = vmatmul.mubr.bf16.gmra.mrb[0].mxu0 %v1104
        %v1143 = vpop.f32.mrb[0].mxu0
        %v1144 = vadd.f32 0.0, %v1143
        %v1145 = vpop.f32.mrb[0].mxu0
        %v1146 = vpop.f32.mrb[0].mxu0
        %v1147 = vadd.f32 0.0, %v1146
        %v1148 = vpop.f32.mrb[0].mxu0
        %1149 = vdwg.mxu0
        %v1150 = vmul.f32 %v994, 0.25
        %v1151 = vmul.f32 %v997, 0.25
        %v1152 = vmul.f32 %v1044, 0.25
        %v1153 = vmul.f32 %v1047, 0.25
        %v1154 = vmul.f32 %v1094, 0.25
        %v1155 = vmul.f32 %v1097, 0.25
        %v1156 = vmul.f32 %v1144, 0.25
        %v1157 = vmul.f32 %v1147, 0.25
        %v1162 = vlaneseq
        %v1163 = vshrl.u32 %v1162, 7
        %v1164 = vsub.s32 0, %v1163
        %v1165 = vrot.slane %v654, %v1164
        %v1166 = vlaneseq
        %v1167 = vshrl.u32 %v1166, 7
        %v1168 = vsub.s32 0, %v1167
        %v1169 = vrot.slane %v655, %v1168
        %v1170 = vlaneseq
        %v1171 = vshrl.u32 %v1170, 7
        %v1172 = vsub.s32 0, %v1171
        %v1173 = vrot.slane %v656, %v1172
        %v1174 = vlaneseq
        %v1175 = vshrl.u32 %v1174, 7
        %v1176 = vsub.s32 0, %v1175
        %v1177 = vrot.slane %v657, %v1176
        %v1182 = vadd.f32 %v1150, %v1165
        %v1183 = vadd.f32 %v1151, %v1165
        %v1184 = vadd.f32 %v1152, %v1169
        %v1185 = vadd.f32 %v1153, %v1169
        %v1186 = vadd.f32 %v1154, %v1173
        %v1187 = vadd.f32 %v1155, %v1173
        %v1188 = vadd.f32 %v1156, %v1177
        %v1189 = vadd.f32 %v1157, %v1177
        %v1190 = vsel %vm952, %v1182, -inf
        %1191 = vmax.xlane.f32.xlu0 %v1190
        %v1192 = vpop.xlane.xlu0 %1191
        %v1193 = vsel %vm952, %v1183, -inf
        %1194 = vmax.xlane.f32.xlu0 %v1193
        %v1195 = vpop.xlane.xlu0 %1194
        %v1196 = vsel %vm952, %v1184, -inf
        %1197 = vmax.xlane.f32.xlu0 %v1196
        %v1198 = vpop.xlane.xlu0 %1197
        %v1199 = vsel %vm952, %v1185, -inf
        %1200 = vmax.xlane.f32.xlu0 %v1199
        %v1201 = vpop.xlane.xlu0 %1200
        %v1202 = vsel %vm952, %v1186, -inf
        %1203 = vmax.xlane.f32.xlu0 %v1202
        %v1204 = vpop.xlane.xlu0 %1203
        %v1205 = vsel %vm952, %v1187, -inf
        %1206 = vmax.xlane.f32.xlu0 %v1205
        %v1207 = vpop.xlane.xlu0 %1206
        %v1208 = vsel %vm952, %v1188, -inf
        %1209 = vmax.xlane.f32.xlu0 %v1208
        %v1210 = vpop.xlane.xlu0 %1209
        %v1211 = vsel %vm952, %v1189, -inf
        %1212 = vmax.xlane.f32.xlu0 %v1211
        %v1213 = vpop.xlane.xlu0 %1212
        %v1214 = vsub.f32 %v1182, %v1192
        %v1215 = vsub.f32 %v1183, %v1195
        %v1216 = vsub.f32 %v1184, %v1198
        %v1217 = vsub.f32 %v1185, %v1201
        %v1218 = vsub.f32 %v1186, %v1204
        %v1219 = vsub.f32 %v1187, %v1207
        %v1220 = vsub.f32 %v1188, %v1210
        %v1221 = vsub.f32 %v1189, %v1213
        %v1222 = vmul.f32 %v1214, 1.442695
        %v1223 = vpow.pop %v1222
        %v1224 = vmul.f32 %v1215, 1.442695
        %v1225 = vpow.pop %v1224
        %v1226 = vmul.f32 %v1216, 1.442695
        %v1227 = vpow.pop %v1226
        %v1228 = vmul.f32 %v1217, 1.442695
        %v1229 = vpow.pop %v1228
        %v1230 = vmul.f32 %v1218, 1.442695
        %v1231 = vpow.pop %v1230
        %v1232 = vmul.f32 %v1219, 1.442695
        %v1233 = vpow.pop %v1232
        %v1234 = vmul.f32 %v1220, 1.442695
        %v1235 = vpow.pop %v1234
        %v1236 = vmul.f32 %v1221, 1.442695
        %v1237 = vpow.pop %v1236
        %v1238 = vsel %vm952, %v1223, 0.0
        %1239 = vadd.xlane.f32.xlu0 %v1238
        %v1240 = vpop.xlane.xlu0 %1239
        %v1241 = vsel %vm952, %v1225, 0.0
        %1242 = vadd.xlane.f32.xlu0 %v1241
        %v1243 = vpop.xlane.xlu0 %1242
        %v1244 = vsel %vm952, %v1227, 0.0
        %1245 = vadd.xlane.f32.xlu0 %v1244
        %v1246 = vpop.xlane.xlu0 %1245
        %v1247 = vsel %vm952, %v1229, 0.0
        %1248 = vadd.xlane.f32.xlu0 %v1247
        %v1249 = vpop.xlane.xlu0 %1248
        %v1250 = vsel %vm952, %v1231, 0.0
        %1251 = vadd.xlane.f32.xlu0 %v1250
        %v1252 = vpop.xlane.xlu0 %1251
        %v1253 = vsel %vm952, %v1233, 0.0
        %1254 = vadd.xlane.f32.xlu0 %v1253
        %v1255 = vpop.xlane.xlu0 %1254
        %v1256 = vsel %vm952, %v1235, 0.0
        %1257 = vadd.xlane.f32.xlu0 %v1256
        %v1258 = vpop.xlane.xlu0 %1257
        %v1259 = vsel %vm952, %v1237, 0.0
        %1260 = vadd.xlane.f32.xlu0 %v1259
        %v1261 = vpop.xlane.xlu0 %1260
        %v1262 = vrcp.pop %v1240
        %v1263 = vrcp.pop %v1243
        %v1264 = vrcp.pop %v1246
        %v1265 = vrcp.pop %v1249
        %v1266 = vrcp.pop %v1252
        %v1267 = vrcp.pop %v1255
        %v1268 = vrcp.pop %v1258
        %v1269 = vrcp.pop %v1261
        %v1270 = vmul.f32 %v1223, %v1262
        %v1271 = vmul.f32 %v1225, %v1263
        %v1272 = vmul.f32 %v1227, %v1264
        %v1273 = vmul.f32 %v1229, %v1265
        %v1274 = vmul.f32 %v1231, %v1266
        %v1275 = vmul.f32 %v1233, %v1267
        %v1276 = vmul.f32 %v1235, %v1268
        %v1277 = vmul.f32 %v1237, %v1269
        %v1278 = vpack.c.bf16 %v1271, %v1270
        %v1279 = vpack.c.bf16 %v1273, %v1272
        %v1280 = vpack.c.bf16 %v1275, %v1274
        %v1281 = vpack.c.bf16 %v1277, %v1276
        %1282 = vrot.lane.b32.xlu0 %v945, 64
        %v1283 = vpop.permute.xlu0 %1282
        %v1286 = vsel %vm952, %v1278, 0
        %1288 = vmatprep.subr.bf16.mxu0 0
        %1289 = vmatpush1.bf16.msra.mxu0 %v1283
        %1290 = vmatprep.subr.bf16.mxu0 0
        %1291 = vmatpush1.bf16.msra.mxu0 0
        %1292 = vmatprep.subr.bf16.mxu0 0
        %1293 = vmatpush1.bf16.msra.mxu0 0
        %1294 = vmatprep.subr.bf16.mxu0 0
        %1295 = vmatpush1.bf16.msra.mxu0 0
        %1296 = vmatprep.subr.bf16.mxu0 0
        %1297 = vmatpush1.bf16.msra.mxu0 0
        %1298 = vmatprep.subr.bf16.mxu0 0
        %1299 = vmatpush1.bf16.msra.mxu0 0
        %1300 = vmatprep.subr.bf16.mxu0 0
        %1301 = vmatpush1.bf16.msra.mxu0 0
        %1302 = vmatprep.subr.bf16.mxu0 0
        %1303 = vmatpush1.bf16.msra.mxu0 0
        %1304 = vmatprep.subr.bf16.mxu0 0
        %1305 = vmatpush1.bf16.msra.mxu0 0
        %1306 = vmatprep.subr.bf16.mxu0 0
        %1307 = vmatpush1.bf16.msra.mxu0 0
        %1308 = vmatprep.subr.bf16.mxu0 0
        %1309 = vmatpush1.bf16.msra.mxu0 0
        %1310 = vmatprep.subr.bf16.mxu0 0
        %1311 = vmatpush1.bf16.msra.mxu0 0
        %1312 = vmatprep.subr.bf16.mxu0 0
        %1313 = vmatpush1.bf16.msra.mxu0 0
        %1314 = vmatprep.subr.bf16.mxu0 0
        %1315 = vmatpush1.bf16.msra.mxu0 0
        %1316 = vmatprep.subr.bf16.mxu0 0
        %1317 = vmatpush1.bf16.msra.mxu0 0
        %1318 = vmatprep.subr.bf16.mxu0 0
        %1319 = vmatpush1.bf16.msra.mxu0 0
        %1320 = vmatprep.mubr.bf16.mxu0 0
        %1321 = vmatmul.mubr.bf16.gmra.mrb[0].mxu0 %v1286
        %v1322 = vpop.f32.mrb[0].mxu0
        %v1323 = vadd.f32 0.0, %v1322
        %v1324 = vpop.f32.mrb[0].mxu0
        %v1325 = vpop.f32.mrb[0].mxu0
        %v1326 = vadd.f32 0.0, %v1325
        %v1327 = vpop.f32.mrb[0].mxu0
        %1328 = vdwg.mxu0
        %1329 = vrot.lane.b32.xlu0 %v946, 64
        %v1330 = vpop.permute.xlu0 %1329
        %v1333 = vsel %vm952, %v1279, 0
        %1335 = vmatprep.subr.bf16.mxu0 0
        %1336 = vmatpush1.bf16.msra.mxu0 %v1330
        %1337 = vmatprep.subr.bf16.mxu0 0
        %1338 = vmatpush1.bf16.msra.mxu0 0
        %1339 = vmatprep.subr.bf16.mxu0 0
        %1340 = vmatpush1.bf16.msra.mxu0 0
        %1341 = vmatprep.subr.bf16.mxu0 0
        %1342 = vmatpush1.bf16.msra.mxu0 0
        %1343 = vmatprep.subr.bf16.mxu0 0
        %1344 = vmatpush1.bf16.msra.mxu0 0
        %1345 = vmatprep.subr.bf16.mxu0 0
        %1346 = vmatpush1.bf16.msra.mxu0 0
        %1347 = vmatprep.subr.bf16.mxu0 0
        %1348 = vmatpush1.bf16.msra.mxu0 0
        %1349 = vmatprep.subr.bf16.mxu0 0
        %1350 = vmatpush1.bf16.msra.mxu0 0
        %1351 = vmatprep.subr.bf16.mxu0 0
        %1352 = vmatpush1.bf16.msra.mxu0 0
        %1353 = vmatprep.subr.bf16.mxu0 0
        %1354 = vmatpush1.bf16.msra.mxu0 0
        %1355 = vmatprep.subr.bf16.mxu0 0
        %1356 = vmatpush1.bf16.msra.mxu0 0
        %1357 = vmatprep.subr.bf16.mxu0 0
        %1358 = vmatpush1.bf16.msra.mxu0 0
        %1359 = vmatprep.subr.bf16.mxu0 0
        %1360 = vmatpush1.bf16.msra.mxu0 0
        %1361 = vmatprep.subr.bf16.mxu0 0
        %1362 = vmatpush1.bf16.msra.mxu0 0
        %1363 = vmatprep.subr.bf16.mxu0 0
        %1364 = vmatpush1.bf16.msra.mxu0 0
        %1365 = vmatprep.subr.bf16.mxu0 0
        %1366 = vmatpush1.bf16.msra.mxu0 0
        %1367 = vmatprep.mubr.bf16.mxu0 0
        %1368 = vmatmul.mubr.bf16.gmra.mrb[0].mxu0 %v1333
        %v1369 = vpop.f32.mrb[0].mxu0
        %v1370 = vadd.f32 0.0, %v1369
        %v1371 = vpop.f32.mrb[0].mxu0
        %v1372 = vpop.f32.mrb[0].mxu0
        %v1373 = vadd.f32 0.0, %v1372
        %v1374 = vpop.f32.mrb[0].mxu0
        %1375 = vdwg.mxu0
        %1376 = vrot.lane.b32.xlu0 %v947, 64
        %v1377 = vpop.permute.xlu0 %1376
        %v1380 = vsel %vm952, %v1280, 0
        %1382 = vmatprep.subr.bf16.mxu0 0
        %1383 = vmatpush1.bf16.msra.mxu0 %v1377
        %1384 = vmatprep.subr.bf16.mxu0 0
        %1385 = vmatpush1.bf16.msra.mxu0 0
        %1386 = vmatprep.subr.bf16.mxu0 0
        %1387 = vmatpush1.bf16.msra.mxu0 0
        %1388 = vmatprep.subr.bf16.mxu0 0
        %1389 = vmatpush1.bf16.msra.mxu0 0
        %1390 = vmatprep.subr.bf16.mxu0 0
        %1391 = vmatpush1.bf16.msra.mxu0 0
        %1392 = vmatprep.subr.bf16.mxu0 0
        %1393 = vmatpush1.bf16.msra.mxu0 0
        %1394 = vmatprep.subr.bf16.mxu0 0
        %1395 = vmatpush1.bf16.msra.mxu0 0
        %1396 = vmatprep.subr.bf16.mxu0 0
        %1397 = vmatpush1.bf16.msra.mxu0 0
        %1398 = vmatprep.subr.bf16.mxu0 0
        %1399 = vmatpush1.bf16.msra.mxu0 0
        %1400 = vmatprep.subr.bf16.mxu0 0
        %1401 = vmatpush1.bf16.msra.mxu0 0
        %1402 = vmatprep.subr.bf16.mxu0 0
        %1403 = vmatpush1.bf16.msra.mxu0 0
        %1404 = vmatprep.subr.bf16.mxu0 0
        %1405 = vmatpush1.bf16.msra.mxu0 0
        %1406 = vmatprep.subr.bf16.mxu0 0
        %1407 = vmatpush1.bf16.msra.mxu0 0
        %1408 = vmatprep.subr.bf16.mxu0 0
        %1409 = vmatpush1.bf16.msra.mxu0 0
        %1410 = vmatprep.subr.bf16.mxu0 0
        %1411 = vmatpush1.bf16.msra.mxu0 0
        %1412 = vmatprep.subr.bf16.mxu0 0
        %1413 = vmatpush1.bf16.msra.mxu0 0
        %1414 = vmatprep.mubr.bf16.mxu0 0
        %1415 = vmatmul.mubr.bf16.gmra.mrb[0].mxu0 %v1380
        %v1416 = vpop.f32.mrb[0].mxu0
        %v1417 = vadd.f32 0.0, %v1416
        %v1418 = vpop.f32.mrb[0].mxu0
        %v1419 = vpop.f32.mrb[0].mxu0
        %v1420 = vadd.f32 0.0, %v1419
        %v1421 = vpop.f32.mrb[0].mxu0
        %1422 = vdwg.mxu0
        %1423 = vrot.lane.b32.xlu0 %v948, 64
        %v1424 = vpop.permute.xlu0 %1423
        %v1427 = vsel %vm952, %v1281, 0
        %1429 = vmatprep.subr.bf16.mxu0 0
        %1430 = vmatpush1.bf16.msra.mxu0 %v1424
        %1431 = vmatprep.subr.bf16.mxu0 0
        %1432 = vmatpush1.bf16.msra.mxu0 0
        %1433 = vmatprep.subr.bf16.mxu0 0
        %1434 = vmatpush1.bf16.msra.mxu0 0
        %1435 = vmatprep.subr.bf16.mxu0 0
        %1436 = vmatpush1.bf16.msra.mxu0 0
        %1437 = vmatprep.subr.bf16.mxu0 0
        %1438 = vmatpush1.bf16.msra.mxu0 0
        %1439 = vmatprep.subr.bf16.mxu0 0
        %1440 = vmatpush1.bf16.msra.mxu0 0
        %1441 = vmatprep.subr.bf16.mxu0 0
        %1442 = vmatpush1.bf16.msra.mxu0 0
        %1443 = vmatprep.subr.bf16.mxu0 0
        %1444 = vmatpush1.bf16.msra.mxu0 0
        %1445 = vmatprep.subr.bf16.mxu0 0
        %1446 = vmatpush1.bf16.msra.mxu0 0
        %1447 = vmatprep.subr.bf16.mxu0 0
        %1448 = vmatpush1.bf16.msra.mxu0 0
        %1449 = vmatprep.subr.bf16.mxu0 0
        %1450 = vmatpush1.bf16.msra.mxu0 0
        %1451 = vmatprep.subr.bf16.mxu0 0
        %1452 = vmatpush1.bf16.msra.mxu0 0
        %1453 = vmatprep.subr.bf16.mxu0 0
        %1454 = vmatpush1.bf16.msra.mxu0 0
        %1455 = vmatprep.subr.bf16.mxu0 0
        %1456 = vmatpush1.bf16.msra.mxu0 0
        %1457 = vmatprep.subr.bf16.mxu0 0
        %1458 = vmatpush1.bf16.msra.mxu0 0
        %1459 = vmatprep.subr.bf16.mxu0 0
        %1460 = vmatpush1.bf16.msra.mxu0 0
        %1461 = vmatprep.mubr.bf16.mxu0 0
        %1462 = vmatmul.mubr.bf16.gmra.mrb[0].mxu0 %v1427
        %v1463 = vpop.f32.mrb[0].mxu0
        %v1464 = vadd.f32 0.0, %v1463
        %v1465 = vpop.f32.mrb[0].mxu0
        %v1466 = vpop.f32.mrb[0].mxu0
        %v1467 = vadd.f32 0.0, %v1466
        %v1468 = vpop.f32.mrb[0].mxu0
        %1469 = vdwg.mxu0
        %1474 = vrot.lane.b32.xlu0 %v1417, 16
        %v1475 = vpop.permute.xlu0 %1474
        %1476 = vrot.lane.b32.xlu0 %v1420, 16
        %v1477 = vpop.permute.xlu0 %1476
        %1478 = vrot.lane.b32.xlu0 %v1464, 16
        %v1479 = vpop.permute.xlu0 %1478
        %1480 = vrot.lane.b32.xlu0 %v1467, 16
        %v1481 = vpop.permute.xlu0 %1480
        %v1486 = vsel %vm952, %v1323, %v1475
        %v1487 = vsel %vm952, %v1326, %v1477
        %v1488 = vsel %vm952, %v1370, %v1479
        %v1489 = vsel %vm952, %v1373, %v1481
        %v1490 = vpack.c.bf16 %v1487, %v1486
        %v1491 = vpack.c.bf16 %v1489, %v1488
        %v1492 = vld [vmem:[%s10] sm:$0xf]
        %v1493 = vld [vmem:[%s10 + $0x4] sm:$0xf]
        %v1494 = vld [vmem:[%s10 + $0x8] sm:$0xf]
        %v1495 = vld [vmem:[%s10 + $0xc] sm:$0xf]
        %v1500 = vunpack.c.l.b16 %v1492
        %v1501 = vunpack.c.l.b16 %v1493
        %v1502 = vunpack.c.l.b16 %v1494
        %v1503 = vunpack.c.l.b16 %v1495
        %v1504 = vpack.c.b16 %v1501, %v1500
        %v1505 = vpack.c.b16 %v1503, %v1502
        %v1509 = vsel %vm775, %v1490, 0
        %v1512 = vsel %vm775, %v1491, 0
        %1514 = vmatprep.subr.bf16.mxu0 0
        %1515 = vmatpush1.bf16.msra.mxu0 %v1504
        %1516 = vmatprep.subr.bf16.mxu0 0
        %1517 = vmatpush1.bf16.msra.mxu0 %v1505
        %1518 = vmatprep.subr.bf16.mxu0 0
        %1519 = vmatpush1.bf16.msra.mxu0 0
        %1520 = vmatprep.subr.bf16.mxu0 0
        %1521 = vmatpush1.bf16.msra.mxu0 0
        %1522 = vmatprep.subr.bf16.mxu0 0
        %1523 = vmatpush1.bf16.msra.mxu0 0
        %1524 = vmatprep.subr.bf16.mxu0 0
        %1525 = vmatpush1.bf16.msra.mxu0 0
        %1526 = vmatprep.subr.bf16.mxu0 0
        %1527 = vmatpush1.bf16.msra.mxu0 0
        %1528 = vmatprep.subr.bf16.mxu0 0
        %1529 = vmatpush1.bf16.msra.mxu0 0
        %1530 = vmatprep.subr.bf16.mxu0 0
        %1531 = vmatpush1.bf16.msra.mxu0 0
        %1532 = vmatprep.subr.bf16.mxu0 0
        %1533 = vmatpush1.bf16.msra.mxu0 0
        %1534 = vmatprep.subr.bf16.mxu0 0
        %1535 = vmatpush1.bf16.msra.mxu0 0
        %1536 = vmatprep.subr.bf16.mxu0 0
        %1537 = vmatpush1.bf16.msra.mxu0 0
        %1538 = vmatprep.subr.bf16.mxu0 0
        %1539 = vmatpush1.bf16.msra.mxu0 0
        %1540 = vmatprep.subr.bf16.mxu0 0
        %1541 = vmatpush1.bf16.msra.mxu0 0
        %1542 = vmatprep.subr.bf16.mxu0 0
        %1543 = vmatpush1.bf16.msra.mxu0 0
        %1544 = vmatprep.subr.bf16.mxu0 0
        %1545 = vmatpush1.bf16.msra.mxu0 0
        %1546 = vmatprep.mubr.bf16.mxu0 0
        %1547 = vmatmul.mubr.bf16.gmra.mrb[0].mxu0 %v1509
        %v1548 = vpop.f32.mrb[0].mxu0
        %v1549 = vadd.f32 0.0, %v1548
        %v1550 = vpop.f32.mrb[0].mxu0
        %v1551 = vpop.f32.mrb[0].mxu0
        %v1552 = vadd.f32 0.0, %v1551
        %v1553 = vpop.f32.mrb[0].mxu0
        %1554 = vmatprep.mubr.bf16.mxu0 0
        %1555 = vmatmul.mubr.bf16.gmra.mrb[0].mxu0 %v1512
        %v1556 = vpop.f32.mrb[0].mxu0
        %v1557 = vadd.f32 0.0, %v1556
        %v1558 = vpop.f32.mrb[0].mxu0
        %v1559 = vpop.f32.mrb[0].mxu0
        %v1560 = vadd.f32 0.0, %v1559
        %v1561 = vpop.f32.mrb[0].mxu0
        %1562 = vdwg.mxu0
        %v1563 = vadd.f32 %v759, %v1549
        %v1564 = vadd.f32 %v762, %v1552
        %v1565 = vadd.f32 %v767, %v1557
        %v1566 = vadd.f32 %v770, %v1560
        %v1567 = vld [vmem:[%s11] sm:$0x1]
        %v1569 = vlaneseq
        %v1570 = vshrl.u32 %v1569, 7
        %v1571 = vsub.s32 0, %v1570
        %v1572 = vrot.slane %v1567, %v1571
        %v1574 = vadd.f32 %v1563, %v1572
        %v1575 = vadd.f32 %v1564, %v1572
        %v1576 = vadd.f32 %v1565, %v1572
        %v1577 = vadd.f32 %v1566, %v1572
        %v1578 = vld [vmem:[%s12] sm:$0x1]
        %v1579 = vld [vmem:[%s13] sm:$0x1]
        %v1580 = vsel %vm775, %v1574, 0.0
        %1581 = vadd.xlane.f32.xlu0 %v1580
        %v1582 = vpop.xlane.xlu0 %1581
        %v1583 = vsel %vm775, %v1575, 0.0
        %1584 = vadd.xlane.f32.xlu0 %v1583
        %v1585 = vpop.xlane.xlu0 %1584
        %v1586 = vsel %vm775, %v1576, 0.0
        %1587 = vadd.xlane.f32.xlu0 %v1586
        %v1588 = vpop.xlane.xlu0 %1587
        %v1589 = vsel %vm775, %v1577, 0.0
        %1590 = vadd.xlane.f32.xlu0 %v1589
        %v1591 = vpop.xlane.xlu0 %1590
        %v1592 = vmul.f32 %v1582, %v788
        %v1593 = vmul.f32 %v1585, %v788
        %v1594 = vmul.f32 %v1588, %v788
        %v1595 = vmul.f32 %v1591, %v788
        %v1596 = vsub.f32 %v1574, %v1592
        %v1597 = vsub.f32 %v1575, %v1593
        %v1598 = vsub.f32 %v1576, %v1594
        %v1599 = vsub.f32 %v1577, %v1595
        %v1600 = vmul.f32 %v1596, %v1596
        %v1601 = vmul.f32 %v1597, %v1597
        %v1602 = vmul.f32 %v1598, %v1598
        %v1603 = vmul.f32 %v1599, %v1599
        %v1604 = vsel %vm775, %v1600, 0.0
        %1605 = vadd.xlane.f32.xlu0 %v1604
        %v1606 = vpop.xlane.xlu0 %1605
        %v1607 = vsel %vm775, %v1601, 0.0
        %1608 = vadd.xlane.f32.xlu0 %v1607
        %v1609 = vpop.xlane.xlu0 %1608
        %v1610 = vsel %vm775, %v1602, 0.0
        %1611 = vadd.xlane.f32.xlu0 %v1610
        %v1612 = vpop.xlane.xlu0 %1611
        %v1613 = vsel %vm775, %v1603, 0.0
        %1614 = vadd.xlane.f32.xlu0 %v1613
        %v1615 = vpop.xlane.xlu0 %1614
        %v1616 = vmul.f32 %v1606, %v788
        %v1617 = vmul.f32 %v1609, %v788
        %v1618 = vmul.f32 %v1612, %v788
        %v1619 = vmul.f32 %v1615, %v788
        %v1620 = vadd.f32 %v1616, 1e-05
        %v1621 = vadd.f32 %v1617, 1e-05
        %v1622 = vadd.f32 %v1618, 1e-05
        %v1623 = vadd.f32 %v1619, 1e-05
        %v1624 = vrsqrt.pop %v1620
        %v1625 = vrsqrt.pop %v1621
        %v1626 = vrsqrt.pop %v1622
        %v1627 = vrsqrt.pop %v1623
        %v1628 = vmul.f32 %v1596, %v1624
        %v1629 = vmul.f32 %v1597, %v1625
        %v1630 = vmul.f32 %v1598, %v1626
        %v1631 = vmul.f32 %v1599, %v1627
        %v1633 = vlaneseq
        %v1634 = vshrl.u32 %v1633, 7
        %v1635 = vsub.s32 0, %v1634
        %v1636 = vrot.slane %v1578, %v1635
        %v1638 = vmul.f32 %v1628, %v1636
        %v1639 = vmul.f32 %v1629, %v1636
        %v1640 = vmul.f32 %v1630, %v1636
        %v1641 = vmul.f32 %v1631, %v1636
        %v1643 = vlaneseq
        %v1644 = vshrl.u32 %v1643, 7
        %v1645 = vsub.s32 0, %v1644
        %v1646 = vrot.slane %v1579, %v1645
        %v1648 = vadd.f32 %v1638, %v1646
        %v1649 = vadd.f32 %v1639, %v1646
        %v1650 = vadd.f32 %v1640, %v1646
        %v1651 = vadd.f32 %v1641, %v1646
        %v1652 = vpack.c.bf16 %v1649, %v1648
        %v1653 = vpack.c.bf16 %v1651, %v1650
        %v1654 = vld [vmem:[%s14] sm:$0xf]
        %v1655 = vld [vmem:[%s14 + $0x4] sm:$0xf]
        %v1656 = vld [vmem:[%s14 + $0x8] sm:$0xf]
        %v1657 = vld [vmem:[%s14 + $0xc] sm:$0xf]
        %v1658 = vld [vmem:[%s15] sm:$0x1]
        %v1660 = vlaneseq
        %v1661 = vshrl.u32 %v1660, 7
        %v1662 = vsub.s32 0, %v1661
        %v1663 = vrot.slane %v1658, %v1662
        %v1669 = vunpack.c.l.b16 %v1654
        %v1670 = vunpack.c.l.b16 %v1655
        %v1671 = vunpack.c.l.b16 %v1656
        %v1672 = vunpack.c.l.b16 %v1657
        %v1673 = vpack.c.b16 %v1670, %v1669
        %v1674 = vpack.c.b16 %v1672, %v1671
        %v1678 = vsel %vm775, %v1652, 0
        %v1681 = vsel %vm775, %v1653, 0
        %1683 = vmatprep.subr.bf16.mxu0 0
        %1684 = vmatpush1.bf16.msra.mxu0 %v1673
        %1685 = vmatprep.subr.bf16.mxu0 0
        %1686 = vmatpush1.bf16.msra.mxu0 %v1674
        %1687 = vmatprep.subr.bf16.mxu0 0
        %1688 = vmatpush1.bf16.msra.mxu0 0
        %1689 = vmatprep.subr.bf16.mxu0 0
        %1690 = vmatpush1.bf16.msra.mxu0 0
        %1691 = vmatprep.subr.bf16.mxu0 0
        %1692 = vmatpush1.bf16.msra.mxu0 0
        %1693 = vmatprep.subr.bf16.mxu0 0
        %1694 = vmatpush1.bf16.msra.mxu0 0
        %1695 = vmatprep.subr.bf16.mxu0 0
        %1696 = vmatpush1.bf16.msra.mxu0 0
        %1697 = vmatprep.subr.bf16.mxu0 0
        %1698 = vmatpush1.bf16.msra.mxu0 0
        %1699 = vmatprep.subr.bf16.mxu0 0
        %1700 = vmatpush1.bf16.msra.mxu0 0
        %1701 = vmatprep.subr.bf16.mxu0 0
        %1702 = vmatpush1.bf16.msra.mxu0 0
        %1703 = vmatprep.subr.bf16.mxu0 0
        %1704 = vmatpush1.bf16.msra.mxu0 0
        %1705 = vmatprep.subr.bf16.mxu0 0
        %1706 = vmatpush1.bf16.msra.mxu0 0
        %1707 = vmatprep.subr.bf16.mxu0 0
        %1708 = vmatpush1.bf16.msra.mxu0 0
        %1709 = vmatprep.subr.bf16.mxu0 0
        %1710 = vmatpush1.bf16.msra.mxu0 0
        %1711 = vmatprep.subr.bf16.mxu0 0
        %1712 = vmatpush1.bf16.msra.mxu0 0
        %1713 = vmatprep.subr.bf16.mxu0 0
        %1714 = vmatpush1.bf16.msra.mxu0 0
        %1715 = vmatprep.mubr.bf16.mxu0 0
        %1716 = vmatmul.mubr.bf16.gmra.mrb[0].mxu0 %v1678
        %v1717 = vpop.f32.mrb[0].mxu0
        %v1718 = vadd.f32 %v1663, %v1717
        %v1719 = vpop.f32.mrb[0].mxu0
        %v1720 = vpop.f32.mrb[0].mxu0
        %v1721 = vadd.f32 %v1663, %v1720
        %v1722 = vpop.f32.mrb[0].mxu0
        %1723 = vmatprep.mubr.bf16.mxu0 0
        %1724 = vmatmul.mubr.bf16.gmra.mrb[0].mxu0 %v1681
        %v1725 = vpop.f32.mrb[0].mxu0
        %v1726 = vadd.f32 %v1663, %v1725
        %v1727 = vpop.f32.mrb[0].mxu0
        %v1728 = vpop.f32.mrb[0].mxu0
        %v1729 = vadd.f32 %v1663, %v1728
        %v1730 = vpop.f32.mrb[0].mxu0
        %1731 = vdwg.mxu0
        %v1732 = vmul.f32 %v1718, %v1718
        %v1733 = vmul.f32 %v1721, %v1721
        %v1734 = vmul.f32 %v1726, %v1726
        %v1735 = vmul.f32 %v1729, %v1729
        %v1736 = vmul.f32 %v1718, %v1732
        %v1737 = vmul.f32 %v1721, %v1733
        %v1738 = vmul.f32 %v1726, %v1734
        %v1739 = vmul.f32 %v1729, %v1735
        %v1740 = vmul.f32 %v1736, 0.044715
        %v1741 = vmul.f32 %v1737, 0.044715
        %v1742 = vmul.f32 %v1738, 0.044715
        %v1743 = vmul.f32 %v1739, 0.044715
        %v1744 = vadd.f32 %v1718, %v1740
        %v1745 = vadd.f32 %v1721, %v1741
        %v1746 = vadd.f32 %v1726, %v1742
        %v1747 = vadd.f32 %v1729, %v1743
        %v1748 = vmul.f32 %v1744, 0.7978846
        %v1749 = vmul.f32 %v1745, 0.7978846
        %v1750 = vmul.f32 %v1746, 0.7978846
        %v1751 = vmul.f32 %v1747, 0.7978846
        %v1752 = vtanh.pop %v1748
        %v1753 = vtanh.pop %v1749
        %v1754 = vtanh.pop %v1750
        %v1755 = vtanh.pop %v1751
        %v1756 = vadd.f32 %v1752, 1.0
        %v1757 = vadd.f32 %v1753, 1.0
        %v1758 = vadd.f32 %v1754, 1.0
        %v1759 = vadd.f32 %v1755, 1.0
        %v1760 = vmul.f32 %v1756, 0.5
        %v1761 = vmul.f32 %v1757, 0.5
        %v1762 = vmul.f32 %v1758, 0.5
        %v1763 = vmul.f32 %v1759, 0.5
        %v1764 = vmul.f32 %v1718, %v1760
        %v1765 = vmul.f32 %v1721, %v1761
        %v1766 = vmul.f32 %v1726, %v1762
        %v1767 = vmul.f32 %v1729, %v1763
        %v1768 = vpack.c.bf16 %v1765, %v1764
        %v1769 = vpack.c.bf16 %v1767, %v1766
        %v1770 = vld [vmem:[%s16] sm:$0xf]
        %v1771 = vld [vmem:[%s16 + $0x4] sm:$0xf]
        %v1772 = vld [vmem:[%s16 + $0x8] sm:$0xf]
        %v1773 = vld [vmem:[%s16 + $0xc] sm:$0xf]
        %v1774 = vld [vmem:[%s16 + $0x10] sm:$0xf]
        %v1775 = vld [vmem:[%s16 + $0x14] sm:$0xf]
        %v1776 = vld [vmem:[%s16 + $0x18] sm:$0xf]
        %v1777 = vld [vmem:[%s16 + $0x1c] sm:$0xf]
        %v1786 = vunpack.c.l.b16 %v1770
        %v1787 = vunpack.c.l.b16 %v1771
        %v1788 = vunpack.c.l.b16 %v1772
        %v1789 = vunpack.c.l.b16 %v1773
        %v1790 = vunpack.c.l.b16 %v1774
        %v1791 = vunpack.c.l.b16 %v1775
        %v1792 = vunpack.c.l.b16 %v1776
        %v1793 = vunpack.c.l.b16 %v1777
        %v1794 = vpack.c.b16 %v1787, %v1786
        %v1795 = vpack.c.b16 %v1789, %v1788
        %v1796 = vpack.c.b16 %v1791, %v1790
        %v1797 = vpack.c.b16 %v1793, %v1792
        %vm1802 = vcmask 523264
        %v1804 = vsel %vm1802, %v1768, 0
        %v1807 = vsel %vm1802, %v1769, 0
        %1809 = vmatprep.subr.bf16.mxu0 0
        %1810 = vmatpush1.bf16.msra.mxu0 %v1794
        %1811 = vmatprep.subr.bf16.mxu0 0
        %1812 = vmatpush1.bf16.msra.mxu0 %v1795
        %1813 = vmatprep.subr.bf16.mxu0 0
        %1814 = vmatpush1.bf16.msra.mxu0 %v1796
        %1815 = vmatprep.subr.bf16.mxu0 0
        %1816 = vmatpush1.bf16.msra.mxu0 %v1797
        %1817 = vmatprep.subr.bf16.mxu0 0
        %1818 = vmatpush1.bf16.msra.mxu0 0
        %1819 = vmatprep.subr.bf16.mxu0 0
        %1820 = vmatpush1.bf16.msra.mxu0 0
        %1821 = vmatprep.subr.bf16.mxu0 0
        %1822 = vmatpush1.bf16.msra.mxu0 0
        %1823 = vmatprep.subr.bf16.mxu0 0
        %1824 = vmatpush1.bf16.msra.mxu0 0
        %1825 = vmatprep.subr.bf16.mxu0 0
        %1826 = vmatpush1.bf16.msra.mxu0 0
        %1827 = vmatprep.subr.bf16.mxu0 0
        %1828 = vmatpush1.bf16.msra.mxu0 0
        %1829 = vmatprep.subr.bf16.mxu0 0
        %1830 = vmatpush1.bf16.msra.mxu0 0
        %1831 = vmatprep.subr.bf16.mxu0 0
        %1832 = vmatpush1.bf16.msra.mxu0 0
        %1833 = vmatprep.subr.bf16.mxu0 0
        %1834 = vmatpush1.bf16.msra.mxu0 0
        %1835 = vmatprep.subr.bf16.mxu0 0
        %1836 = vmatpush1.bf16.msra.mxu0 0
        %1837 = vmatprep.subr.bf16.mxu0 0
        %1838 = vmatpush1.bf16.msra.mxu0 0
        %1839 = vmatprep.subr.bf16.mxu0 0
        %1840 = vmatpush1.bf16.msra.mxu0 0
        %1841 = vmatprep.mubr.bf16.mxu0 0
        %1842 = vmatmul.mubr.bf16.gmra.mrb[0].mxu0 %v1804
        %v1843 = vpop.f32.mrb[0].mxu0
        %v1844 = vadd.f32 0.0, %v1843
        %v1845 = vpop.f32.mrb[0].mxu0
        %v1846 = vpop.f32.mrb[0].mxu0
        %v1847 = vadd.f32 0.0, %v1846
        %v1848 = vpop.f32.mrb[0].mxu0
        %1849 = vmatprep.mubr.bf16.mxu0 0
        %1850 = vmatmul.mubr.bf16.gmra.mrb[0].mxu0 %v1807
        %v1851 = vpop.f32.mrb[0].mxu0
        %v1852 = vadd.f32 0.0, %v1851
        %v1853 = vpop.f32.mrb[0].mxu0
        %v1854 = vpop.f32.mrb[0].mxu0
        %v1855 = vadd.f32 0.0, %v1854
        %v1856 = vpop.f32.mrb[0].mxu0
        %1857 = vdwg.mxu0
        %v1858 = vadd.f32 %v1574, %v1844
        %v1859 = vadd.f32 %v1575, %v1847
        %v1860 = vadd.f32 %v1576, %v1852
        %v1861 = vadd.f32 %v1577, %v1855
        %v1862 = vld [vmem:[%s17] sm:$0x1]
        %v1864 = vlaneseq
        %v1865 = vshrl.u32 %v1864, 7
        %v1866 = vsub.s32 0, %v1865
        %v1867 = vrot.slane %v1862, %v1866
        %v1869 = vadd.f32 %v1858, %v1867
        %v1870 = vadd.f32 %v1859, %v1867
        %v1871 = vadd.f32 %v1860, %v1867
        %v1872 = vadd.f32 %v1861, %v1867
        %s1873 = scalar_lea.vmem %s6, 1
        %v1874 = vld [vmem:[%s1873] sm:$0x1]
        %s1875 = scalar_lea.vmem %s7, 1
        %v1876 = vld [vmem:[%s1875] sm:$0x1]
        %v1877 = vsel %vm775, %v1869, 0.0
        %1878 = vadd.xlane.f32.xlu0 %v1877
        %v1879 = vpop.xlane.xlu0 %1878
        %v1880 = vsel %vm775, %v1870, 0.0
        %1881 = vadd.xlane.f32.xlu0 %v1880
        %v1882 = vpop.xlane.xlu0 %1881
        %v1883 = vsel %vm775, %v1871, 0.0
        %1884 = vadd.xlane.f32.xlu0 %v1883
        %v1885 = vpop.xlane.xlu0 %1884
        %v1886 = vsel %vm775, %v1872, 0.0
        %1887 = vadd.xlane.f32.xlu0 %v1886
        %v1888 = vpop.xlane.xlu0 %1887
        %v1889 = vmul.f32 %v1879, %v788
        %v1890 = vmul.f32 %v1882, %v788
        %v1891 = vmul.f32 %v1885, %v788
        %v1892 = vmul.f32 %v1888, %v788
        %v1893 = vsub.f32 %v1869, %v1889
        %v1894 = vsub.f32 %v1870, %v1890
        %v1895 = vsub.f32 %v1871, %v1891
        %v1896 = vsub.f32 %v1872, %v1892
        %v1897 = vmul.f32 %v1893, %v1893
        %v1898 = vmul.f32 %v1894, %v1894
        %v1899 = vmul.f32 %v1895, %v1895
        %v1900 = vmul.f32 %v1896, %v1896
        %v1901 = vsel %vm775, %v1897, 0.0
        %1902 = vadd.xlane.f32.xlu0 %v1901
        %v1903 = vpop.xlane.xlu0 %1902
        %v1904 = vsel %vm775, %v1898, 0.0
        %1905 = vadd.xlane.f32.xlu0 %v1904
        %v1906 = vpop.xlane.xlu0 %1905
        %v1907 = vsel %vm775, %v1899, 0.0
        %1908 = vadd.xlane.f32.xlu0 %v1907
        %v1909 = vpop.xlane.xlu0 %1908
        %v1910 = vsel %vm775, %v1900, 0.0
        %1911 = vadd.xlane.f32.xlu0 %v1910
        %v1912 = vpop.xlane.xlu0 %1911
        %v1913 = vmul.f32 %v1903, %v788
        %v1914 = vmul.f32 %v1906, %v788
        %v1915 = vmul.f32 %v1909, %v788
        %v1916 = vmul.f32 %v1912, %v788
        %v1917 = vadd.f32 %v1913, 1e-05
        %v1918 = vadd.f32 %v1914, 1e-05
        %v1919 = vadd.f32 %v1915, 1e-05
        %v1920 = vadd.f32 %v1916, 1e-05
        %v1921 = vrsqrt.pop %v1917
        %v1922 = vrsqrt.pop %v1918
        %v1923 = vrsqrt.pop %v1919
        %v1924 = vrsqrt.pop %v1920
        %v1925 = vmul.f32 %v1893, %v1921
        %v1926 = vmul.f32 %v1894, %v1922
        %v1927 = vmul.f32 %v1895, %v1923
        %v1928 = vmul.f32 %v1896, %v1924
        %v1930 = vlaneseq
        %v1931 = vshrl.u32 %v1930, 7
        %v1932 = vsub.s32 0, %v1931
        %v1933 = vrot.slane %v1874, %v1932
        %v1935 = vmul.f32 %v1925, %v1933
        %v1936 = vmul.f32 %v1926, %v1933
        %v1937 = vmul.f32 %v1927, %v1933
        %v1938 = vmul.f32 %v1928, %v1933
        %v1940 = vlaneseq
        %v1941 = vshrl.u32 %v1940, 7
        %v1942 = vsub.s32 0, %v1941
        %v1943 = vrot.slane %v1876, %v1942
        %v1945 = vadd.f32 %v1935, %v1943
        %v1946 = vadd.f32 %v1936, %v1943
        %v1947 = vadd.f32 %v1937, %v1943
        %v1948 = vadd.f32 %v1938, %v1943
        %v1949 = vpack.c.bf16 %v1946, %v1945
        %v1950 = vpack.c.bf16 %v1948, %v1947
        %s1951 = scalar_lea.vmem %s8, 16
        %v1952 = vld [vmem:[%s1951] sm:$0xf]
        %v1953 = vld [vmem:[%s1951 + $0x4] sm:$0xf]
        %v1954 = vld [vmem:[%s1951 + $0x8] sm:$0xf]
        %v1955 = vld [vmem:[%s1951 + $0xc] sm:$0xf]
        %s1956 = scalar_lea.vmem %s9, 1
        %v1957 = vld [vmem:[%s1956] sm:$0x1]
        %v1959 = vlaneseq
        %v1960 = vshrl.u32 %v1959, 7
        %v1961 = vsub.s32 0, %v1960
        %v1962 = vrot.slane %v1957, %v1961
        %v1968 = vunpack.c.l.b16 %v1952
        %v1969 = vunpack.c.l.b16 %v1953
        %v1970 = vunpack.c.l.b16 %v1954
        %v1971 = vunpack.c.l.b16 %v1955
        %v1972 = vpack.c.b16 %v1969, %v1968
        %v1973 = vpack.c.b16 %v1971, %v1970
        %v1977 = vsel %vm775, %v1949, 0
        %v1980 = vsel %vm775, %v1950, 0
        %1982 = vmatprep.subr.bf16.mxu0 0
        %1983 = vmatpush1.bf16.msra.mxu0 %v1972
        %1984 = vmatprep.subr.bf16.mxu0 0
        %1985 = vmatpush1.bf16.msra.mxu0 %v1973
        %1986 = vmatprep.subr.bf16.mxu0 0
        %1987 = vmatpush1.bf16.msra.mxu0 0
        %1988 = vmatprep.subr.bf16.mxu0 0
        %1989 = vmatpush1.bf16.msra.mxu0 0
        %1990 = vmatprep.subr.bf16.mxu0 0
        %1991 = vmatpush1.bf16.msra.mxu0 0
        %1992 = vmatprep.subr.bf16.mxu0 0
        %1993 = vmatpush1.bf16.msra.mxu0 0
        %1994 = vmatprep.subr.bf16.mxu0 0
        %1995 = vmatpush1.bf16.msra.mxu0 0
        %1996 = vmatprep.subr.bf16.mxu0 0
        %1997 = vmatpush1.bf16.msra.mxu0 0
        %1998 = vmatprep.subr.bf16.mxu0 0
        %1999 = vmatpush1.bf16.msra.mxu0 0
        %2000 = vmatprep.subr.bf16.mxu0 0
        %2001 = vmatpush1.bf16.msra.mxu0 0
        %2002 = vmatprep.subr.bf16.mxu0 0
        %2003 = vmatpush1.bf16.msra.mxu0 0
        %2004 = vmatprep.subr.bf16.mxu0 0
        %2005 = vmatpush1.bf16.msra.mxu0 0
        %2006 = vmatprep.subr.bf16.mxu0 0
        %2007 = vmatpush1.bf16.msra.mxu0 0
        %2008 = vmatprep.subr.bf16.mxu0 0
        %2009 = vmatpush1.bf16.msra.mxu0 0
        %2010 = vmatprep.subr.bf16.mxu0 0
        %2011 = vmatpush1.bf16.msra.mxu0 0
        %2012 = vmatprep.subr.bf16.mxu0 0
        %2013 = vmatpush1.bf16.msra.mxu0 0
        %2014 = vmatprep.mubr.bf16.mxu0 0
        %2015 = vmatmul.mubr.bf16.gmra.mrb[0].mxu0 %v1977
        %v2016 = vpop.f32.mrb[0].mxu0
        %v2017 = vadd.f32 %v1962, %v2016
        %v2018 = vpop.f32.mrb[0].mxu0
        %v2019 = vpop.f32.mrb[0].mxu0
        %v2020 = vadd.f32 %v1962, %v2019
        %v2021 = vpop.f32.mrb[0].mxu0
        %2022 = vmatprep.mubr.bf16.mxu0 0
        %2023 = vmatmul.mubr.bf16.gmra.mrb[0].mxu0 %v1980
        %v2024 = vpop.f32.mrb[0].mxu0
        %v2025 = vadd.f32 %v1962, %v2024
        %v2026 = vpop.f32.mrb[0].mxu0
        %v2027 = vpop.f32.mrb[0].mxu0
        %v2028 = vadd.f32 %v1962, %v2027
        %v2029 = vpop.f32.mrb[0].mxu0
        %2030 = vdwg.mxu0
        %2035 = vrot.lane.b32.xlu0 %v2017, 112
        %v2036 = vpop.permute.xlu0 %2035
        %2037 = vrot.lane.b32.xlu0 %v2020, 112
        %v2038 = vpop.permute.xlu0 %2037
        %2039 = vrot.lane.b32.xlu0 %v2025, 112
        %v2040 = vpop.permute.xlu0 %2039
        %2041 = vrot.lane.b32.xlu0 %v2028, 112
        %v2042 = vpop.permute.xlu0 %2041
        %v2047 = vpack.c.bf16 %v2020, %v2017
        %v2048 = vpack.c.bf16 %v2028, %v2025
        %v2049 = vpack.c.bf16 %v2038, %v2036
        %v2050 = vpack.c.bf16 %v2042, %v2040
        %2052 = vrot.lane.b32.xlu0 %v2047, 96
        %v2053 = vpop.permute.xlu0 %2052
        %v2055 = vsel %vm952, %v2047, 0
        %v2058 = vsel %vm952, %v2053, 0
        %2060 = vmatprep.subr.bf16.mxu0 0
        %2061 = vmatpush1.bf16.xpose.msra.mxu0 %v2058
        %2062 = vmatprep.subr.bf16.mxu0 0
        %2063 = vmatpush1.bf16.xpose.msra.mxu0 0
        %2064 = vmatprep.subr.bf16.mxu0 0
        %2065 = vmatpush1.bf16.xpose.msra.mxu0 0
        %2066 = vmatprep.subr.bf16.mxu0 0
        %2067 = vmatpush1.bf16.xpose.msra.mxu0 0
        %2068 = vmatprep.subr.bf16.mxu0 0
        %2069 = vmatpush1.bf16.xpose.msra.mxu0 0
        %2070 = vmatprep.subr.bf16.mxu0 0
        %2071 = vmatpush1.bf16.xpose.msra.mxu0 0
        %2072 = vmatprep.subr.bf16.mxu0 0
        %2073 = vmatpush1.bf16.xpose.msra.mxu0 0
        %2074 = vmatprep.subr.bf16.mxu0 0
        %2075 = vmatpush1.bf16.xpose.msra.mxu0 0
        %2076 = vmatprep.subr.bf16.mxu0 0
        %2077 = vmatpush1.bf16.xpose.msra.mxu0 0
        %2078 = vmatprep.subr.bf16.mxu0 0
        %2079 = vmatpush1.bf16.xpose.msra.mxu0 0
        %2080 = vmatprep.subr.bf16.mxu0 0
        %2081 = vmatpush1.bf16.xpose.msra.mxu0 0
        %2082 = vmatprep.subr.bf16.mxu0 0
        %2083 = vmatpush1.bf16.xpose.msra.mxu0 0
        %2084 = vmatprep.subr.bf16.mxu0 0
        %2085 = vmatpush1.bf16.xpose.msra.mxu0 0
        %2086 = vmatprep.subr.bf16.mxu0 0
        %2087 = vmatpush1.bf16.xpose.msra.mxu0 0
        %2088 = vmatprep.subr.bf16.mxu0 0
        %2089 = vmatpush1.bf16.xpose.msra.mxu0 0
        %2090 = vmatprep.subr.bf16.mxu0 0
        %2091 = vmatpush1.bf16.xpose.msra.mxu0 0
        %2092 = vmatprep.mubr.bf16.mxu0 0
        %2093 = vmatmul.mubr.bf16.gmra.mrb[0].mxu0 %v2055
        %v2094 = vpop.f32.mrb[0].mxu0
        %v2095 = vadd.f32 0.0, %v2094
        %v2096 = vpop.f32.mrb[0].mxu0
        %v2097 = vpop.f32.mrb[0].mxu0
        %v2098 = vadd.f32 0.0, %v2097
        %v2099 = vpop.f32.mrb[0].mxu0
        %2100 = vdwg.mxu0
        %2102 = vrot.lane.b32.xlu0 %v2048, 96
        %v2103 = vpop.permute.xlu0 %2102
        %v2105 = vsel %vm952, %v2048, 0
        %v2108 = vsel %vm952, %v2103, 0
        %2110 = vmatprep.subr.bf16.mxu0 0
        %2111 = vmatpush1.bf16.xpose.msra.mxu0 %v2108
        %2112 = vmatprep.subr.bf16.mxu0 0
        %2113 = vmatpush1.bf16.xpose.msra.mxu0 0
        %2114 = vmatprep.subr.bf16.mxu0 0
        %2115 = vmatpush1.bf16.xpose.msra.mxu0 0
        %2116 = vmatprep.subr.bf16.mxu0 0
        %2117 = vmatpush1.bf16.xpose.msra.mxu0 0
        %2118 = vmatprep.subr.bf16.mxu0 0
        %2119 = vmatpush1.bf16.xpose.msra.mxu0 0
        %2120 = vmatprep.subr.bf16.mxu0 0
        %2121 = vmatpush1.bf16.xpose.msra.mxu0 0
        %2122 = vmatprep.subr.bf16.mxu0 0
        %2123 = vmatpush1.bf16.xpose.msra.mxu0 0
        %2124 = vmatprep.subr.bf16.mxu0 0
        %2125 = vmatpush1.bf16.xpose.msra.mxu0 0
        %2126 = vmatprep.subr.bf16.mxu0 0
        %2127 = vmatpush1.bf16.xpose.msra.mxu0 0
        %2128 = vmatprep.subr.bf16.mxu0 0
        %2129 = vmatpush1.bf16.xpose.msra.mxu0 0
        %2130 = vmatprep.subr.bf16.mxu0 0
        %2131 = vmatpush1.bf16.xpose.msra.mxu0 0
        %2132 = vmatprep.subr.bf16.mxu0 0
        %2133 = vmatpush1.bf16.xpose.msra.mxu0 0
        %2134 = vmatprep.subr.bf16.mxu0 0
        %2135 = vmatpush1.bf16.xpose.msra.mxu0 0
        %2136 = vmatprep.subr.bf16.mxu0 0
        %2137 = vmatpush1.bf16.xpose.msra.mxu0 0
        %2138 = vmatprep.subr.bf16.mxu0 0
        %2139 = vmatpush1.bf16.xpose.msra.mxu0 0
        %2140 = vmatprep.subr.bf16.mxu0 0
        %2141 = vmatpush1.bf16.xpose.msra.mxu0 0
        %2142 = vmatprep.mubr.bf16.mxu0 0
        %2143 = vmatmul.mubr.bf16.gmra.mrb[0].mxu0 %v2105
        %v2144 = vpop.f32.mrb[0].mxu0
        %v2145 = vadd.f32 0.0, %v2144
        %v2146 = vpop.f32.mrb[0].mxu0
        %v2147 = vpop.f32.mrb[0].mxu0
        %v2148 = vadd.f32 0.0, %v2147
        %v2149 = vpop.f32.mrb[0].mxu0
        %2150 = vdwg.mxu0
        %2152 = vrot.lane.b32.xlu0 %v2049, 96
        %v2153 = vpop.permute.xlu0 %2152
        %v2155 = vsel %vm952, %v2049, 0
        %v2158 = vsel %vm952, %v2153, 0
        %2160 = vmatprep.subr.bf16.mxu0 0
        %2161 = vmatpush1.bf16.xpose.msra.mxu0 %v2158
        %2162 = vmatprep.subr.bf16.mxu0 0
        %2163 = vmatpush1.bf16.xpose.msra.mxu0 0
        %2164 = vmatprep.subr.bf16.mxu0 0
        %2165 = vmatpush1.bf16.xpose.msra.mxu0 0
        %2166 = vmatprep.subr.bf16.mxu0 0
        %2167 = vmatpush1.bf16.xpose.msra.mxu0 0
        %2168 = vmatprep.subr.bf16.mxu0 0
        %2169 = vmatpush1.bf16.xpose.msra.mxu0 0
        %2170 = vmatprep.subr.bf16.mxu0 0
        %2171 = vmatpush1.bf16.xpose.msra.mxu0 0
        %2172 = vmatprep.subr.bf16.mxu0 0
        %2173 = vmatpush1.bf16.xpose.msra.mxu0 0
        %2174 = vmatprep.subr.bf16.mxu0 0
        %2175 = vmatpush1.bf16.xpose.msra.mxu0 0
        %2176 = vmatprep.subr.bf16.mxu0 0
        %2177 = vmatpush1.bf16.xpose.msra.mxu0 0
        %2178 = vmatprep.subr.bf16.mxu0 0
        %2179 = vmatpush1.bf16.xpose.msra.mxu0 0
        %2180 = vmatprep.subr.bf16.mxu0 0
        %2181 = vmatpush1.bf16.xpose.msra.mxu0 0
        %2182 = vmatprep.subr.bf16.mxu0 0
        %2183 = vmatpush1.bf16.xpose.msra.mxu0 0
        %2184 = vmatprep.subr.bf16.mxu0 0
        %2185 = vmatpush1.bf16.xpose.msra.mxu0 0
        %2186 = vmatprep.subr.bf16.mxu0 0
        %2187 = vmatpush1.bf16.xpose.msra.mxu0 0
        %2188 = vmatprep.subr.bf16.mxu0 0
        %2189 = vmatpush1.bf16.xpose.msra.mxu0 0
        %2190 = vmatprep.subr.bf16.mxu0 0
        %2191 = vmatpush1.bf16.xpose.msra.mxu0 0
        %2192 = vmatprep.mubr.bf16.mxu0 0
        %2193 = vmatmul.mubr.bf16.gmra.mrb[0].mxu0 %v2155
        %v2194 = vpop.f32.mrb[0].mxu0
        %v2195 = vadd.f32 0.0, %v2194
        %v2196 = vpop.f32.mrb[0].mxu0
        %v2197 = vpop.f32.mrb[0].mxu0
        %v2198 = vadd.f32 0.0, %v2197
        %v2199 = vpop.f32.mrb[0].mxu0
        %2200 = vdwg.mxu0
        %2202 = vrot.lane.b32.xlu0 %v2050, 96
        %v2203 = vpop.permute.xlu0 %2202
        %v2205 = vsel %vm952, %v2050, 0
        %v2208 = vsel %vm952, %v2203, 0
        %2210 = vmatprep.subr.bf16.mxu0 0
        %2211 = vmatpush1.bf16.xpose.msra.mxu0 %v2208
        %2212 = vmatprep.subr.bf16.mxu0 0
        %2213 = vmatpush1.bf16.xpose.msra.mxu0 0
        %2214 = vmatprep.subr.bf16.mxu0 0
        %2215 = vmatpush1.bf16.xpose.msra.mxu0 0
        %2216 = vmatprep.subr.bf16.mxu0 0
        %2217 = vmatpush1.bf16.xpose.msra.mxu0 0
        %2218 = vmatprep.subr.bf16.mxu0 0
        %2219 = vmatpush1.bf16.xpose.msra.mxu0 0
        %2220 = vmatprep.subr.bf16.mxu0 0
        %2221 = vmatpush1.bf16.xpose.msra.mxu0 0
        %2222 = vmatprep.subr.bf16.mxu0 0
        %2223 = vmatpush1.bf16.xpose.msra.mxu0 0
        %2224 = vmatprep.subr.bf16.mxu0 0
        %2225 = vmatpush1.bf16.xpose.msra.mxu0 0
        %2226 = vmatprep.subr.bf16.mxu0 0
        %2227 = vmatpush1.bf16.xpose.msra.mxu0 0
        %2228 = vmatprep.subr.bf16.mxu0 0
        %2229 = vmatpush1.bf16.xpose.msra.mxu0 0
        %2230 = vmatprep.subr.bf16.mxu0 0
        %2231 = vmatpush1.bf16.xpose.msra.mxu0 0
        %2232 = vmatprep.subr.bf16.mxu0 0
        %2233 = vmatpush1.bf16.xpose.msra.mxu0 0
        %2234 = vmatprep.subr.bf16.mxu0 0
        %2235 = vmatpush1.bf16.xpose.msra.mxu0 0
        %2236 = vmatprep.subr.bf16.mxu0 0
        %2237 = vmatpush1.bf16.xpose.msra.mxu0 0
        %2238 = vmatprep.subr.bf16.mxu0 0
        %2239 = vmatpush1.bf16.xpose.msra.mxu0 0
        %2240 = vmatprep.subr.bf16.mxu0 0
        %2241 = vmatpush1.bf16.xpose.msra.mxu0 0
        %2242 = vmatprep.mubr.bf16.mxu0 0
        %2243 = vmatmul.mubr.bf16.gmra.mrb[0].mxu0 %v2205
        %v2244 = vpop.f32.mrb[0].mxu0
        %v2245 = vadd.f32 0.0, %v2244
        %v2246 = vpop.f32.mrb[0].mxu0
        %v2247 = vpop.f32.mrb[0].mxu0
        %v2248 = vadd.f32 0.0, %v2247
        %v2249 = vpop.f32.mrb[0].mxu0
        %2250 = vdwg.mxu0
        %v2251 = vmul.f32 %v2095, 0.25
        %v2252 = vmul.f32 %v2098, 0.25
        %v2253 = vmul.f32 %v2145, 0.25
        %v2254 = vmul.f32 %v2148, 0.25
        %v2255 = vmul.f32 %v2195, 0.25
        %v2256 = vmul.f32 %v2198, 0.25
        %v2257 = vmul.f32 %v2245, 0.25
        %v2258 = vmul.f32 %v2248, 0.25
        %v2259 = vadd.f32 %v2251, %v1165
        %v2260 = vadd.f32 %v2252, %v1165
        %v2261 = vadd.f32 %v2253, %v1169
        %v2262 = vadd.f32 %v2254, %v1169
        %v2263 = vadd.f32 %v2255, %v1173
        %v2264 = vadd.f32 %v2256, %v1173
        %v2265 = vadd.f32 %v2257, %v1177
        %v2266 = vadd.f32 %v2258, %v1177
        %v2267 = vsel %vm952, %v2259, -inf
        %2268 = vmax.xlane.f32.xlu0 %v2267
        %v2269 = vpop.xlane.xlu0 %2268
        %v2270 = vsel %vm952, %v2260, -inf
        %2271 = vmax.xlane.f32.xlu0 %v2270
        %v2272 = vpop.xlane.xlu0 %2271
        %v2273 = vsel %vm952, %v2261, -inf
        %2274 = vmax.xlane.f32.xlu0 %v2273
        %v2275 = vpop.xlane.xlu0 %2274
        %v2276 = vsel %vm952, %v2262, -inf
        %2277 = vmax.xlane.f32.xlu0 %v2276
        %v2278 = vpop.xlane.xlu0 %2277
        %v2279 = vsel %vm952, %v2263, -inf
        %2280 = vmax.xlane.f32.xlu0 %v2279
        %v2281 = vpop.xlane.xlu0 %2280
        %v2282 = vsel %vm952, %v2264, -inf
        %2283 = vmax.xlane.f32.xlu0 %v2282
        %v2284 = vpop.xlane.xlu0 %2283
        %v2285 = vsel %vm952, %v2265, -inf
        %2286 = vmax.xlane.f32.xlu0 %v2285
        %v2287 = vpop.xlane.xlu0 %2286
        %v2288 = vsel %vm952, %v2266, -inf
        %2289 = vmax.xlane.f32.xlu0 %v2288
        %v2290 = vpop.xlane.xlu0 %2289
        %v2291 = vsub.f32 %v2259, %v2269
        %v2292 = vsub.f32 %v2260, %v2272
        %v2293 = vsub.f32 %v2261, %v2275
        %v2294 = vsub.f32 %v2262, %v2278
        %v2295 = vsub.f32 %v2263, %v2281
        %v2296 = vsub.f32 %v2264, %v2284
        %v2297 = vsub.f32 %v2265, %v2287
        %v2298 = vsub.f32 %v2266, %v2290
        %v2299 = vmul.f32 %v2291, 1.442695
        %v2300 = vpow.pop %v2299
        %v2301 = vmul.f32 %v2292, 1.442695
        %v2302 = vpow.pop %v2301
        %v2303 = vmul.f32 %v2293, 1.442695
        %v2304 = vpow.pop %v2303
        %v2305 = vmul.f32 %v2294, 1.442695
        %v2306 = vpow.pop %v2305
        %v2307 = vmul.f32 %v2295, 1.442695
        %v2308 = vpow.pop %v2307
        %v2309 = vmul.f32 %v2296, 1.442695
        %v2310 = vpow.pop %v2309
        %v2311 = vmul.f32 %v2297, 1.442695
        %v2312 = vpow.pop %v2311
        %v2313 = vmul.f32 %v2298, 1.442695
        %v2314 = vpow.pop %v2313
        %v2315 = vsel %vm952, %v2300, 0.0
        %2316 = vadd.xlane.f32.xlu0 %v2315
        %v2317 = vpop.xlane.xlu0 %2316
        %v2318 = vsel %vm952, %v2302, 0.0
        %2319 = vadd.xlane.f32.xlu0 %v2318
        %v2320 = vpop.xlane.xlu0 %2319
        %v2321 = vsel %vm952, %v2304, 0.0
        %2322 = vadd.xlane.f32.xlu0 %v2321
        %v2323 = vpop.xlane.xlu0 %2322
        %v2324 = vsel %vm952, %v2306, 0.0
        %2325 = vadd.xlane.f32.xlu0 %v2324
        %v2326 = vpop.xlane.xlu0 %2325
        %v2327 = vsel %vm952, %v2308, 0.0
        %2328 = vadd.xlane.f32.xlu0 %v2327
        %v2329 = vpop.xlane.xlu0 %2328
        %v2330 = vsel %vm952, %v2310, 0.0
        %2331 = vadd.xlane.f32.xlu0 %v2330
        %v2332 = vpop.xlane.xlu0 %2331
        %v2333 = vsel %vm952, %v2312, 0.0
        %2334 = vadd.xlane.f32.xlu0 %v2333
        %v2335 = vpop.xlane.xlu0 %2334
        %v2336 = vsel %vm952, %v2314, 0.0
        %2337 = vadd.xlane.f32.xlu0 %v2336
        %v2338 = vpop.xlane.xlu0 %2337
        %v2339 = vrcp.pop %v2317
        %v2340 = vrcp.pop %v2320
        %v2341 = vrcp.pop %v2323
        %v2342 = vrcp.pop %v2326
        %v2343 = vrcp.pop %v2329
        %v2344 = vrcp.pop %v2332
        %v2345 = vrcp.pop %v2335
        %v2346 = vrcp.pop %v2338
        %v2347 = vmul.f32 %v2300, %v2339
        %v2348 = vmul.f32 %v2302, %v2340
        %v2349 = vmul.f32 %v2304, %v2341
        %v2350 = vmul.f32 %v2306, %v2342
        %v2351 = vmul.f32 %v2308, %v2343
        %v2352 = vmul.f32 %v2310, %v2344
        %v2353 = vmul.f32 %v2312, %v2345
        %v2354 = vmul.f32 %v2314, %v2346
        %v2355 = vpack.c.bf16 %v2348, %v2347
        %v2356 = vpack.c.bf16 %v2350, %v2349
        %v2357 = vpack.c.bf16 %v2352, %v2351
        %v2358 = vpack.c.bf16 %v2354, %v2353
        %2359 = vrot.lane.b32.xlu0 %v2047, 64
        %v2360 = vpop.permute.xlu0 %2359
        %v2363 = vsel %vm952, %v2355, 0
        %2365 = vmatprep.subr.bf16.mxu0 0
        %2366 = vmatpush1.bf16.msra.mxu0 %v2360
        %2367 = vmatprep.subr.bf16.mxu0 0
        %2368 = vmatpush1.bf16.msra.mxu0 0
        %2369 = vmatprep.subr.bf16.mxu0 0
        %2370 = vmatpush1.bf16.msra.mxu0 0
        %2371 = vmatprep.subr.bf16.mxu0 0
        %2372 = vmatpush1.bf16.msra.mxu0 0
        %2373 = vmatprep.subr.bf16.mxu0 0
        %2374 = vmatpush1.bf16.msra.mxu0 0
        %2375 = vmatprep.subr.bf16.mxu0 0
        %2376 = vmatpush1.bf16.msra.mxu0 0
        %2377 = vmatprep.subr.bf16.mxu0 0
        %2378 = vmatpush1.bf16.msra.mxu0 0
        %2379 = vmatprep.subr.bf16.mxu0 0
        %2380 = vmatpush1.bf16.msra.mxu0 0
        %2381 = vmatprep.subr.bf16.mxu0 0
        %2382 = vmatpush1.bf16.msra.mxu0 0
        %2383 = vmatprep.subr.bf16.mxu0 0
        %2384 = vmatpush1.bf16.msra.mxu0 0
        %2385 = vmatprep.subr.bf16.mxu0 0
        %2386 = vmatpush1.bf16.msra.mxu0 0
        %2387 = vmatprep.subr.bf16.mxu0 0
        %2388 = vmatpush1.bf16.msra.mxu0 0
        %2389 = vmatprep.subr.bf16.mxu0 0
        %2390 = vmatpush1.bf16.msra.mxu0 0
        %2391 = vmatprep.subr.bf16.mxu0 0
        %2392 = vmatpush1.bf16.msra.mxu0 0
        %2393 = vmatprep.subr.bf16.mxu0 0
        %2394 = vmatpush1.bf16.msra.mxu0 0
        %2395 = vmatprep.subr.bf16.mxu0 0
        %2396 = vmatpush1.bf16.msra.mxu0 0
        %2397 = vmatprep.mubr.bf16.mxu0 0
        %2398 = vmatmul.mubr.bf16.gmra.mrb[0].mxu0 %v2363
        %v2399 = vpop.f32.mrb[0].mxu0
        %v2400 = vadd.f32 0.0, %v2399
        %v2401 = vpop.f32.mrb[0].mxu0
        %v2402 = vpop.f32.mrb[0].mxu0
        %v2403 = vadd.f32 0.0, %v2402
        %v2404 = vpop.f32.mrb[0].mxu0
        %2405 = vdwg.mxu0
        %2406 = vrot.lane.b32.xlu0 %v2048, 64
        %v2407 = vpop.permute.xlu0 %2406
        %v2410 = vsel %vm952, %v2356, 0
        %2412 = vmatprep.subr.bf16.mxu0 0
        %2413 = vmatpush1.bf16.msra.mxu0 %v2407
        %2414 = vmatprep.subr.bf16.mxu0 0
        %2415 = vmatpush1.bf16.msra.mxu0 0
        %2416 = vmatprep.subr.bf16.mxu0 0
        %2417 = vmatpush1.bf16.msra.mxu0 0
        %2418 = vmatprep.subr.bf16.mxu0 0
        %2419 = vmatpush1.bf16.msra.mxu0 0
        %2420 = vmatprep.subr.bf16.mxu0 0
        %2421 = vmatpush1.bf16.msra.mxu0 0
        %2422 = vmatprep.subr.bf16.mxu0 0
        %2423 = vmatpush1.bf16.msra.mxu0 0
        %2424 = vmatprep.subr.bf16.mxu0 0
        %2425 = vmatpush1.bf16.msra.mxu0 0
        %2426 = vmatprep.subr.bf16.mxu0 0
        %2427 = vmatpush1.bf16.msra.mxu0 0
        %2428 = vmatprep.subr.bf16.mxu0 0
        %2429 = vmatpush1.bf16.msra.mxu0 0
        %2430 = vmatprep.subr.bf16.mxu0 0
        %2431 = vmatpush1.bf16.msra.mxu0 0
        %2432 = vmatprep.subr.bf16.mxu0 0
        %2433 = vmatpush1.bf16.msra.mxu0 0
        %2434 = vmatprep.subr.bf16.mxu0 0
        %2435 = vmatpush1.bf16.msra.mxu0 0
        %2436 = vmatprep.subr.bf16.mxu0 0
        %2437 = vmatpush1.bf16.msra.mxu0 0
        %2438 = vmatprep.subr.bf16.mxu0 0
        %2439 = vmatpush1.bf16.msra.mxu0 0
        %2440 = vmatprep.subr.bf16.mxu0 0
        %2441 = vmatpush1.bf16.msra.mxu0 0
        %2442 = vmatprep.subr.bf16.mxu0 0
        %2443 = vmatpush1.bf16.msra.mxu0 0
        %2444 = vmatprep.mubr.bf16.mxu0 0
        %2445 = vmatmul.mubr.bf16.gmra.mrb[0].mxu0 %v2410
        %v2446 = vpop.f32.mrb[0].mxu0
        %v2447 = vadd.f32 0.0, %v2446
        %v2448 = vpop.f32.mrb[0].mxu0
        %v2449 = vpop.f32.mrb[0].mxu0
        %v2450 = vadd.f32 0.0, %v2449
        %v2451 = vpop.f32.mrb[0].mxu0
        %2452 = vdwg.mxu0
        %2453 = vrot.lane.b32.xlu0 %v2049, 64
        %v2454 = vpop.permute.xlu0 %2453
        %v2457 = vsel %vm952, %v2357, 0
        %2459 = vmatprep.subr.bf16.mxu0 0
        %2460 = vmatpush1.bf16.msra.mxu0 %v2454
        %2461 = vmatprep.subr.bf16.mxu0 0
        %2462 = vmatpush1.bf16.msra.mxu0 0
        %2463 = vmatprep.subr.bf16.mxu0 0
        %2464 = vmatpush1.bf16.msra.mxu0 0
        %2465 = vmatprep.subr.bf16.mxu0 0
        %2466 = vmatpush1.bf16.msra.mxu0 0
        %2467 = vmatprep.subr.bf16.mxu0 0
        %2468 = vmatpush1.bf16.msra.mxu0 0
        %2469 = vmatprep.subr.bf16.mxu0 0
        %2470 = vmatpush1.bf16.msra.mxu0 0
        %2471 = vmatprep.subr.bf16.mxu0 0
        %2472 = vmatpush1.bf16.msra.mxu0 0
        %2473 = vmatprep.subr.bf16.mxu0 0
        %2474 = vmatpush1.bf16.msra.mxu0 0
        %2475 = vmatprep.subr.bf16.mxu0 0
        %2476 = vmatpush1.bf16.msra.mxu0 0
        %2477 = vmatprep.subr.bf16.mxu0 0
        %2478 = vmatpush1.bf16.msra.mxu0 0
        %2479 = vmatprep.subr.bf16.mxu0 0
        %2480 = vmatpush1.bf16.msra.mxu0 0
        %2481 = vmatprep.subr.bf16.mxu0 0
        %2482 = vmatpush1.bf16.msra.mxu0 0
        %2483 = vmatprep.subr.bf16.mxu0 0
        %2484 = vmatpush1.bf16.msra.mxu0 0
        %2485 = vmatprep.subr.bf16.mxu0 0
        %2486 = vmatpush1.bf16.msra.mxu0 0
        %2487 = vmatprep.subr.bf16.mxu0 0
        %2488 = vmatpush1.bf16.msra.mxu0 0
        %2489 = vmatprep.subr.bf16.mxu0 0
        %2490 = vmatpush1.bf16.msra.mxu0 0
        %2491 = vmatprep.mubr.bf16.mxu0 0
        %2492 = vmatmul.mubr.bf16.gmra.mrb[0].mxu0 %v2457
        %v2493 = vpop.f32.mrb[0].mxu0
        %v2494 = vadd.f32 0.0, %v2493
        %v2495 = vpop.f32.mrb[0].mxu0
        %v2496 = vpop.f32.mrb[0].mxu0
        %v2497 = vadd.f32 0.0, %v2496
        %v2498 = vpop.f32.mrb[0].mxu0
        %2499 = vdwg.mxu0
        %2500 = vrot.lane.b32.xlu0 %v2050, 64
        %v2501 = vpop.permute.xlu0 %2500
        %v2504 = vsel %vm952, %v2358, 0
        %2506 = vmatprep.subr.bf16.mxu0 0
        %2507 = vmatpush1.bf16.msra.mxu0 %v2501
        %2508 = vmatprep.subr.bf16.mxu0 0
        %2509 = vmatpush1.bf16.msra.mxu0 0
        %2510 = vmatprep.subr.bf16.mxu0 0
        %2511 = vmatpush1.bf16.msra.mxu0 0
        %2512 = vmatprep.subr.bf16.mxu0 0
        %2513 = vmatpush1.bf16.msra.mxu0 0
        %2514 = vmatprep.subr.bf16.mxu0 0
        %2515 = vmatpush1.bf16.msra.mxu0 0
        %2516 = vmatprep.subr.bf16.mxu0 0
        %2517 = vmatpush1.bf16.msra.mxu0 0
        %2518 = vmatprep.subr.bf16.mxu0 0
        %2519 = vmatpush1.bf16.msra.mxu0 0
        %2520 = vmatprep.subr.bf16.mxu0 0
        %2521 = vmatpush1.bf16.msra.mxu0 0
        %2522 = vmatprep.subr.bf16.mxu0 0
        %2523 = vmatpush1.bf16.msra.mxu0 0
        %2524 = vmatprep.subr.bf16.mxu0 0
        %2525 = vmatpush1.bf16.msra.mxu0 0
        %2526 = vmatprep.subr.bf16.mxu0 0
        %2527 = vmatpush1.bf16.msra.mxu0 0
        %2528 = vmatprep.subr.bf16.mxu0 0
        %2529 = vmatpush1.bf16.msra.mxu0 0
        %2530 = vmatprep.subr.bf16.mxu0 0
        %2531 = vmatpush1.bf16.msra.mxu0 0
        %2532 = vmatprep.subr.bf16.mxu0 0
        %2533 = vmatpush1.bf16.msra.mxu0 0
        %2534 = vmatprep.subr.bf16.mxu0 0
        %2535 = vmatpush1.bf16.msra.mxu0 0
        %2536 = vmatprep.subr.bf16.mxu0 0
        %2537 = vmatpush1.bf16.msra.mxu0 0
        %2538 = vmatprep.mubr.bf16.mxu0 0
        %2539 = vmatmul.mubr.bf16.gmra.mrb[0].mxu0 %v2504
        %v2540 = vpop.f32.mrb[0].mxu0
        %v2541 = vadd.f32 0.0, %v2540
        %v2542 = vpop.f32.mrb[0].mxu0
        %v2543 = vpop.f32.mrb[0].mxu0
        %v2544 = vadd.f32 0.0, %v2543
        %v2545 = vpop.f32.mrb[0].mxu0
        %2546 = vdwg.mxu0
        %2551 = vrot.lane.b32.xlu0 %v2494, 16
        %v2552 = vpop.permute.xlu0 %2551
        %2553 = vrot.lane.b32.xlu0 %v2497, 16
        %v2554 = vpop.permute.xlu0 %2553
        %2555 = vrot.lane.b32.xlu0 %v2541, 16
        %v2556 = vpop.permute.xlu0 %2555
        %2557 = vrot.lane.b32.xlu0 %v2544, 16
        %v2558 = vpop.permute.xlu0 %2557
        %v2563 = vsel %vm952, %v2400, %v2552
        %v2564 = vsel %vm952, %v2403, %v2554
        %v2565 = vsel %vm952, %v2447, %v2556
        %v2566 = vsel %vm952, %v2450, %v2558
        %v2567 = vpack.c.bf16 %v2564, %v2563
        %v2568 = vpack.c.bf16 %v2566, %v2565
        %s2569 = scalar_lea.vmem %s10, 16
        %v2570 = vld [vmem:[%s2569] sm:$0xf]
        %v2571 = vld [vmem:[%s2569 + $0x4] sm:$0xf]
        %v2572 = vld [vmem:[%s2569 + $0x8] sm:$0xf]
        %v2573 = vld [vmem:[%s2569 + $0xc] sm:$0xf]
        %v2578 = vunpack.c.l.b16 %v2570
        %v2579 = vunpack.c.l.b16 %v2571
        %v2580 = vunpack.c.l.b16 %v2572
        %v2581 = vunpack.c.l.b16 %v2573
        %v2582 = vpack.c.b16 %v2579, %v2578
        %v2583 = vpack.c.b16 %v2581, %v2580
        %v2587 = vsel %vm775, %v2567, 0
        %v2590 = vsel %vm775, %v2568, 0
        %2592 = vmatprep.subr.bf16.mxu0 0
        %2593 = vmatpush1.bf16.msra.mxu0 %v2582
        %2594 = vmatprep.subr.bf16.mxu0 0
        %2595 = vmatpush1.bf16.msra.mxu0 %v2583
        %2596 = vmatprep.subr.bf16.mxu0 0
        %2597 = vmatpush1.bf16.msra.mxu0 0
        %2598 = vmatprep.subr.bf16.mxu0 0
        %2599 = vmatpush1.bf16.msra.mxu0 0
        %2600 = vmatprep.subr.bf16.mxu0 0
        %2601 = vmatpush1.bf16.msra.mxu0 0
        %2602 = vmatprep.subr.bf16.mxu0 0
        %2603 = vmatpush1.bf16.msra.mxu0 0
        %2604 = vmatprep.subr.bf16.mxu0 0
        %2605 = vmatpush1.bf16.msra.mxu0 0
        %2606 = vmatprep.subr.bf16.mxu0 0
        %2607 = vmatpush1.bf16.msra.mxu0 0
        %2608 = vmatprep.subr.bf16.mxu0 0
        %2609 = vmatpush1.bf16.msra.mxu0 0
        %2610 = vmatprep.subr.bf16.mxu0 0
        %2611 = vmatpush1.bf16.msra.mxu0 0
        %2612 = vmatprep.subr.bf16.mxu0 0
        %2613 = vmatpush1.bf16.msra.mxu0 0
        %2614 = vmatprep.subr.bf16.mxu0 0
        %2615 = vmatpush1.bf16.msra.mxu0 0
        %2616 = vmatprep.subr.bf16.mxu0 0
        %2617 = vmatpush1.bf16.msra.mxu0 0
        %2618 = vmatprep.subr.bf16.mxu0 0
        %2619 = vmatpush1.bf16.msra.mxu0 0
        %2620 = vmatprep.subr.bf16.mxu0 0
        %2621 = vmatpush1.bf16.msra.mxu0 0
        %2622 = vmatprep.subr.bf16.mxu0 0
        %2623 = vmatpush1.bf16.msra.mxu0 0
        %2624 = vmatprep.mubr.bf16.mxu0 0
        %2625 = vmatmul.mubr.bf16.gmra.mrb[0].mxu0 %v2587
        %v2626 = vpop.f32.mrb[0].mxu0
        %v2627 = vadd.f32 0.0, %v2626
        %v2628 = vpop.f32.mrb[0].mxu0
        %v2629 = vpop.f32.mrb[0].mxu0
        %v2630 = vadd.f32 0.0, %v2629
        %v2631 = vpop.f32.mrb[0].mxu0
        %2632 = vmatprep.mubr.bf16.mxu0 0
        %2633 = vmatmul.mubr.bf16.gmra.mrb[0].mxu0 %v2590
        %v2634 = vpop.f32.mrb[0].mxu0
        %v2635 = vadd.f32 0.0, %v2634
        %v2636 = vpop.f32.mrb[0].mxu0
        %v2637 = vpop.f32.mrb[0].mxu0
        %v2638 = vadd.f32 0.0, %v2637
        %v2639 = vpop.f32.mrb[0].mxu0
        %2640 = vdwg.mxu0
        %v2641 = vadd.f32 %v1869, %v2627
        %v2642 = vadd.f32 %v1870, %v2630
        %v2643 = vadd.f32 %v1871, %v2635
        %v2644 = vadd.f32 %v1872, %v2638
        %s2645 = scalar_lea.vmem %s11, 1
        %v2646 = vld [vmem:[%s2645] sm:$0x1]
        %v2648 = vlaneseq
        %v2649 = vshrl.u32 %v2648, 7
        %v2650 = vsub.s32 0, %v2649
        %v2651 = vrot.slane %v2646, %v2650
        %v2653 = vadd.f32 %v2641, %v2651
        %v2654 = vadd.f32 %v2642, %v2651
        %v2655 = vadd.f32 %v2643, %v2651
        %v2656 = vadd.f32 %v2644, %v2651
        %s2657 = scalar_lea.vmem %s12, 1
        %v2658 = vld [vmem:[%s2657] sm:$0x1]
        %s2659 = scalar_lea.vmem %s13, 1
        %v2660 = vld [vmem:[%s2659] sm:$0x1]
        %v2661 = vsel %vm775, %v2653, 0.0
        %2662 = vadd.xlane.f32.xlu0 %v2661
        %v2663 = vpop.xlane.xlu0 %2662
        %v2664 = vsel %vm775, %v2654, 0.0
        %2665 = vadd.xlane.f32.xlu0 %v2664
        %v2666 = vpop.xlane.xlu0 %2665
        %v2667 = vsel %vm775, %v2655, 0.0
        %2668 = vadd.xlane.f32.xlu0 %v2667
        %v2669 = vpop.xlane.xlu0 %2668
        %v2670 = vsel %vm775, %v2656, 0.0
        %2671 = vadd.xlane.f32.xlu0 %v2670
        %v2672 = vpop.xlane.xlu0 %2671
        %v2673 = vmul.f32 %v2663, %v788
        %v2674 = vmul.f32 %v2666, %v788
        %v2675 = vmul.f32 %v2669, %v788
        %v2676 = vmul.f32 %v2672, %v788
        %v2677 = vsub.f32 %v2653, %v2673
        %v2678 = vsub.f32 %v2654, %v2674
        %v2679 = vsub.f32 %v2655, %v2675
        %v2680 = vsub.f32 %v2656, %v2676
        %v2681 = vmul.f32 %v2677, %v2677
        %v2682 = vmul.f32 %v2678, %v2678
        %v2683 = vmul.f32 %v2679, %v2679
        %v2684 = vmul.f32 %v2680, %v2680
        %v2685 = vsel %vm775, %v2681, 0.0
        %2686 = vadd.xlane.f32.xlu0 %v2685
        %v2687 = vpop.xlane.xlu0 %2686
        %v2688 = vsel %vm775, %v2682, 0.0
        %2689 = vadd.xlane.f32.xlu0 %v2688
        %v2690 = vpop.xlane.xlu0 %2689
        %v2691 = vsel %vm775, %v2683, 0.0
        %2692 = vadd.xlane.f32.xlu0 %v2691
        %v2693 = vpop.xlane.xlu0 %2692
        %v2694 = vsel %vm775, %v2684, 0.0
        %2695 = vadd.xlane.f32.xlu0 %v2694
        %v2696 = vpop.xlane.xlu0 %2695
        %v2697 = vmul.f32 %v2687, %v788
        %v2698 = vmul.f32 %v2690, %v788
        %v2699 = vmul.f32 %v2693, %v788
        %v2700 = vmul.f32 %v2696, %v788
        %v2701 = vadd.f32 %v2697, 1e-05
        %v2702 = vadd.f32 %v2698, 1e-05
        %v2703 = vadd.f32 %v2699, 1e-05
        %v2704 = vadd.f32 %v2700, 1e-05
        %v2705 = vrsqrt.pop %v2701
        %v2706 = vrsqrt.pop %v2702
        %v2707 = vrsqrt.pop %v2703
        %v2708 = vrsqrt.pop %v2704
        %v2709 = vmul.f32 %v2677, %v2705
        %v2710 = vmul.f32 %v2678, %v2706
        %v2711 = vmul.f32 %v2679, %v2707
        %v2712 = vmul.f32 %v2680, %v2708
        %v2714 = vlaneseq
        %v2715 = vshrl.u32 %v2714, 7
        %v2716 = vsub.s32 0, %v2715
        %v2717 = vrot.slane %v2658, %v2716
        %v2719 = vmul.f32 %v2709, %v2717
        %v2720 = vmul.f32 %v2710, %v2717
        %v2721 = vmul.f32 %v2711, %v2717
        %v2722 = vmul.f32 %v2712, %v2717
        %v2724 = vlaneseq
        %v2725 = vshrl.u32 %v2724, 7
        %v2726 = vsub.s32 0, %v2725
        %v2727 = vrot.slane %v2660, %v2726
        %v2729 = vadd.f32 %v2719, %v2727
        %v2730 = vadd.f32 %v2720, %v2727
        %v2731 = vadd.f32 %v2721, %v2727
        %v2732 = vadd.f32 %v2722, %v2727
        %v2733 = vpack.c.bf16 %v2730, %v2729
        %v2734 = vpack.c.bf16 %v2732, %v2731
        %s2735 = scalar_lea.vmem %s14, 16
        %v2736 = vld [vmem:[%s2735] sm:$0xf]
        %v2737 = vld [vmem:[%s2735 + $0x4] sm:$0xf]
        %v2738 = vld [vmem:[%s2735 + $0x8] sm:$0xf]
        %v2739 = vld [vmem:[%s2735 + $0xc] sm:$0xf]
        %s2740 = scalar_lea.vmem %s15, 1
        %v2741 = vld [vmem:[%s2740] sm:$0x1]
        %v2743 = vlaneseq
        %v2744 = vshrl.u32 %v2743, 7
        %v2745 = vsub.s32 0, %v2744
        %v2746 = vrot.slane %v2741, %v2745
        %v2752 = vunpack.c.l.b16 %v2736
        %v2753 = vunpack.c.l.b16 %v2737
        %v2754 = vunpack.c.l.b16 %v2738
        %v2755 = vunpack.c.l.b16 %v2739
        %v2756 = vpack.c.b16 %v2753, %v2752
        %v2757 = vpack.c.b16 %v2755, %v2754
        %v2761 = vsel %vm775, %v2733, 0
        %v2764 = vsel %vm775, %v2734, 0
        %2766 = vmatprep.subr.bf16.mxu0 0
        %2767 = vmatpush1.bf16.msra.mxu0 %v2756
        %2768 = vmatprep.subr.bf16.mxu0 0
        %2769 = vmatpush1.bf16.msra.mxu0 %v2757
        %2770 = vmatprep.subr.bf16.mxu0 0
        %2771 = vmatpush1.bf16.msra.mxu0 0
        %2772 = vmatprep.subr.bf16.mxu0 0
        %2773 = vmatpush1.bf16.msra.mxu0 0
        %2774 = vmatprep.subr.bf16.mxu0 0
        %2775 = vmatpush1.bf16.msra.mxu0 0
        %2776 = vmatprep.subr.bf16.mxu0 0
        %2777 = vmatpush1.bf16.msra.mxu0 0
        %2778 = vmatprep.subr.bf16.mxu0 0
        %2779 = vmatpush1.bf16.msra.mxu0 0
        %2780 = vmatprep.subr.bf16.mxu0 0
        %2781 = vmatpush1.bf16.msra.mxu0 0
        %2782 = vmatprep.subr.bf16.mxu0 0
        %2783 = vmatpush1.bf16.msra.mxu0 0
        %2784 = vmatprep.subr.bf16.mxu0 0
        %2785 = vmatpush1.bf16.msra.mxu0 0
        %2786 = vmatprep.subr.bf16.mxu0 0
        %2787 = vmatpush1.bf16.msra.mxu0 0
        %2788 = vmatprep.subr.bf16.mxu0 0
        %2789 = vmatpush1.bf16.msra.mxu0 0
        %2790 = vmatprep.subr.bf16.mxu0 0
        %2791 = vmatpush1.bf16.msra.mxu0 0
        %2792 = vmatprep.subr.bf16.mxu0 0
        %2793 = vmatpush1.bf16.msra.mxu0 0
        %2794 = vmatprep.subr.bf16.mxu0 0
        %2795 = vmatpush1.bf16.msra.mxu0 0
        %2796 = vmatprep.subr.bf16.mxu0 0
        %2797 = vmatpush1.bf16.msra.mxu0 0
        %2798 = vmatprep.mubr.bf16.mxu0 0
        %2799 = vmatmul.mubr.bf16.gmra.mrb[0].mxu0 %v2761
        %v2800 = vpop.f32.mrb[0].mxu0
        %v2801 = vadd.f32 %v2746, %v2800
        %v2802 = vpop.f32.mrb[0].mxu0
        %v2803 = vpop.f32.mrb[0].mxu0
        %v2804 = vadd.f32 %v2746, %v2803
        %v2805 = vpop.f32.mrb[0].mxu0
        %2806 = vmatprep.mubr.bf16.mxu0 0
        %2807 = vmatmul.mubr.bf16.gmra.mrb[0].mxu0 %v2764
        %v2808 = vpop.f32.mrb[0].mxu0
        %v2809 = vadd.f32 %v2746, %v2808
        %v2810 = vpop.f32.mrb[0].mxu0
        %v2811 = vpop.f32.mrb[0].mxu0
        %v2812 = vadd.f32 %v2746, %v2811
        %v2813 = vpop.f32.mrb[0].mxu0
        %2814 = vdwg.mxu0
        %v2815 = vmul.f32 %v2801, %v2801
        %v2816 = vmul.f32 %v2804, %v2804
        %v2817 = vmul.f32 %v2809, %v2809
        %v2818 = vmul.f32 %v2812, %v2812
        %v2819 = vmul.f32 %v2801, %v2815
        %v2820 = vmul.f32 %v2804, %v2816
        %v2821 = vmul.f32 %v2809, %v2817
        %v2822 = vmul.f32 %v2812, %v2818
        %v2823 = vmul.f32 %v2819, 0.044715
        %v2824 = vmul.f32 %v2820, 0.044715
        %v2825 = vmul.f32 %v2821, 0.044715
        %v2826 = vmul.f32 %v2822, 0.044715
        %v2827 = vadd.f32 %v2801, %v2823
        %v2828 = vadd.f32 %v2804, %v2824
        %v2829 = vadd.f32 %v2809, %v2825
        %v2830 = vadd.f32 %v2812, %v2826
        %v2831 = vmul.f32 %v2827, 0.7978846
        %v2832 = vmul.f32 %v2828, 0.7978846
        %v2833 = vmul.f32 %v2829, 0.7978846
        %v2834 = vmul.f32 %v2830, 0.7978846
        %v2835 = vtanh.pop %v2831
        %v2836 = vtanh.pop %v2832
        %v2837 = vtanh.pop %v2833
        %v2838 = vtanh.pop %v2834
        %v2839 = vadd.f32 %v2835, 1.0
        %v2840 = vadd.f32 %v2836, 1.0
        %v2841 = vadd.f32 %v2837, 1.0
        %v2842 = vadd.f32 %v2838, 1.0
        %v2843 = vmul.f32 %v2839, 0.5
        %v2844 = vmul.f32 %v2840, 0.5
        %v2845 = vmul.f32 %v2841, 0.5
        %v2846 = vmul.f32 %v2842, 0.5
        %v2847 = vmul.f32 %v2801, %v2843
        %v2848 = vmul.f32 %v2804, %v2844
        %v2849 = vmul.f32 %v2809, %v2845
        %v2850 = vmul.f32 %v2812, %v2846
        %v2851 = vpack.c.bf16 %v2848, %v2847
        %v2852 = vpack.c.bf16 %v2850, %v2849
        %s2853 = scalar_lea.vmem %s16, 32
        %v2854 = vld [vmem:[%s2853] sm:$0xf]
        %v2855 = vld [vmem:[%s2853 + $0x4] sm:$0xf]
        %v2856 = vld [vmem:[%s2853 + $0x8] sm:$0xf]
        %v2857 = vld [vmem:[%s2853 + $0xc] sm:$0xf]
        %v2858 = vld [vmem:[%s2853 + $0x10] sm:$0xf]
        %v2859 = vld [vmem:[%s2853 + $0x14] sm:$0xf]
        %v2860 = vld [vmem:[%s2853 + $0x18] sm:$0xf]
        %v2861 = vld [vmem:[%s2853 + $0x1c] sm:$0xf]
        %v2870 = vunpack.c.l.b16 %v2854
        %v2871 = vunpack.c.l.b16 %v2855
        %v2872 = vunpack.c.l.b16 %v2856
        %v2873 = vunpack.c.l.b16 %v2857
        %v2874 = vunpack.c.l.b16 %v2858
        %v2875 = vunpack.c.l.b16 %v2859
        %v2876 = vunpack.c.l.b16 %v2860
        %v2877 = vunpack.c.l.b16 %v2861
        %v2878 = vpack.c.b16 %v2871, %v2870
        %v2879 = vpack.c.b16 %v2873, %v2872
        %v2880 = vpack.c.b16 %v2875, %v2874
        %v2881 = vpack.c.b16 %v2877, %v2876
        %v2887 = vsel %vm1802, %v2851, 0
        %v2890 = vsel %vm1802, %v2852, 0
        %2892 = vmatprep.subr.bf16.mxu0 0
        %2893 = vmatpush1.bf16.msra.mxu0 %v2878
        %2894 = vmatprep.subr.bf16.mxu0 0
        %2895 = vmatpush1.bf16.msra.mxu0 %v2879
        %2896 = vmatprep.subr.bf16.mxu0 0
        %2897 = vmatpush1.bf16.msra.mxu0 %v2880
        %2898 = vmatprep.subr.bf16.mxu0 0
        %2899 = vmatpush1.bf16.msra.mxu0 %v2881
        %2900 = vmatprep.subr.bf16.mxu0 0
        %2901 = vmatpush1.bf16.msra.mxu0 0
        %2902 = vmatprep.subr.bf16.mxu0 0
        %2903 = vmatpush1.bf16.msra.mxu0 0
        %2904 = vmatprep.subr.bf16.mxu0 0
        %2905 = vmatpush1.bf16.msra.mxu0 0
        %2906 = vmatprep.subr.bf16.mxu0 0
        %2907 = vmatpush1.bf16.msra.mxu0 0
        %2908 = vmatprep.subr.bf16.mxu0 0
        %2909 = vmatpush1.bf16.msra.mxu0 0
        %2910 = vmatprep.subr.bf16.mxu0 0
        %2911 = vmatpush1.bf16.msra.mxu0 0
        %2912 = vmatprep.subr.bf16.mxu0 0
        %2913 = vmatpush1.bf16.msra.mxu0 0
        %2914 = vmatprep.subr.bf16.mxu0 0
        %2915 = vmatpush1.bf16.msra.mxu0 0
        %2916 = vmatprep.subr.bf16.mxu0 0
        %2917 = vmatpush1.bf16.msra.mxu0 0
        %2918 = vmatprep.subr.bf16.mxu0 0
        %2919 = vmatpush1.bf16.msra.mxu0 0
        %2920 = vmatprep.subr.bf16.mxu0 0
        %2921 = vmatpush1.bf16.msra.mxu0 0
        %2922 = vmatprep.subr.bf16.mxu0 0
        %2923 = vmatpush1.bf16.msra.mxu0 0
        %2924 = vmatprep.mubr.bf16.mxu0 0
        %2925 = vmatmul.mubr.bf16.gmra.mrb[0].mxu0 %v2887
        %v2926 = vpop.f32.mrb[0].mxu0
        %v2927 = vadd.f32 0.0, %v2926
        %v2928 = vpop.f32.mrb[0].mxu0
        %v2929 = vpop.f32.mrb[0].mxu0
        %v2930 = vadd.f32 0.0, %v2929
        %v2931 = vpop.f32.mrb[0].mxu0
        %2932 = vmatprep.mubr.bf16.mxu0 0
        %2933 = vmatmul.mubr.bf16.gmra.mrb[0].mxu0 %v2890
        %v2934 = vpop.f32.mrb[0].mxu0
        %v2935 = vadd.f32 0.0, %v2934
        %v2936 = vpop.f32.mrb[0].mxu0
        %v2937 = vpop.f32.mrb[0].mxu0
        %v2938 = vadd.f32 0.0, %v2937
        %v2939 = vpop.f32.mrb[0].mxu0
        %2940 = vdwg.mxu0
        %v2941 = vadd.f32 %v2653, %v2927
        %v2942 = vadd.f32 %v2654, %v2930
        %v2943 = vadd.f32 %v2655, %v2935
        %v2944 = vadd.f32 %v2656, %v2938
        %s2945 = scalar_lea.vmem %s17, 1
        %v2946 = vld [vmem:[%s2945] sm:$0x1]
        %v2948 = vlaneseq
        %v2949 = vshrl.u32 %v2948, 7
        %v2950 = vsub.s32 0, %v2949
        %v2951 = vrot.slane %v2946, %v2950
        %v2953 = vadd.f32 %v2941, %v2951
        %v2954 = vadd.f32 %v2942, %v2951
        %v2955 = vadd.f32 %v2943, %v2951
        %v2956 = vadd.f32 %v2944, %v2951
        %v2957 = vpack.c.bf16 %v2954, %v2953
        %v2958 = vpack.c.bf16 %v2956, %v2955
        %v2959 = vld [vmem:[%s18] sm:$0xf]
        %v2960 = vld [vmem:[%s18 + $0x4] sm:$0xf]
        %v2961 = vld [vmem:[%s18 + $0x8] sm:$0xf]
        %v2962 = vld [vmem:[%s18 + $0xc] sm:$0xf]
        %v2963 = vld [vmem:[%s19] sm:$0x1]
        %v2965 = vlaneseq
        %v2966 = vshrl.u32 %v2965, 7
        %v2967 = vsub.s32 0, %v2966
        %v2968 = vrot.slane %v2963, %v2967
        %v2974 = vunpack.c.l.b16 %v2959
        %v2975 = vunpack.c.l.b16 %v2960
        %v2976 = vunpack.c.l.b16 %v2961
        %v2977 = vunpack.c.l.b16 %v2962
        %v2978 = vpack.c.b16 %v2975, %v2974
        %v2979 = vpack.c.b16 %v2977, %v2976
        %v2983 = vsel %vm775, %v2957, 0
        %v2986 = vsel %vm775, %v2958, 0
        %2988 = vmatprep.subr.bf16.mxu0 0
        %2989 = vmatpush1.bf16.msra.mxu0 %v2978
        %2990 = vmatprep.subr.bf16.mxu0 0
        %2991 = vmatpush1.bf16.msra.mxu0 %v2979
        %2992 = vmatprep.subr.bf16.mxu0 0
        %2993 = vmatpush1.bf16.msra.mxu0 0
        %2994 = vmatprep.subr.bf16.mxu0 0
        %2995 = vmatpush1.bf16.msra.mxu0 0
        %2996 = vmatprep.subr.bf16.mxu0 0
        %2997 = vmatpush1.bf16.msra.mxu0 0
        %2998 = vmatprep.subr.bf16.mxu0 0
        %2999 = vmatpush1.bf16.msra.mxu0 0
        %3000 = vmatprep.subr.bf16.mxu0 0
        %3001 = vmatpush1.bf16.msra.mxu0 0
        %3002 = vmatprep.subr.bf16.mxu0 0
        %3003 = vmatpush1.bf16.msra.mxu0 0
        %3004 = vmatprep.subr.bf16.mxu0 0
        %3005 = vmatpush1.bf16.msra.mxu0 0
        %3006 = vmatprep.subr.bf16.mxu0 0
        %3007 = vmatpush1.bf16.msra.mxu0 0
        %3008 = vmatprep.subr.bf16.mxu0 0
        %3009 = vmatpush1.bf16.msra.mxu0 0
        %3010 = vmatprep.subr.bf16.mxu0 0
        %3011 = vmatpush1.bf16.msra.mxu0 0
        %3012 = vmatprep.subr.bf16.mxu0 0
        %3013 = vmatpush1.bf16.msra.mxu0 0
        %3014 = vmatprep.subr.bf16.mxu0 0
        %3015 = vmatpush1.bf16.msra.mxu0 0
        %3016 = vmatprep.subr.bf16.mxu0 0
        %3017 = vmatpush1.bf16.msra.mxu0 0
        %3018 = vmatprep.subr.bf16.mxu0 0
        %3019 = vmatpush1.bf16.msra.mxu0 0
        %3020 = vmatprep.mubr.bf16.mxu0 0
        %3021 = vmatmul.mubr.bf16.gmra.mrb[0].mxu0 %v2983
        %v3022 = vpop.f32.mrb[0].mxu0
        %v3023 = vadd.f32 %v2968, %v3022
        %v3024 = vpop.f32.mrb[0].mxu0
        %v3025 = vpop.f32.mrb[0].mxu0
        %v3026 = vadd.f32 %v2968, %v3025
        %v3027 = vpop.f32.mrb[0].mxu0
        %3028 = vmatprep.mubr.bf16.mxu0 0
        %3029 = vmatmul.mubr.bf16.gmra.mrb[0].mxu0 %v2986
        %v3030 = vpop.f32.mrb[0].mxu0
        %v3031 = vadd.f32 %v2968, %v3030
        %v3032 = vpop.f32.mrb[0].mxu0
        %v3033 = vpop.f32.mrb[0].mxu0
        %v3034 = vadd.f32 %v2968, %v3033
        %v3035 = vpop.f32.mrb[0].mxu0
        %3036 = vdwg.mxu0
        %3038 = vset.pattern.permute.xlu0 0
        %3039 = vperm.xlu0 %3038, %v650
        %v3040 = vpop.permute.xlu0 %3039
        %3043 = vset.pattern.permute.xlu0 0
        %3044 = vperm.xlu0 %3043, %v651
        %v3045 = vpop.permute.xlu0 %3044
        %3048 = vset.pattern.permute.xlu0 0
        %3049 = vperm.xlu0 %3048, %v652
        %v3050 = vpop.permute.xlu0 %3049
        %3053 = vset.pattern.permute.xlu0 0
        %3054 = vperm.xlu0 %3053, %v653
        %v3055 = vpop.permute.xlu0 %3054
        %v3057 = vmul.f32 %v3023, %v3040
        %v3058 = vmul.f32 %v3026, %v3045
        %v3059 = vmul.f32 %v3031, %v3050
        %v3060 = vmul.f32 %v3034, %v3055
        %s3061 = sld [smem:[#allocation2 + %s32]]
        %v3062 = vstv %s3061
        %v3063 = vmul.f32 %v3062, %v3057
        %v3064 = vmul.f32 %v3062, %v3058
        %v3065 = vmul.f32 %v3062, %v3059
        %v3066 = vmul.f32 %v3062, %v3060
        %v3067 = vadd.f32 %v642, %v3063
        %v3068 = vadd.f32 %v643, %v3064
        %v3069 = vadd.f32 %v644, %v3065
        %v3070 = vadd.f32 %v645, %v3066
        %3071 = vst [vmem:[%s20] sm:$0xff] %v3067
        %3072 = vst [vmem:[%s20 + $0x8] sm:$0xff] %v3068
        %3073 = vst [vmem:[%s20 + $0x10] sm:$0xff] %v3069
        %3074 = vst [vmem:[%s20 + $0x18] sm:$0xff] %v3070
        // Predicated region
        $region109: #{cfm_decoder_forward.1} parent=99 // pred_check
          %p3075 = pneg %p470
        $region110: #{cfm_decoder_forward.1} parent=99 // pred_check_branch
          %3077 = sbr.rel (%p3075) target = $region112
        $region111: #{cfm_decoder_forward.1} parent=99 // pred_region
          _
        $region112: #{cfm_decoder_forward.1} parent=99 // pred_fallthru
          _
        // Predicated region
        $region113: #{cfm_decoder_forward.1} parent=99 // pred_check
          %p3078 = pneg %p470
        $region114: #{cfm_decoder_forward.1} parent=99 // pred_check_branch
          %3080 = sbr.rel (%p3078) target = $region116
        $region115: #{cfm_decoder_forward.1} parent=99 // pred_region
          _
        $region116: #{cfm_decoder_forward.1} parent=99 // pred_fallthru
          _
      $region100: #{cfm_decoder_forward.1} parent=5 // pred_fallthru
        _
      %p3081 = scmp.le.s32.totalorder 2, %s27
      // Predicated region
      $region117: #{cfm_decoder_forward.1} parent=5 // pred_check
        %p3082 = pneg %p3081
      $region118: #{cfm_decoder_forward.1} parent=5 // pred_check_branch
        %3084 = sbr.rel (%p3082) target = $region120
      $region119: #{cfm_decoder_forward.1} parent=5 // pred_region
        %s3085 = ssub.s32 %s27, 2
      $region120: #{cfm_decoder_forward.1} parent=5 // pred_fallthru
        _
    $region6: #{cfm_decoder_forward.1} parent=1 // loop_footer
      %s31 = sadd.s32 1, %s27
    $region7: #{cfm_decoder_forward.1} parent=1 // loop_footer_branch
      %26 = sbr.rel target = $region3
    $region8: #{cfm_decoder_forward.1} parent=1 // loop_exit
      _
    %3086 = vsyncpa [#allocation3], 1
    %s3087 = scalar_lea.sflag [#allocation3], 1
    %3088 = vsyncpa %s3087, 1

</llo_original>
